<compile_context>
chip_gen: v6e
topology: v6e:2x2x1
jax: 0.10.0
libtpu: 0.0.40
codegen_flags: <defaults>
</compile_context>

<pallas_src>
import functools

import jax
import jax.numpy as jnp
import numpy as np
from jax import lax
from jax.experimental import pallas as pl
from jax.experimental.pallas import tpu as pltpu


# ----------------------------------------------------------------------------
# Fused Projector kernel: one grid step == one batch sample, fully VMEM-resident
# ----------------------------------------------------------------------------
def _projector_kernel(x_ref, w1_ref, t1_ref, w2_ref, t2_ref,
                      w3_ref, b3_ref, word_ref, wt_ref, bt_ref, o_ref,
                      pad2_ref, pad1_ref, *, H, W, C2, C1):
    cd = x_ref.dtype  # compute dtype for MXU operands (bf16 or f32)

    def im2col(pad_ref, C):
        # pad_ref: (H+2, W+2, C) zero-bordered feature map in VMEM.
        xp = pad_ref[...]
        cols = jnp.concatenate(
            [xp[i:i + H, j:j + W, :] for i in range(3) for j in range(3)],
            axis=2)                                   # (H, W, 9*C) tap-major
        return cols.reshape(H * W, 9 * C)

    # --- txt Linear: per-sample dynamic filter (+ bias), already in im2col order
    wtxt = jnp.dot(word_ref[0], wt_ref[...],
                   preferred_element_type=jnp.float32) + bt_ref[...]  # (1, 9*C1+1)
    dyn_w = wtxt[:, :9 * C1].astype(cd)                               # (1, 9*C1)
    dyn_b = wtxt[:, 9 * C1:]                                          # (1, 1)

    # --- conv1: 3x3 (no bias) + folded BN (scale in weights) + ReLU.
    #     Single K=9*C2 MXU matmul; epilogue is add-shift + ReLU only.
    pad2_ref[...] = jnp.zeros_like(pad2_ref)
    pad2_ref[1:H + 1, 1:W + 1, :] = x_ref[0]
    h = jnp.dot(im2col(pad2_ref, C2), w1_ref[...],
                preferred_element_type=jnp.float32)                   # (H*W, C2)
    h = jnp.maximum(h + t1_ref[...], 0.0)

    # --- conv2: 3x3 + folded BN + ReLU (reuse padded scratch; border stays zero)
    pad2_ref[1:H + 1, 1:W + 1, :] = h.reshape(H, W, C2).astype(cd)
    h = jnp.dot(im2col(pad2_ref, C2), w2_ref[...],
                preferred_element_type=jnp.float32)                   # (H*W, C1)
    h = jnp.maximum(h + t2_ref[...], 0.0)

    # --- conv 1x1 (+ bias)
    h = jnp.dot(h.astype(cd), w3_ref[...],
                preferred_element_type=jnp.float32) + b3_ref[...]     # (H*W, C1)

    # --- dynamic grouped conv: im2col then contract with the per-sample filter
    pad1_ref[...] = jnp.zeros_like(pad1_ref)
    pad1_ref[1:H + 1, 1:W + 1, :] = h.reshape(H, W, C1).astype(cd)
    cols = im2col(pad1_ref, C1)                                       # (H*W, 9*C1)
    out = lax.dot_general(dyn_w, cols, (((1,), (1,)), ((), ())),
                          preferred_element_type=jnp.float32)         # (1, H*W)
    o_ref[0] = out + dyn_b


# ----------------------------------------------------------------------------
# Wrapper: parameter packing (im2col slabs w/ BN-scale folded, txt column
# permutation) + pallas_call
# ----------------------------------------------------------------------------
def projector_forward(x_nchw, word, params, kernel_size=3,
                      compute_dtype=jnp.bfloat16):
    assert kernel_size == 3, "Projector kernel implemented for kernel_size=3"
    cd = compute_dtype

    x = jnp.transpose(x_nchw, (0, 2, 3, 1))            # NCHW -> NHWC
    B, H, W, C2 = x.shape
    C1 = params["w2"].shape[-1]
    word_dim = word.shape[-1]
    out_dim = params["wt"].shape[-1]
    assert out_dim == C1 * 9 + 1

    # im2col weight slabs: (3,3,Cin,Cout) -> (9*Cin, Cout), tap-major / cin-minor.
    # BN per-output-channel scale is folded directly into the slab (host-side).
    w1 = (params["w1"] * params["s1"]).reshape(9 * C2, C2).astype(cd)
    w2 = (params["w2"] * params["s2"]).reshape(9 * C2, C1).astype(cd)
    w3 = params["w3"].astype(cd)

    # Permute txt columns so the dynamic filter comes out in im2col order:
    # PyTorch order is (c, i, j) -> c*9 + t; kernel wants t*C1 + c. Bias stays last.
    perm = np.arange(C1 * 9).reshape(C1, 9).T.reshape(-1)
    perm = np.concatenate([perm, np.array([C1 * 9])])
    wt = params["wt"][:, perm].astype(cd)
    bt = params["bt"][perm].reshape(1, out_dim).astype(jnp.float32)

    t1 = params["t1"].reshape(1, C2).astype(jnp.float32)
    t2 = params["t2"].reshape(1, C1).astype(jnp.float32)
    b3 = params["b3"].reshape(1, C1).astype(jnp.float32)

    x_cd = x.astype(cd)
    word_cd = word.reshape(B, 1, word_dim).astype(cd)

    kernel = functools.partial(_projector_kernel, H=H, W=W, C2=C2, C1=C1)

    out = pl.pallas_call(
        kernel,
        out_shape=jax.ShapeDtypeStruct((B, 1, H * W), jnp.float32),
        grid=(B,),
        in_specs=[
            pl.BlockSpec((1, H, W, C2), lambda b: (b, 0, 0, 0)),     # x
            pl.BlockSpec((9 * C2, C2), lambda b: (0, 0)),            # w1 slab (BN folded)
            pl.BlockSpec((1, C2), lambda b: (0, 0)),                 # t1 (BN shift)
            pl.BlockSpec((9 * C2, C1), lambda b: (0, 0)),            # w2 slab (BN folded)
            pl.BlockSpec((1, C1), lambda b: (0, 0)),                 # t2 (BN shift)
            pl.BlockSpec((C1, C1), lambda b: (0, 0)),                # w3
            pl.BlockSpec((1, C1), lambda b: (0, 0)),                 # b3
            pl.BlockSpec((1, 1, word_dim), lambda b: (b, 0, 0)),     # word
            pl.BlockSpec((word_dim, out_dim), lambda b: (0, 0)),     # wt (permuted)
            pl.BlockSpec((1, out_dim), lambda b: (0, 0)),            # bt (permuted)
        ],
        out_specs=pl.BlockSpec((1, 1, H * W), lambda b: (b, 0, 0)),  # lane-dense
        scratch_shapes=[
            pltpu.VMEM((H + 2, W + 2, C2), cd),   # halo buffer for conv1/conv2
            pltpu.VMEM((H + 2, W + 2, C1), cd),   # halo buffer for dynamic conv
        ],
        compiler_params=pltpu.CompilerParams(
            dimension_semantics=("parallel",),
        ),
    )(x_cd, w1, t1, w2, t2, w3, b3, word_cd, wt, bt)

    return out.reshape(B, 1, H, W)


# ----------------------------------------------------------------------------
# Pure-JAX reference (PyTorch semantics, f32) — verification only
# ----------------------------------------------------------------------------
def projector_reference(x_nchw, word, params, kernel_size=3):
    x = jnp.transpose(x_nchw, (0, 2, 3, 1)).astype(jnp.float32)

    def conv3(v, w):
        return lax.conv_general_dilated(v, w, (1, 1), "SAME",
                                        dimension_numbers=("NHWC", "HWIO", "NHWC"))

    h = jnp.maximum(conv3(x, params["w1"]) * params["s1"] + params["t1"], 0.0)
    h = jnp.maximum(conv3(h, params["w2"]) * params["s2"] + params["t2"], 0.0)
    h = jnp.einsum("bhwc,cd->bhwd", h, params["w3"]) + params["b3"]
    B, H, W, C = h.shape
    wtxt = word.astype(jnp.float32) @ params["wt"] + params["bt"]
    dyn_w = jnp.transpose(wtxt[:, :-1].reshape(B, C, kernel_size, kernel_size),
                          (0, 2, 3, 1))
    dyn_b = wtxt[:, -1]
    hp = jnp.pad(h, ((0, 0), (1, 1), (1, 1), (0, 0)))
    out = jnp.zeros((B, H, W), jnp.float32)
    for i in range(3):
        for j in range(3):
            out = out + jnp.einsum("bhwc,bc->bhw",
                                   hp[:, i:i + H, j:j + W, :], dyn_w[:, i, j, :])
    return (out + dyn_b[:, None, None])[:, None, :, :]


def _bn_fold(gamma, beta, mean, var, eps=1e-5):
    s = gamma / jnp.sqrt(var + eps)
    return s, beta - mean * s


if __name__ == "__main__":
    # Small shapes consistent with the module: word_dim=32, in_dim=8, k=3, 16x16 maps
    B, in_dim, H, W = 2, 8, 16, 16
    word_dim, ksz = 32, 3
    C2 = in_dim * 2
    out_dim = in_dim * ksz * ksz + 1

    key = jax.random.PRNGKey(0)
    ks = jax.random.split(key, 20)

    # Deterministic synthetic parameters (eval-mode BN folded into scale/shift).
    g1 = 1.0 + 0.05 * jax.random.normal(ks[2], (C2,), jnp.float32)
    b1 = 0.05 * jax.random.normal(ks[3], (C2,), jnp.float32)
    m1 = 0.05 * jax.random.normal(ks[4], (C2,), jnp.float32)
    v1 = 0.5 + jnp.abs(jax.random.normal(ks[5], (C2,), jnp.float32))
    s1, t1 = _bn_fold(g1, b1, m1, v1)

    g2 = 1.0 + 0.05 * jax.random.normal(ks[7], (in_dim,), jnp.float32)
    b2 = 0.05 * jax.random.normal(ks[8], (in_dim,), jnp.float32)
    m2 = 0.05 * jax.random.normal(ks[9], (in_dim,), jnp.float32)
    v2 = 0.5 + jnp.abs(jax.random.normal(ks[10], (in_dim,), jnp.float32))
    s2, t2 = _bn_fold(g2, b2, m2, v2)

    params = {
        "w1": 0.1 * jax.random.normal(ks[1], (3, 3, C2, C2), jnp.float32),
        "s1": s1, "t1": t1,
        "w2": 0.1 * jax.random.normal(ks[6], (3, 3, C2, in_dim), jnp.float32),
        "s2": s2, "t2": t2,
        "w3": 0.1 * jax.random.normal(ks[11], (in_dim, in_dim), jnp.float32),
        "b3": 0.05 * jax.random.normal(ks[12], (in_dim,), jnp.float32),
        "wt": 0.1 * jax.random.normal(ks[13], (word_dim, out_dim), jnp.float32),
        "bt": 0.05 * jax.random.normal(ks[14], (out_dim,), jnp.float32),
    }

    x = jax.random.normal(ks[15], (B, C2, H, W), jnp.float32)       # NCHW like PyTorch
    word = jax.random.normal(ks[16], (B, word_dim), jnp.float32)

    ref = jax.block_until_ready(projector_reference(x, word, params, kernel_size=ksz))

    # Exactness check: f32 compute path.
    out_f32 = jax.block_until_ready(
        projector_forward(x, word, params, kernel_size=ksz,
                          compute_dtype=jnp.float32))
    assert out_f32.shape == (B, 1, H, W), out_f32.shape
    np.testing.assert_allclose(np.asarray(out_f32), np.asarray(ref),
                               rtol=2e-3, atol=2e-3)

    # Fast path: bf16 MXU operands with f32 accumulation (default config).
    out_bf16 = jax.block_until_ready(
        projector_forward(x, word, params, kernel_size=ksz,
                          compute_dtype=jnp.bfloat16))
    err = float(jnp.max(jnp.abs(out_bf16 - ref)))
    scale = float(jnp.max(jnp.abs(ref)))
    assert err <= 0.05 * scale + 0.05, (err, scale)

    print("KERNEL_OK")
</pallas_src>

<mosaic_0001>
module attributes {stable_mosaic.version = 11 : i64} {
  func.func @_projector_kernel(%arg0: i32, %arg1: memref<1x16x16x16xf32, #tpu.memory_space<vmem>>, %arg2: memref<144x16xf32, #tpu.memory_space<vmem>>, %arg3: memref<1x16xf32, #tpu.memory_space<vmem>>, %arg4: memref<144x8xf32, #tpu.memory_space<vmem>>, %arg5: memref<1x8xf32, #tpu.memory_space<vmem>>, %arg6: memref<8x8xf32, #tpu.memory_space<vmem>>, %arg7: memref<1x8xf32, #tpu.memory_space<vmem>>, %arg8: memref<1x1x32xf32, #tpu.memory_space<vmem>>, %arg9: memref<32x73xf32, #tpu.memory_space<vmem>>, %arg10: memref<1x73xf32, #tpu.memory_space<vmem>>, %arg11: memref<1x1x256xf32, #tpu.memory_space<vmem>>, %arg12: memref<18x18x16xf32, #tpu.memory_space<vmem>>, %arg13: memref<18x18x8xf32, #tpu.memory_space<vmem>>) attributes {dimension_semantics = [#tpu.dimension_semantics<parallel>], iteration_bounds = array<i64: 2>, scalar_prefetch = 0 : i64, scratch_operands = 2 : i64, tpu.core_type = #tpu.core_type<tc>, window_params = [{transform_indices = @transform_0, window_bounds = array<i64: 1, 16, 16, 16>}, {pipeline_mode = #tpu.pipeline_mode<synchronous>, transform_indices = @transform_1, window_bounds = array<i64: 144, 16>}, {pipeline_mode = #tpu.pipeline_mode<synchronous>, transform_indices = @transform_2, window_bounds = array<i64: 1, 16>}, {pipeline_mode = #tpu.pipeline_mode<synchronous>, transform_indices = @transform_3, window_bounds = array<i64: 144, 8>}, {pipeline_mode = #tpu.pipeline_mode<synchronous>, transform_indices = @transform_4, window_bounds = array<i64: 1, 8>}, {pipeline_mode = #tpu.pipeline_mode<synchronous>, transform_indices = @transform_5, window_bounds = array<i64: 8, 8>}, {pipeline_mode = #tpu.pipeline_mode<synchronous>, transform_indices = @transform_6, window_bounds = array<i64: 1, 8>}, {transform_indices = @transform_7, window_bounds = array<i64: 1, 1, 32>}, {pipeline_mode = #tpu.pipeline_mode<synchronous>, transform_indices = @transform_8, window_bounds = array<i64: 32, 73>}, {pipeline_mode = #tpu.pipeline_mode<synchronous>, transform_indices = @transform_9, window_bounds = array<i64: 1, 73>}, {transform_indices = @transform_10, window_bounds = array<i64: 1, 1, 256>}]} {
    %c0 = arith.constant 0 : index
    %c0_0 = arith.constant 0 : index
    %c0_1 = arith.constant 0 : index
    %0 = vector.load %arg8[%c0, %c0_0, %c0_1] : memref<1x1x32xf32, #tpu.memory_space<vmem>>, vector<1x1x32xf32>
    %1 = vector.shape_cast %0 : vector<1x1x32xf32> to vector<1x32xf32>
    %c0_2 = arith.constant 0 : index
    %c0_3 = arith.constant 0 : index
    %2 = vector.load %arg9[%c0_2, %c0_3] : memref<32x73xf32, #tpu.memory_space<vmem>>, vector<32x73xf32>
    %cst = arith.constant dense<0.000000e+00> : vector<1x73xf32>
    %3 = tpu.matmul %1, %2, %cst {dimension_numbers = #tpu.dot_dimension_numbers<[1], [0], [0], [1], [0, 0, 1, 1], [], []>} : vector<1x32xf32>, vector<32x73xf32>, vector<1x73xf32> -> vector<1x73xf32>
    %c0_4 = arith.constant 0 : index
    %c0_5 = arith.constant 0 : index
    %4 = vector.load %arg10[%c0_4, %c0_5] : memref<1x73xf32, #tpu.memory_space<vmem>>, vector<1x73xf32>
    %5 = arith.addf %3, %4 : vector<1x73xf32>
    %6 = vector.extract_strided_slice %5 {offsets = [0, 0], sizes = [1, 72], strides = [1, 1]} : vector<1x73xf32> to vector<1x72xf32>
    %7 = vector.extract_strided_slice %5 {offsets = [0, 72], sizes = [1, 1], strides = [1, 1]} : vector<1x73xf32> to vector<1x1xf32>
    %cst_6 = arith.constant 0.000000e+00 : f32
    %8 = vector.broadcast %cst_6 : f32 to vector<18x18x16xf32>
    %c0_7 = arith.constant 0 : index
    %c0_8 = arith.constant 0 : index
    %c0_9 = arith.constant 0 : index
    %9 = vector.load %arg12[%c0_7, %c0_8, %c0_9] : memref<18x18x16xf32, #tpu.memory_space<vmem>>, vector<18x18x16xf32>
    tpu.vector_store %arg12[%c0_7, %c0_8, %c0_9], %8 {strides = array<i32>} : memref<18x18x16xf32, #tpu.memory_space<vmem>>, vector<18x18x16xf32>,
    %c0_10 = arith.constant 0 : index
    %c0_11 = arith.constant 0 : index
    %c0_12 = arith.constant 0 : index
    %c0_13 = arith.constant 0 : index
    %10 = vector.load %arg1[%c0_10, %c0_11, %c0_12, %c0_13] : memref<1x16x16x16xf32, #tpu.memory_space<vmem>>, vector<1x16x16x16xf32>
    %11 = vector.shape_cast %10 : vector<1x16x16x16xf32> to vector<16x16x16xf32>
    %c1 = arith.constant 1 : index
    %c1_14 = arith.constant 1 : index
    %c0_15 = arith.constant 0 : index
    %12 = vector.load %arg12[%c1, %c1_14, %c0_15] : memref<18x18x16xf32, #tpu.memory_space<vmem>>, vector<16x16x16xf32>
    tpu.vector_store %arg12[%c1, %c1_14, %c0_15], %11 {strides = array<i32>} : memref<18x18x16xf32, #tpu.memory_space<vmem>>, vector<16x16x16xf32>,
    %c0_16 = arith.constant 0 : index
    %c0_17 = arith.constant 0 : index
    %c0_18 = arith.constant 0 : index
    %13 = vector.load %arg12[%c0_16, %c0_17, %c0_18] : memref<18x18x16xf32, #tpu.memory_space<vmem>>, vector<18x18x16xf32>
    %14 = vector.extract_strided_slice %13 {offsets = [0, 0, 0], sizes = [16, 16, 16], strides = [1, 1, 1]} : vector<18x18x16xf32> to vector<16x16x16xf32>
    %15 = vector.extract_strided_slice %13 {offsets = [0, 1, 0], sizes = [16, 16, 16], strides = [1, 1, 1]} : vector<18x18x16xf32> to vector<16x16x16xf32>
    %16 = vector.extract_strided_slice %13 {offsets = [0, 2, 0], sizes = [16, 16, 16], strides = [1, 1, 1]} : vector<18x18x16xf32> to vector<16x16x16xf32>
    %17 = vector.extract_strided_slice %13 {offsets = [1, 0, 0], sizes = [16, 16, 16], strides = [1, 1, 1]} : vector<18x18x16xf32> to vector<16x16x16xf32>
    %18 = vector.extract_strided_slice %13 {offsets = [1, 1, 0], sizes = [16, 16, 16], strides = [1, 1, 1]} : vector<18x18x16xf32> to vector<16x16x16xf32>
    %19 = vector.extract_strided_slice %13 {offsets = [1, 2, 0], sizes = [16, 16, 16], strides = [1, 1, 1]} : vector<18x18x16xf32> to vector<16x16x16xf32>
    %20 = vector.extract_strided_slice %13 {offsets = [2, 0, 0], sizes = [16, 16, 16], strides = [1, 1, 1]} : vector<18x18x16xf32> to vector<16x16x16xf32>
    %21 = vector.extract_strided_slice %13 {offsets = [2, 1, 0], sizes = [16, 16, 16], strides = [1, 1, 1]} : vector<18x18x16xf32> to vector<16x16x16xf32>
    %22 = vector.extract_strided_slice %13 {offsets = [2, 2, 0], sizes = [16, 16, 16], strides = [1, 1, 1]} : vector<18x18x16xf32> to vector<16x16x16xf32>
    %23 = tpu.concatenate %14, %15, %16, %17, %18, %19, %20, %21, %22 in 2 : vector<16x16x16xf32>, vector<16x16x16xf32>, vector<16x16x16xf32>, vector<16x16x16xf32>, vector<16x16x16xf32>, vector<16x16x16xf32>, vector<16x16x16xf32>, vector<16x16x16xf32>, vector<16x16x16xf32> -> vector<16x16x144xf32>
    %24 = vector.shape_cast %23 : vector<16x16x144xf32> to vector<256x144xf32>
    %c0_19 = arith.constant 0 : index
    %c0_20 = arith.constant 0 : index
    %25 = vector.load %arg2[%c0_19, %c0_20] : memref<144x16xf32, #tpu.memory_space<vmem>>, vector<144x16xf32>
    %cst_21 = arith.constant dense<0.000000e+00> : vector<256x16xf32>
    %26 = tpu.matmul %24, %25, %cst_21 {dimension_numbers = #tpu.dot_dimension_numbers<[1], [0], [0], [1], [0, 0, 1, 1], [], []>} : vector<256x144xf32>, vector<144x16xf32>, vector<256x16xf32> -> vector<256x16xf32>
    %c0_22 = arith.constant 0 : index
    %c0_23 = arith.constant 0 : index
    %27 = vector.load %arg3[%c0_22, %c0_23] : memref<1x16xf32, #tpu.memory_space<vmem>>, vector<1x16xf32>
    %28 = vector.broadcast %27 : vector<1x16xf32> to vector<256x16xf32>
    %29 = arith.addf %26, %28 : vector<256x16xf32>
    %cst_24 = arith.constant 0.000000e+00 : f32
    %30 = vector.broadcast %cst_24 : f32 to vector<256x16xf32>
    %31 = arith.maximumf %29, %30 : vector<256x16xf32>
    %32 = vector.shape_cast %31 : vector<256x16xf32> to vector<16x16x16xf32>
    %c1_25 = arith.constant 1 : index
    %c1_26 = arith.constant 1 : index
    %c0_27 = arith.constant 0 : index
    %33 = vector.load %arg12[%c1_25, %c1_26, %c0_27] : memref<18x18x16xf32, #tpu.memory_space<vmem>>, vector<16x16x16xf32>
    tpu.vector_store %arg12[%c1_25, %c1_26, %c0_27], %32 {strides = array<i32>} : memref<18x18x16xf32, #tpu.memory_space<vmem>>, vector<16x16x16xf32>,
    %c0_28 = arith.constant 0 : index
    %c0_29 = arith.constant 0 : index
    %c0_30 = arith.constant 0 : index
    %34 = vector.load %arg12[%c0_28, %c0_29, %c0_30] : memref<18x18x16xf32, #tpu.memory_space<vmem>>, vector<18x18x16xf32>
    %35 = vector.extract_strided_slice %34 {offsets = [0, 0, 0], sizes = [16, 16, 16], strides = [1, 1, 1]} : vector<18x18x16xf32> to vector<16x16x16xf32>
    %36 = vector.extract_strided_slice %34 {offsets = [0, 1, 0], sizes = [16, 16, 16], strides = [1, 1, 1]} : vector<18x18x16xf32> to vector<16x16x16xf32>
    %37 = vector.extract_strided_slice %34 {offsets = [0, 2, 0], sizes = [16, 16, 16], strides = [1, 1, 1]} : vector<18x18x16xf32> to vector<16x16x16xf32>
    %38 = vector.extract_strided_slice %34 {offsets = [1, 0, 0], sizes = [16, 16, 16], strides = [1, 1, 1]} : vector<18x18x16xf32> to vector<16x16x16xf32>
    %39 = vector.extract_strided_slice %34 {offsets = [1, 1, 0], sizes = [16, 16, 16], strides = [1, 1, 1]} : vector<18x18x16xf32> to vector<16x16x16xf32>
    %40 = vector.extract_strided_slice %34 {offsets = [1, 2, 0], sizes = [16, 16, 16], strides = [1, 1, 1]} : vector<18x18x16xf32> to vector<16x16x16xf32>
    %41 = vector.extract_strided_slice %34 {offsets = [2, 0, 0], sizes = [16, 16, 16], strides = [1, 1, 1]} : vector<18x18x16xf32> to vector<16x16x16xf32>
    %42 = vector.extract_strided_slice %34 {offsets = [2, 1, 0], sizes = [16, 16, 16], strides = [1, 1, 1]} : vector<18x18x16xf32> to vector<16x16x16xf32>
    %43 = vector.extract_strided_slice %34 {offsets = [2, 2, 0], sizes = [16, 16, 16], strides = [1, 1, 1]} : vector<18x18x16xf32> to vector<16x16x16xf32>
    %44 = tpu.concatenate %35, %36, %37, %38, %39, %40, %41, %42, %43 in 2 : vector<16x16x16xf32>, vector<16x16x16xf32>, vector<16x16x16xf32>, vector<16x16x16xf32>, vector<16x16x16xf32>, vector<16x16x16xf32>, vector<16x16x16xf32>, vector<16x16x16xf32>, vector<16x16x16xf32> -> vector<16x16x144xf32>
    %45 = vector.shape_cast %44 : vector<16x16x144xf32> to vector<256x144xf32>
    %c0_31 = arith.constant 0 : index
    %c0_32 = arith.constant 0 : index
    %46 = vector.load %arg4[%c0_31, %c0_32] : memref<144x8xf32, #tpu.memory_space<vmem>>, vector<144x8xf32>
    %cst_33 = arith.constant dense<0.000000e+00> : vector<256x8xf32>
    %47 = tpu.matmul %45, %46, %cst_33 {dimension_numbers = #tpu.dot_dimension_numbers<[1], [0], [0], [1], [0, 0, 1, 1], [], []>} : vector<256x144xf32>, vector<144x8xf32>, vector<256x8xf32> -> vector<256x8xf32>
    %c0_34 = arith.constant 0 : index
    %c0_35 = arith.constant 0 : index
    %48 = vector.load %arg5[%c0_34, %c0_35] : memref<1x8xf32, #tpu.memory_space<vmem>>, vector<1x8xf32>
    %49 = vector.broadcast %48 : vector<1x8xf32> to vector<256x8xf32>
    %50 = arith.addf %47, %49 : vector<256x8xf32>
    %cst_36 = arith.constant 0.000000e+00 : f32
    %51 = vector.broadcast %cst_36 : f32 to vector<256x8xf32>
    %52 = arith.maximumf %50, %51 : vector<256x8xf32>
    %c0_37 = arith.constant 0 : index
    %c0_38 = arith.constant 0 : index
    %53 = vector.load %arg6[%c0_37, %c0_38] : memref<8x8xf32, #tpu.memory_space<vmem>>, vector<8x8xf32>
    %cst_39 = arith.constant dense<0.000000e+00> : vector<256x8xf32>
    %54 = tpu.matmul %52, %53, %cst_39 {dimension_numbers = #tpu.dot_dimension_numbers<[1], [0], [0], [1], [0, 0, 1, 1], [], []>} : vector<256x8xf32>, vector<8x8xf32>, vector<256x8xf32> -> vector<256x8xf32>
    %c0_40 = arith.constant 0 : index
    %c0_41 = arith.constant 0 : index
    %55 = vector.load %arg7[%c0_40, %c0_41] : memref<1x8xf32, #tpu.memory_space<vmem>>, vector<1x8xf32>
    %56 = vector.broadcast %55 : vector<1x8xf32> to vector<256x8xf32>
    %57 = arith.addf %54, %56 : vector<256x8xf32>
    %cst_42 = arith.constant 0.000000e+00 : f32
    %58 = vector.broadcast %cst_42 : f32 to vector<18x18x8xf32>
    %c0_43 = arith.constant 0 : index
    %c0_44 = arith.constant 0 : index
    %c0_45 = arith.constant 0 : index
    %59 = vector.load %arg13[%c0_43, %c0_44, %c0_45] : memref<18x18x8xf32, #tpu.memory_space<vmem>>, vector<18x18x8xf32>
    tpu.vector_store %arg13[%c0_43, %c0_44, %c0_45], %58 {strides = array<i32>} : memref<18x18x8xf32, #tpu.memory_space<vmem>>, vector<18x18x8xf32>,
    %60 = vector.shape_cast %57 : vector<256x8xf32> to vector<16x16x8xf32>
    %c1_46 = arith.constant 1 : index
    %c1_47 = arith.constant 1 : index
    %c0_48 = arith.constant 0 : index
    %61 = vector.load %arg13[%c1_46, %c1_47, %c0_48] : memref<18x18x8xf32, #tpu.memory_space<vmem>>, vector<16x16x8xf32>
    tpu.vector_store %arg13[%c1_46, %c1_47, %c0_48], %60 {strides = array<i32>} : memref<18x18x8xf32, #tpu.memory_space<vmem>>, vector<16x16x8xf32>,
    %c0_49 = arith.constant 0 : index
    %c0_50 = arith.constant 0 : index
    %c0_51 = arith.constant 0 : index
    %62 = vector.load %arg13[%c0_49, %c0_50, %c0_51] : memref<18x18x8xf32, #tpu.memory_space<vmem>>, vector<18x18x8xf32>
    %63 = vector.extract_strided_slice %62 {offsets = [0, 0, 0], sizes = [16, 16, 8], strides = [1, 1, 1]} : vector<18x18x8xf32> to vector<16x16x8xf32>
    %64 = vector.extract_strided_slice %62 {offsets = [0, 1, 0], sizes = [16, 16, 8], strides = [1, 1, 1]} : vector<18x18x8xf32> to vector<16x16x8xf32>
    %65 = vector.extract_strided_slice %62 {offsets = [0, 2, 0], sizes = [16, 16, 8], strides = [1, 1, 1]} : vector<18x18x8xf32> to vector<16x16x8xf32>
    %66 = vector.extract_strided_slice %62 {offsets = [1, 0, 0], sizes = [16, 16, 8], strides = [1, 1, 1]} : vector<18x18x8xf32> to vector<16x16x8xf32>
    %67 = vector.extract_strided_slice %62 {offsets = [1, 1, 0], sizes = [16, 16, 8], strides = [1, 1, 1]} : vector<18x18x8xf32> to vector<16x16x8xf32>
    %68 = vector.extract_strided_slice %62 {offsets = [1, 2, 0], sizes = [16, 16, 8], strides = [1, 1, 1]} : vector<18x18x8xf32> to vector<16x16x8xf32>
    %69 = vector.extract_strided_slice %62 {offsets = [2, 0, 0], sizes = [16, 16, 8], strides = [1, 1, 1]} : vector<18x18x8xf32> to vector<16x16x8xf32>
    %70 = vector.extract_strided_slice %62 {offsets = [2, 1, 0], sizes = [16, 16, 8], strides = [1, 1, 1]} : vector<18x18x8xf32> to vector<16x16x8xf32>
    %71 = vector.extract_strided_slice %62 {offsets = [2, 2, 0], sizes = [16, 16, 8], strides = [1, 1, 1]} : vector<18x18x8xf32> to vector<16x16x8xf32>
    %72 = tpu.concatenate %63, %64, %65, %66, %67, %68, %69, %70, %71 in 2 : vector<16x16x8xf32>, vector<16x16x8xf32>, vector<16x16x8xf32>, vector<16x16x8xf32>, vector<16x16x8xf32>, vector<16x16x8xf32>, vector<16x16x8xf32>, vector<16x16x8xf32>, vector<16x16x8xf32> -> vector<16x16x72xf32>
    %73 = vector.shape_cast %72 : vector<16x16x72xf32> to vector<256x72xf32>
    %cst_52 = arith.constant dense<0.000000e+00> : vector<1x256xf32>
    %74 = tpu.matmul %6, %73, %cst_52 {dimension_numbers = #tpu.dot_dimension_numbers<[1], [1], [0], [0], [0, 0, 1, 0], [], []>} : vector<1x72xf32>, vector<256x72xf32>, vector<1x256xf32> -> vector<1x256xf32>
    %75 = vector.broadcast %7 : vector<1x1xf32> to vector<1x256xf32>
    %76 = arith.addf %74, %75 : vector<1x256xf32>
    %c0_53 = arith.constant 0 : index
    %c0_54 = arith.constant 0 : index
    %c0_55 = arith.constant 0 : index
    %77 = vector.load %arg11[%c0_53, %c0_54, %c0_55] : memref<1x1x256xf32, #tpu.memory_space<vmem>>, vector<1x1x256xf32>
    %78 = vector.shape_cast %77 : vector<1x1x256xf32> to vector<1x256xf32>
    %79 = vector.shape_cast %76 : vector<1x256xf32> to vector<1x1x256xf32>
    tpu.vector_store %arg11[%c0_53, %c0_54, %c0_55], %79 {strides = array<i32>} : memref<1x1x256xf32, #tpu.memory_space<vmem>>, vector<1x1x256xf32>,
    return
  }
  func.func @transform_0(%arg0: i32) -> (i32, i32, i32, i32) {
    %c0_i32 = arith.constant 0 : i32
    %c0_i32_0 = arith.constant 0 : i32
    %c0_i32_1 = arith.constant 0 : i32
    %c0_i32_2 = arith.constant 0 : i32
    return %arg0, %c0_i32, %c0_i32_0, %c0_i32_1 : i32, i32, i32, i32
  }
  func.func @transform_1(%arg0: i32) -> (i32, i32) {
    %c0_i32 = arith.constant 0 : i32
    %c0_i32_0 = arith.constant 0 : i32
    %c0_i32_1 = arith.constant 0 : i32
    return %c0_i32, %c0_i32_0 : i32, i32
  }
  func.func @transform_2(%arg0: i32) -> (i32, i32) {
    %c0_i32 = arith.constant 0 : i32
    %c0_i32_0 = arith.constant 0 : i32
    %c0_i32_1 = arith.constant 0 : i32
    return %c0_i32, %c0_i32_0 : i32, i32
  }
  func.func @transform_3(%arg0: i32) -> (i32, i32) {
    %c0_i32 = arith.constant 0 : i32
    %c0_i32_0 = arith.constant 0 : i32
    %c0_i32_1 = arith.constant 0 : i32
    return %c0_i32, %c0_i32_0 : i32, i32
  }
  func.func @transform_4(%arg0: i32) -> (i32, i32) {
    %c0_i32 = arith.constant 0 : i32
    %c0_i32_0 = arith.constant 0 : i32
    %c0_i32_1 = arith.constant 0 : i32
    return %c0_i32, %c0_i32_0 : i32, i32
  }
  func.func @transform_5(%arg0: i32) -> (i32, i32) {
    %c0_i32 = arith.constant 0 : i32
    %c0_i32_0 = arith.constant 0 : i32
    %c0_i32_1 = arith.constant 0 : i32
    return %c0_i32, %c0_i32_0 : i32, i32
  }
  func.func @transform_6(%arg0: i32) -> (i32, i32) {
    %c0_i32 = arith.constant 0 : i32
    %c0_i32_0 = arith.constant 0 : i32
    %c0_i32_1 = arith.constant 0 : i32
    return %c0_i32, %c0_i32_0 : i32, i32
  }
  func.func @transform_7(%arg0: i32) -> (i32, i32, i32) {
    %c0_i32 = arith.constant 0 : i32
    %c0_i32_0 = arith.constant 0 : i32
    %c0_i32_1 = arith.constant 0 : i32
    return %arg0, %c0_i32, %c0_i32_0 : i32, i32, i32
  }
  func.func @transform_8(%arg0: i32) -> (i32, i32) {
    %c0_i32 = arith.constant 0 : i32
    %c0_i32_0 = arith.constant 0 : i32
    %c0_i32_1 = arith.constant 0 : i32
    return %c0_i32, %c0_i32_0 : i32, i32
  }
  func.func @transform_9(%arg0: i32) -> (i32, i32) {
    %c0_i32 = arith.constant 0 : i32
    %c0_i32_0 = arith.constant 0 : i32
    %c0_i32_1 = arith.constant 0 : i32
    return %c0_i32, %c0_i32_0 : i32, i32
  }
  func.func @transform_10(%arg0: i32) -> (i32, i32, i32) {
    %c0_i32 = arith.constant 0 : i32
    %c0_i32_0 = arith.constant 0 : i32
    %c0_i32_1 = arith.constant 0 : i32
    return %arg0, %c0_i32, %c0_i32_0 : i32, i32, i32
  }
}

</mosaic_0001>

<llo_original>
// kernel: tpu_custom_call.1
$region0: #{tpu_custom_call.1}
  #allocation0 [shape = 'u32[]', space=smem, size = 0x4, offset = 0x4, fixed_abs, tag = 'smem constant byte address 0x4 - core index']
  #allocation1 [shape = 'u32[144,128]{1,0:T(1,128)}', space=vmem, size = 0x12000, scoped, tag = 'internal scratch']
  #allocation2 [shape = 'f32[18,18,16]{2,1,0:T(8,128)}', space=vmem, size = 0x36000, scoped, tag = 'scratch operand']
  #allocation3 [shape = 'f32[18,18,8]{2,1,0:T(8,128)}', space=vmem, size = 0x36000, scoped, tag = 'scratch operand']
  %s0 = inlined_call_operand.hbm [shape: f32[2,16,16,16], index: 0, kind: input, shape index: {}]
  %s1 = inlined_call_operand.vmem [shape: f32[144,16], index: 1, kind: input, shape index: {}]
  %s2 = inlined_call_operand.vmem [shape: f32[1,16], index: 2, kind: input, shape index: {}]
  %s3 = inlined_call_operand.vmem [shape: f32[144,8], index: 3, kind: input, shape index: {}]
  %s4 = inlined_call_operand.vmem [shape: f32[1,8], index: 4, kind: input, shape index: {}]
  %s5 = inlined_call_operand.vmem [shape: f32[8,8], index: 5, kind: input, shape index: {}]
  %s6 = inlined_call_operand.vmem [shape: f32[1,8], index: 6, kind: input, shape index: {}]
  %s7 = inlined_call_operand.vmem [shape: f32[2,1,32], index: 7, kind: input, shape index: {}]
  %s8 = inlined_call_operand.vmem [shape: f32[32,73], index: 8, kind: input, shape index: {}]
  %s9 = inlined_call_operand.vmem [shape: f32[1,73], index: 9, kind: input, shape index: {}]
  %s10 = inlined_call_operand.hbm [shape: f32[2,1,256], index: 10, kind: output, shape index: {}]
  %s11 = sld [smem:[#allocation0]]
  $region77: #{tpu_custom_call.1} parent=0
    _
  %s13 = ssub.s32 1, %s11
  %s14 = scalar_select 0, %s13, %s11
  $region1: #{tpu_custom_call.1} parent=0
    #allocation4 [shape = 'u8[262144]{0}', space=vmem, size = 0x40000, scoped, tag = 'input window, operand 0']
    #allocation5 [shape = 's32[2]{0}', space=sflag, size = 0x8, scoped, tag = 'scoped memory for tpu_custom_call.1']
    #allocation6 [shape = 's32[2]{0}', space=sflag, size = 0x8, scoped, tag = 'scoped memory for tpu_custom_call.1']
    #allocation7 [shape = 'u8[2048]{0}', space=vmem, size = 0x800, scoped, tag = 'output window, operand 0']
    %15 = vsyncpa [#allocation5], 0
    %s16 = scalar_lea.sflag [#allocation5], 1
    %17 = vsyncpa %s16, 0
    %18 = vsyncpa [#allocation6], 0
    %s19 = scalar_lea.sflag [#allocation6], 1
    %20 = vsyncpa %s19, 0
    loop: start=0, step=1, limit=4
    $region2: #{tpu_custom_call.1} parent=1 // loop_pre_header
      _
    $region3: #{tpu_custom_call.1} parent=1 // loop_header
      %s22 = sphi 0, %s26
      %p23 = scmp.ge.s32.totalorder %s22, 4
      %s32 = sphi 0, %s34
      %s35 = sphi 0, %s32
      %s36 = sphi 0, %s35
      %s52 = sphi 0, %s36
      %s56 = sphi 0, %s56
      %s58 = sphi 0, %s56
      %s59 = sphi 0, %s58
      %s73 = sphi 0, %s59
      %s77 = sphi 0, %s77
      %s79 = sphi 0, %s77
      %s80 = sphi 0, %s79
      %s94 = sphi 0, %s80
      %s98 = sphi 0, %s98
      %s100 = sphi 0, %s98
      %s101 = sphi 0, %s100
      %s115 = sphi 0, %s101
      %s119 = sphi 0, %s119
      %s121 = sphi 0, %s119
      %s122 = sphi 0, %s121
      %s136 = sphi 0, %s122
      %s140 = sphi 0, %s140
      %s142 = sphi 0, %s140
      %s143 = sphi 0, %s142
      %s157 = sphi 0, %s143
      %s161 = sphi 0, %s161
      %s163 = sphi 0, %s161
      %s164 = sphi 0, %s163
      %s178 = sphi 0, %s164
      %s184 = sphi 0, %s186
      %s187 = sphi 0, %s184
      %s188 = sphi 0, %s187
      %s204 = sphi 0, %s188
      %s208 = sphi 0, %s208
      %s210 = sphi 0, %s208
      %s211 = sphi 0, %s210
      %s225 = sphi 0, %s211
      %s229 = sphi 0, %s229
      %s231 = sphi 0, %s229
      %s232 = sphi 0, %s231
      %s246 = sphi 0, %s232
      %s252 = sphi 0, %s254
      %s255 = sphi 0, %s252
      %s256 = sphi 0, %s255
      %s272 = sphi 0, %s256
    $region4: #{tpu_custom_call.1} parent=1 // loop_header_branch
      %25 = sbr.rel (%p23) target = $region8
    $region5: #{tpu_custom_call.1} parent=1 // loop_body
      %s27 = ssub.s32 %s22, 1
      %s28 = ssub.s32 %s22, 2
      %s29 = sadd.s32 %s22, 1
      %s30 = ssub.s32 %s22, %s29
      %p31 = scmp.eq.s32.totalorder %s30, 0
      %s33 = sadd.s32 %s32, 1
      %s34 = scalar_select %p31, %s32, %s33
      %p37 = pneg %p31
      %p38 = scmp.eq.s32.totalorder %s22, 1
      %p39 = por %p37, %p38
      %p40 = scmp.ne.s32.totalorder %s32, %s35
      %p41 = scmp.eq.s32.totalorder %s22, 0
      %p42 = por %p40, %p41
      %p43 = scmp.ne.s32.totalorder %s32, %s35
      %p44 = scmp.eq.s32.totalorder %s27, 1
      %p45 = por %p43, %p44
      %p46 = scmp.ne.s32.totalorder %s35, %s36
      %p47 = scmp.eq.s32.totalorder %s27, 0
      %p48 = por %p46, %p47
      %p49 = scmp.ne.s32.totalorder %s35, %s36
      %p50 = scmp.eq.s32.totalorder %s28, 1
      %p51 = por %p49, %p50
      %p53 = scmp.ne.s32.totalorder %s36, %s52
      %p54 = scmp.eq.s32.totalorder %s28, 0
      %p55 = por %p53, %p54
      %s57 = sadd.s32 %s56, 1
      %p60 = scmp.eq.s32.totalorder %s22, 1
      %p61 = scmp.ne.s32.totalorder %s56, %s58
      %p62 = scmp.eq.s32.totalorder %s22, 0
      %p63 = por %p61, %p62
      %p64 = scmp.ne.s32.totalorder %s56, %s58
      %p65 = scmp.eq.s32.totalorder %s27, 1
      %p66 = por %p64, %p65
      %p67 = scmp.ne.s32.totalorder %s58, %s59
      %p68 = scmp.eq.s32.totalorder %s27, 0
      %p69 = por %p67, %p68
      %p70 = scmp.ne.s32.totalorder %s58, %s59
      %p71 = scmp.eq.s32.totalorder %s28, 1
      %p72 = por %p70, %p71
      %p74 = scmp.ne.s32.totalorder %s59, %s73
      %p75 = scmp.eq.s32.totalorder %s28, 0
      %p76 = por %p74, %p75
      %s78 = sadd.s32 %s77, 1
      %p81 = scmp.eq.s32.totalorder %s22, 1
      %p82 = scmp.ne.s32.totalorder %s77, %s79
      %p83 = scmp.eq.s32.totalorder %s22, 0
      %p84 = por %p82, %p83
      %p85 = scmp.ne.s32.totalorder %s77, %s79
      %p86 = scmp.eq.s32.totalorder %s27, 1
      %p87 = por %p85, %p86
      %p88 = scmp.ne.s32.totalorder %s79, %s80
      %p89 = scmp.eq.s32.totalorder %s27, 0
      %p90 = por %p88, %p89
      %p91 = scmp.ne.s32.totalorder %s79, %s80
      %p92 = scmp.eq.s32.totalorder %s28, 1
      %p93 = por %p91, %p92
      %p95 = scmp.ne.s32.totalorder %s80, %s94
      %p96 = scmp.eq.s32.totalorder %s28, 0
      %p97 = por %p95, %p96
      %s99 = sadd.s32 %s98, 1
      %p102 = scmp.eq.s32.totalorder %s22, 1
      %p103 = scmp.ne.s32.totalorder %s98, %s100
      %p104 = scmp.eq.s32.totalorder %s22, 0
      %p105 = por %p103, %p104
      %p106 = scmp.ne.s32.totalorder %s98, %s100
      %p107 = scmp.eq.s32.totalorder %s27, 1
      %p108 = por %p106, %p107
      %p109 = scmp.ne.s32.totalorder %s100, %s101
      %p110 = scmp.eq.s32.totalorder %s27, 0
      %p111 = por %p109, %p110
      %p112 = scmp.ne.s32.totalorder %s100, %s101
      %p113 = scmp.eq.s32.totalorder %s28, 1
      %p114 = por %p112, %p113
      %p116 = scmp.ne.s32.totalorder %s101, %s115
      %p117 = scmp.eq.s32.totalorder %s28, 0
      %p118 = por %p116, %p117
      %s120 = sadd.s32 %s119, 1
      %p123 = scmp.eq.s32.totalorder %s22, 1
      %p124 = scmp.ne.s32.totalorder %s119, %s121
      %p125 = scmp.eq.s32.totalorder %s22, 0
      %p126 = por %p124, %p125
      %p127 = scmp.ne.s32.totalorder %s119, %s121
      %p128 = scmp.eq.s32.totalorder %s27, 1
      %p129 = por %p127, %p128
      %p130 = scmp.ne.s32.totalorder %s121, %s122
      %p131 = scmp.eq.s32.totalorder %s27, 0
      %p132 = por %p130, %p131
      %p133 = scmp.ne.s32.totalorder %s121, %s122
      %p134 = scmp.eq.s32.totalorder %s28, 1
      %p135 = por %p133, %p134
      %p137 = scmp.ne.s32.totalorder %s122, %s136
      %p138 = scmp.eq.s32.totalorder %s28, 0
      %p139 = por %p137, %p138
      %s141 = sadd.s32 %s140, 1
      %p144 = scmp.eq.s32.totalorder %s22, 1
      %p145 = scmp.ne.s32.totalorder %s140, %s142
      %p146 = scmp.eq.s32.totalorder %s22, 0
      %p147 = por %p145, %p146
      %p148 = scmp.ne.s32.totalorder %s140, %s142
      %p149 = scmp.eq.s32.totalorder %s27, 1
      %p150 = por %p148, %p149
      %p151 = scmp.ne.s32.totalorder %s142, %s143
      %p152 = scmp.eq.s32.totalorder %s27, 0
      %p153 = por %p151, %p152
      %p154 = scmp.ne.s32.totalorder %s142, %s143
      %p155 = scmp.eq.s32.totalorder %s28, 1
      %p156 = por %p154, %p155
      %p158 = scmp.ne.s32.totalorder %s143, %s157
      %p159 = scmp.eq.s32.totalorder %s28, 0
      %p160 = por %p158, %p159
      %s162 = sadd.s32 %s161, 1
      %p165 = scmp.eq.s32.totalorder %s22, 1
      %p166 = scmp.ne.s32.totalorder %s161, %s163
      %p167 = scmp.eq.s32.totalorder %s22, 0
      %p168 = por %p166, %p167
      %p169 = scmp.ne.s32.totalorder %s161, %s163
      %p170 = scmp.eq.s32.totalorder %s27, 1
      %p171 = por %p169, %p170
      %p172 = scmp.ne.s32.totalorder %s163, %s164
      %p173 = scmp.eq.s32.totalorder %s27, 0
      %p174 = por %p172, %p173
      %p175 = scmp.ne.s32.totalorder %s163, %s164
      %p176 = scmp.eq.s32.totalorder %s28, 1
      %p177 = por %p175, %p176
      %p179 = scmp.ne.s32.totalorder %s164, %s178
      %p180 = scmp.eq.s32.totalorder %s28, 0
      %p181 = por %p179, %p180
      %s182 = ssub.s32 %s22, %s29
      %p183 = scmp.eq.s32.totalorder %s182, 0
      %s185 = sadd.s32 %s184, 1
      %s186 = scalar_select %p183, %s184, %s185
      %p189 = pneg %p183
      %p190 = scmp.eq.s32.totalorder %s22, 1
      %p191 = por %p189, %p190
      %p192 = scmp.ne.s32.totalorder %s184, %s187
      %p193 = scmp.eq.s32.totalorder %s22, 0
      %p194 = por %p192, %p193
      %p195 = scmp.ne.s32.totalorder %s184, %s187
      %p196 = scmp.eq.s32.totalorder %s27, 1
      %p197 = por %p195, %p196
      %p198 = scmp.ne.s32.totalorder %s187, %s188
      %p199 = scmp.eq.s32.totalorder %s27, 0
      %p200 = por %p198, %p199
      %p201 = scmp.ne.s32.totalorder %s187, %s188
      %p202 = scmp.eq.s32.totalorder %s28, 1
      %p203 = por %p201, %p202
      %p205 = scmp.ne.s32.totalorder %s188, %s204
      %p206 = scmp.eq.s32.totalorder %s28, 0
      %p207 = por %p205, %p206
      %s209 = sadd.s32 %s208, 1
      %p212 = scmp.eq.s32.totalorder %s22, 1
      %p213 = scmp.ne.s32.totalorder %s208, %s210
      %p214 = scmp.eq.s32.totalorder %s22, 0
      %p215 = por %p213, %p214
      %p216 = scmp.ne.s32.totalorder %s208, %s210
      %p217 = scmp.eq.s32.totalorder %s27, 1
      %p218 = por %p216, %p217
      %p219 = scmp.ne.s32.totalorder %s210, %s211
      %p220 = scmp.eq.s32.totalorder %s27, 0
      %p221 = por %p219, %p220
      %p222 = scmp.ne.s32.totalorder %s210, %s211
      %p223 = scmp.eq.s32.totalorder %s28, 1
      %p224 = por %p222, %p223
      %p226 = scmp.ne.s32.totalorder %s211, %s225
      %p227 = scmp.eq.s32.totalorder %s28, 0
      %p228 = por %p226, %p227
      %s230 = sadd.s32 %s229, 1
      %p233 = scmp.eq.s32.totalorder %s22, 1
      %p234 = scmp.ne.s32.totalorder %s229, %s231
      %p235 = scmp.eq.s32.totalorder %s22, 0
      %p236 = por %p234, %p235
      %p237 = scmp.ne.s32.totalorder %s229, %s231
      %p238 = scmp.eq.s32.totalorder %s27, 1
      %p239 = por %p237, %p238
      %p240 = scmp.ne.s32.totalorder %s231, %s232
      %p241 = scmp.eq.s32.totalorder %s27, 0
      %p242 = por %p240, %p241
      %p243 = scmp.ne.s32.totalorder %s231, %s232
      %p244 = scmp.eq.s32.totalorder %s28, 1
      %p245 = por %p243, %p244
      %p247 = scmp.ne.s32.totalorder %s232, %s246
      %p248 = scmp.eq.s32.totalorder %s28, 0
      %p249 = por %p247, %p248
      %s250 = ssub.s32 %s22, %s29
      %p251 = scmp.eq.s32.totalorder %s250, 0
      %s253 = sadd.s32 %s252, 1
      %s254 = scalar_select %p251, %s252, %s253
      %p257 = pneg %p251
      %p258 = scmp.eq.s32.totalorder %s22, 1
      %p259 = por %p257, %p258
      %p260 = scmp.ne.s32.totalorder %s252, %s255
      %p261 = scmp.eq.s32.totalorder %s22, 0
      %p262 = por %p260, %p261
      %p263 = scmp.ne.s32.totalorder %s252, %s255
      %p264 = scmp.eq.s32.totalorder %s27, 1
      %p265 = por %p263, %p264
      %p266 = scmp.ne.s32.totalorder %s255, %s256
      %p267 = scmp.eq.s32.totalorder %s27, 0
      %p268 = por %p266, %p267
      %p269 = scmp.ne.s32.totalorder %s255, %s256
      %p270 = scmp.eq.s32.totalorder %s28, 1
      %p271 = por %p269, %p270
      %p273 = scmp.ne.s32.totalorder %s256, %s272
      %p274 = scmp.eq.s32.totalorder %s28, 0
      %p275 = por %p273, %p274
      %p276 = scmp.le.s32.totalorder 1, %s22
      %p277 = scmp.lt.s32.totalorder %s22, 3
      %p278 = pnand %p276, %p277
      %p279 = pneg %p278
      // Predicated region
      $region9: #{tpu_custom_call.1} parent=5 // pred_check
        _
      $region10: #{tpu_custom_call.1} parent=5 // pred_check_branch
        %281 = sbr.rel (%p278) target = $region12
      $region11: #{tpu_custom_call.1} parent=5 // pred_region
        %s282 = ssub.s32 %s22, 1
        // Predicated region
        $region13: #{tpu_custom_call.1} parent=11 // pred_check
          %p283 = pneg %p69
        $region14: #{tpu_custom_call.1} parent=11 // pred_check_branch
          %285 = sbr.rel (%p283) target = $region16
        $region15: #{tpu_custom_call.1} parent=11 // pred_region
          _
        $region16: #{tpu_custom_call.1} parent=11 // pred_fallthru
          _
        // Predicated region
        $region17: #{tpu_custom_call.1} parent=11 // pred_check
          %p286 = pneg %p90
        $region18: #{tpu_custom_call.1} parent=11 // pred_check_branch
          %288 = sbr.rel (%p286) target = $region20
        $region19: #{tpu_custom_call.1} parent=11 // pred_region
          _
        $region20: #{tpu_custom_call.1} parent=11 // pred_fallthru
          _
        // Predicated region
        $region21: #{tpu_custom_call.1} parent=11 // pred_check
          %p289 = pneg %p111
        $region22: #{tpu_custom_call.1} parent=11 // pred_check_branch
          %291 = sbr.rel (%p289) target = $region24
        $region23: #{tpu_custom_call.1} parent=11 // pred_region
          _
        $region24: #{tpu_custom_call.1} parent=11 // pred_fallthru
          _
        // Predicated region
        $region25: #{tpu_custom_call.1} parent=11 // pred_check
          %p292 = pneg %p132
        $region26: #{tpu_custom_call.1} parent=11 // pred_check_branch
          %294 = sbr.rel (%p292) target = $region28
        $region27: #{tpu_custom_call.1} parent=11 // pred_region
          _
        $region28: #{tpu_custom_call.1} parent=11 // pred_fallthru
          _
        // Predicated region
        $region29: #{tpu_custom_call.1} parent=11 // pred_check
          %p295 = pneg %p153
        $region30: #{tpu_custom_call.1} parent=11 // pred_check_branch
          %297 = sbr.rel (%p295) target = $region32
        $region31: #{tpu_custom_call.1} parent=11 // pred_region
          _
        $region32: #{tpu_custom_call.1} parent=11 // pred_fallthru
          _
        // Predicated region
        $region33: #{tpu_custom_call.1} parent=11 // pred_check
          %p298 = pneg %p174
        $region34: #{tpu_custom_call.1} parent=11 // pred_check_branch
          %300 = sbr.rel (%p298) target = $region36
        $region35: #{tpu_custom_call.1} parent=11 // pred_region
          _
        $region36: #{tpu_custom_call.1} parent=11 // pred_fallthru
          _
        // Predicated region
        $region37: #{tpu_custom_call.1} parent=11 // pred_check
          %p301 = pneg %p221
        $region38: #{tpu_custom_call.1} parent=11 // pred_check_branch
          %303 = sbr.rel (%p301) target = $region40
        $region39: #{tpu_custom_call.1} parent=11 // pred_region
          _
        $region40: #{tpu_custom_call.1} parent=11 // pred_fallthru
          _
        // Predicated region
        $region41: #{tpu_custom_call.1} parent=11 // pred_check
          %p304 = pneg %p242
        $region42: #{tpu_custom_call.1} parent=11 // pred_check_branch
          %306 = sbr.rel (%p304) target = $region44
        $region43: #{tpu_custom_call.1} parent=11 // pred_region
          _
        $region44: #{tpu_custom_call.1} parent=11 // pred_fallthru
          _
      $region12: #{tpu_custom_call.1} parent=5 // pred_fallthru
        _
      %p307 = scmp.lt.s32.totalorder %s22, 2
      // Predicated region
      $region45: #{tpu_custom_call.1} parent=5 // pred_check
        %p308 = pneg %p307
      $region46: #{tpu_custom_call.1} parent=5 // pred_check_branch
        %310 = sbr.rel (%p308) target = $region48
      $region47: #{tpu_custom_call.1} parent=5 // pred_region
        // Predicated region
        $region49: #{tpu_custom_call.1} parent=47 // pred_check
          %p311 = pneg %p42
        $region50: #{tpu_custom_call.1} parent=47 // pred_check_branch
          %313 = sbr.rel (%p311) target = $region52
        $region51: #{tpu_custom_call.1} parent=47 // pred_region
          %s314 = sand.u32 %s32, 1
          %s315 = scalar_lea.sflag [#allocation5], %s314
          %s316 = sand.u32 %s32, 1
          %s317 = smul.addr %s316, 256
          %s318 = scalar_lea.vmem [#allocation4], %s317
          %s320 = ssub.s32 4096, 4096
          %321 = vsyncadd %s315, %s320
          %s322 = smul.addr %s22, 32
          %s323 = smul.addr %s322, 128
          %s324 = scalar_lea.hbm %s0, %s323
          %s325 = sshll.u32 %s318, 4
          %s326 = int_to_ptr.vmem [resolvable:$true] %s325
          %331 = dma.hbm_to_vmem [thread:$0]  %s324, 4096, %s326, %s315, 128, 128, 8
        $region52: #{tpu_custom_call.1} parent=47 // pred_fallthru
          _
        // Predicated region
        $region53: #{tpu_custom_call.1} parent=47 // pred_check
          %p332 = pneg %p194
        $region54: #{tpu_custom_call.1} parent=47 // pred_check_branch
          %334 = sbr.rel (%p332) target = $region56
        $region55: #{tpu_custom_call.1} parent=47 // pred_region
          %p335 = scmp.lt.s32.totalorder %s22, 1
          %s336 = scalar_select %p335, %s22, 1
          %s337 = scalar_lea.vmem %s7, %s336
        $region56: #{tpu_custom_call.1} parent=47 // pred_fallthru
          _
      $region48: #{tpu_custom_call.1} parent=5 // pred_fallthru
        _
      %p338 = scmp.le.s32.totalorder 1, %s22
      %p339 = scmp.lt.s32.totalorder %s22, 3
      %p340 = pnand %p338, %p339
      %p341 = pneg %p340
      // Predicated region
      $region57: #{tpu_custom_call.1} parent=5 // pred_check
        _
      $region58: #{tpu_custom_call.1} parent=5 // pred_check_branch
        %343 = sbr.rel (%p340) target = $region60
      $region59: #{tpu_custom_call.1} parent=5 // pred_region
        %s344 = ssub.s32 %s22, 1
        %s345 = sand.u32 %s35, 1
        %s346 = scalar_lea.sflag [#allocation5], %s345
        %s347 = sand.u32 %s35, 1
        %s348 = smul.addr %s347, 256
        %s349 = scalar_lea.vmem [#allocation4], %s348
        // Predicated region
        $region61: #{tpu_custom_call.1} parent=59 // pred_check
          %p350 = pneg %p48
        $region62: #{tpu_custom_call.1} parent=59 // pred_check_branch
          %352 = sbr.rel (%p350) target = $region64
        $region63: #{tpu_custom_call.1} parent=59 // pred_region
          %353 = dma.done %s346, 4096
        $region64: #{tpu_custom_call.1} parent=59 // pred_fallthru
          _
        %s354 = sand.u32 %s35, 1
        %s355 = scalar_lea.sflag [#allocation5], %s354
        %s356 = sand.u32 %s35, 1
        %s357 = smul.addr %s356, 256
        %s358 = scalar_lea.vmem [#allocation4], %s357
        %p359 = pneg %p48
        %p360 = pneg %p45
        %p361 = pneg %p69
        %p362 = pneg %p66
        %p363 = pneg %p90
        %p364 = pneg %p87
        %p365 = pneg %p111
        %p366 = pneg %p108
        %p367 = pneg %p132
        %p368 = pneg %p129
        %p369 = pneg %p153
        %p370 = pneg %p150
        %p371 = pneg %p174
        %p372 = pneg %p171
        %p373 = scmp.lt.s32.totalorder %s27, 1
        %s374 = scalar_select %p373, %s27, 1
        %s375 = scalar_lea.vmem %s7, %s374
        %p376 = pneg %p200
        %p377 = pneg %p197
        %p378 = pneg %p221
        %p379 = pneg %p218
        %p380 = pneg %p242
        %p381 = pneg %p239
        %p382 = pneg %p268
        %p383 = pneg %p265
        %s384 = sand.u32 %s255, 1
        %s385 = scalar_lea.sflag [#allocation6], %s384
        %s386 = sand.u32 %s255, 1
        %s387 = smul.addr %s386, 2
        %s388 = scalar_lea.vmem [#allocation7], %s387
        %p389 = scmp.lt.s32.totalorder %s27, 1
        %s390 = scalar_select %p389, %s27, 1
        %s391 = scalar_lea.vmem %s7, %s390
        %v392 = vld [vmem:[%s391] sm:$0x1]
        %v393 = vld [vmem:[%s8] sm:$0xff]
        %v394 = vld [vmem:[%s8 + $0x8] sm:$0xff]
        %v395 = vld [vmem:[%s8 + $0x10] sm:$0xff]
        %v396 = vld [vmem:[%s8 + $0x18] sm:$0xff]
        %v397 = vld [vmem:[%s9] sm:$0x1]
        %vm398 = vcmask 261120
        %v400 = vsel %vm398, %v392, 0
        %402 = vmatprep.subr.mxu0 0.0
        %403 = vmatpush1.msra.mxu0 0.0
        %404 = vmatprep.subr.mxu0 0.0
        %405 = vmatpush1.msra.mxu0 0.0
        %406 = vmatprep.subr.mxu0 0.0
        %407 = vmatpush1.msra.mxu0 0.0
        %408 = vmatprep.subr.mxu0 0.0
        %409 = vmatpush1.msra.mxu0 0.0
        %410 = vmatprep.subr.mxu0 0.0
        %411 = vmatpush1.msra.mxu0 0.0
        %412 = vmatprep.subr.mxu0 0.0
        %413 = vmatpush1.msra.mxu0 0.0
        %414 = vmatprep.subr.mxu0 0.0
        %415 = vmatpush1.msra.mxu0 0.0
        %416 = vmatprep.subr.mxu0 0.0
        %417 = vmatpush1.msra.mxu0 0.0
        %418 = vmatprep.subr.mxu0 0.0
        %419 = vmatpush1.msra.mxu0 0.0
        %420 = vmatprep.subr.mxu0 0.0
        %421 = vmatpush1.msra.mxu0 0.0
        %422 = vmatprep.subr.mxu0 0.0
        %423 = vmatpush1.msra.mxu0 0.0
        %424 = vmatprep.subr.mxu0 0.0
        %425 = vmatpush1.msra.mxu0 0.0
        %426 = vmatprep.subr.mxu0 0.0
        %427 = vmatpush1.msra.mxu0 %v396
        %428 = vmatprep.subr.mxu0 0.0
        %429 = vmatpush1.msra.mxu0 %v395
        %430 = vmatprep.subr.mxu0 0.0
        %431 = vmatpush1.msra.mxu0 %v394
        %432 = vmatprep.subr.mxu0 0.0
        %433 = vmatpush1.msra.mxu0 %v393
        %434 = vmatprep.subr.mxu0 0.0
        %435 = vmatpush2.msra.mxu0 0.0
        %436 = vmatprep.subr.mxu0 0.0
        %437 = vmatpush2.msra.mxu0 0.0
        %438 = vmatprep.subr.mxu0 0.0
        %439 = vmatpush2.msra.mxu0 0.0
        %440 = vmatprep.subr.mxu0 0.0
        %441 = vmatpush2.msra.mxu0 0.0
        %442 = vmatprep.subr.mxu0 0.0
        %443 = vmatpush2.msra.mxu0 0.0
        %444 = vmatprep.subr.mxu0 0.0
        %445 = vmatpush2.msra.mxu0 0.0
        %446 = vmatprep.subr.mxu0 0.0
        %447 = vmatpush2.msra.mxu0 0.0
        %448 = vmatprep.subr.mxu0 0.0
        %449 = vmatpush2.msra.mxu0 0.0
        %450 = vmatprep.subr.mxu0 0.0
        %451 = vmatpush2.msra.mxu0 0.0
        %452 = vmatprep.subr.mxu0 0.0
        %453 = vmatpush2.msra.mxu0 0.0
        %454 = vmatprep.subr.mxu0 0.0
        %455 = vmatpush2.msra.mxu0 0.0
        %456 = vmatprep.subr.mxu0 0.0
        %457 = vmatpush2.msra.mxu0 0.0
        %458 = vmatprep.subr.mxu0 0.0
        %459 = vmatpush2.msra.mxu0 0.0
        %460 = vmatprep.subr.mxu0 0.0
        %461 = vmatpush2.msra.mxu0 0.0
        %462 = vmatprep.subr.mxu0 0.0
        %463 = vmatpush2.msra.mxu0 0.0
        %464 = vmatprep.subr.mxu0 0.0
        %465 = vmatpush2.msra.mxu0 0.0
        %466 = vmatprep.mubr.f32.mxu0 0.0
        %467 = vmatmul.mubr.f32.gmra.mxu0 %v400
        %v468 = vpop.f32.mrf.mxu0
        %v469 = vadd.f32 %v397, %v468
        %v470 = vpop.f32.mrf.mxu0
        %471 = vdwg.mxu0
        %vm472 = vcmask 130048
        %473 = vst.msk [vmem:[#allocation2] sm:$0xff] %vm472, 0.0
        %474 = vst.msk [vmem:[#allocation2 + $0x8] sm:$0xff] %vm472, 0.0
        %vm475 = vcmask 123904
        %476 = vst.msk [vmem:[#allocation2 + $0x10] sm:$0x3] %vm475, 0.0
        %477 = vst.msk [vmem:[#allocation2 + $0x18] sm:$0xff] %vm472, 0.0
        %478 = vst.msk [vmem:[#allocation2 + $0x20] sm:$0xff] %vm472, 0.0
        %479 = vst.msk [vmem:[#allocation2 + $0x28] sm:$0x3] %vm475, 0.0
        %480 = vst.msk [vmem:[#allocation2 + $0x30] sm:$0xff] %vm472, 0.0
        %481 = vst.msk [vmem:[#allocation2 + $0x38] sm:$0xff] %vm472, 0.0
        %482 = vst.msk [vmem:[#allocation2 + $0x40] sm:$0x3] %vm475, 0.0
        %483 = vst.msk [vmem:[#allocation2 + $0x48] sm:$0xff] %vm472, 0.0
        %484 = vst.msk [vmem:[#allocation2 + $0x50] sm:$0xff] %vm472, 0.0
        %485 = vst.msk [vmem:[#allocation2 + $0x58] sm:$0x3] %vm475, 0.0
        %486 = vst.msk [vmem:[#allocation2 + $0x60] sm:$0xff] %vm472, 0.0
        %487 = vst.msk [vmem:[#allocation2 + $0x68] sm:$0xff] %vm472, 0.0
        %488 = vst.msk [vmem:[#allocation2 + $0x70] sm:$0x3] %vm475, 0.0
        %489 = vst.msk [vmem:[#allocation2 + $0x78] sm:$0xff] %vm472, 0.0
        %490 = vst.msk [vmem:[#allocation2 + $0x80] sm:$0xff] %vm472, 0.0
        %491 = vst.msk [vmem:[#allocation2 + $0x88] sm:$0x3] %vm475, 0.0
        %492 = vst.msk [vmem:[#allocation2 + $0x90] sm:$0xff] %vm472, 0.0
        %493 = vst.msk [vmem:[#allocation2 + $0x98] sm:$0xff] %vm472, 0.0
        %494 = vst.msk [vmem:[#allocation2 + $0xa0] sm:$0x3] %vm475, 0.0
        %495 = vst.msk [vmem:[#allocation2 + $0xa8] sm:$0xff] %vm472, 0.0
        %496 = vst.msk [vmem:[#allocation2 + $0xb0] sm:$0xff] %vm472, 0.0
        %497 = vst.msk [vmem:[#allocation2 + $0xb8] sm:$0x3] %vm475, 0.0
        %498 = vst.msk [vmem:[#allocation2 + $0xc0] sm:$0xff] %vm472, 0.0
        %499 = vst.msk [vmem:[#allocation2 + $0xc8] sm:$0xff] %vm472, 0.0
        %500 = vst.msk [vmem:[#allocation2 + $0xd0] sm:$0x3] %vm475, 0.0
        %501 = vst.msk [vmem:[#allocation2 + $0xd8] sm:$0xff] %vm472, 0.0
        %502 = vst.msk [vmem:[#allocation2 + $0xe0] sm:$0xff] %vm472, 0.0
        %503 = vst.msk [vmem:[#allocation2 + $0xe8] sm:$0x3] %vm475, 0.0
        %504 = vst.msk [vmem:[#allocation2 + $0xf0] sm:$0xff] %vm472, 0.0
        %505 = vst.msk [vmem:[#allocation2 + $0xf8] sm:$0xff] %vm472, 0.0
        %506 = vst.msk [vmem:[#allocation2 + $0x100] sm:$0x3] %vm475, 0.0
        %507 = vst.msk [vmem:[#allocation2 + $0x108] sm:$0xff] %vm472, 0.0
        %508 = vst.msk [vmem:[#allocation2 + $0x110] sm:$0xff] %vm472, 0.0
        %509 = vst.msk [vmem:[#allocation2 + $0x118] sm:$0x3] %vm475, 0.0
        %510 = vst.msk [vmem:[#allocation2 + $0x120] sm:$0xff] %vm472, 0.0
        %511 = vst.msk [vmem:[#allocation2 + $0x128] sm:$0xff] %vm472, 0.0
        %512 = vst.msk [vmem:[#allocation2 + $0x130] sm:$0x3] %vm475, 0.0
        %513 = vst.msk [vmem:[#allocation2 + $0x138] sm:$0xff] %vm472, 0.0
        %514 = vst.msk [vmem:[#allocation2 + $0x140] sm:$0xff] %vm472, 0.0
        %515 = vst.msk [vmem:[#allocation2 + $0x148] sm:$0x3] %vm475, 0.0
        %516 = vst.msk [vmem:[#allocation2 + $0x150] sm:$0xff] %vm472, 0.0
        %517 = vst.msk [vmem:[#allocation2 + $0x158] sm:$0xff] %vm472, 0.0
        %518 = vst.msk [vmem:[#allocation2 + $0x160] sm:$0x3] %vm475, 0.0
        %519 = vst.msk [vmem:[#allocation2 + $0x168] sm:$0xff] %vm472, 0.0
        %520 = vst.msk [vmem:[#allocation2 + $0x170] sm:$0xff] %vm472, 0.0
        %521 = vst.msk [vmem:[#allocation2 + $0x178] sm:$0x3] %vm475, 0.0
        %522 = vst.msk [vmem:[#allocation2 + $0x180] sm:$0xff] %vm472, 0.0
        %523 = vst.msk [vmem:[#allocation2 + $0x188] sm:$0xff] %vm472, 0.0
        %524 = vst.msk [vmem:[#allocation2 + $0x190] sm:$0x3] %vm475, 0.0
        %525 = vst.msk [vmem:[#allocation2 + $0x198] sm:$0xff] %vm472, 0.0
        %526 = vst.msk [vmem:[#allocation2 + $0x1a0] sm:$0xff] %vm472, 0.0
        %527 = vst.msk [vmem:[#allocation2 + $0x1a8] sm:$0x3] %vm475, 0.0
        %v528 = vld [vmem:[%s349] sm:$0xff]
        %v529 = vld [vmem:[%s349 + $0x8] sm:$0xff]
        %v530 = vld [vmem:[%s349 + $0x10] sm:$0xff]
        %v531 = vld [vmem:[%s349 + $0x18] sm:$0xff]
        %v532 = vld [vmem:[%s349 + $0x20] sm:$0xff]
        %v533 = vld [vmem:[%s349 + $0x28] sm:$0xff]
        %v534 = vld [vmem:[%s349 + $0x30] sm:$0xff]
        %v535 = vld [vmem:[%s349 + $0x38] sm:$0xff]
        %v536 = vld [vmem:[%s349 + $0x40] sm:$0xff]
        %v537 = vld [vmem:[%s349 + $0x48] sm:$0xff]
        %v538 = vld [vmem:[%s349 + $0x50] sm:$0xff]
        %v539 = vld [vmem:[%s349 + $0x58] sm:$0xff]
        %v540 = vld [vmem:[%s349 + $0x60] sm:$0xff]
        %v541 = vld [vmem:[%s349 + $0x68] sm:$0xff]
        %v542 = vld [vmem:[%s349 + $0x70] sm:$0xff]
        %v543 = vld [vmem:[%s349 + $0x78] sm:$0xff]
        %v544 = vld [vmem:[%s349 + $0x80] sm:$0xff]
        %v545 = vld [vmem:[%s349 + $0x88] sm:$0xff]
        %v546 = vld [vmem:[%s349 + $0x90] sm:$0xff]
        %v547 = vld [vmem:[%s349 + $0x98] sm:$0xff]
        %v548 = vld [vmem:[%s349 + $0xa0] sm:$0xff]
        %v549 = vld [vmem:[%s349 + $0xa8] sm:$0xff]
        %v550 = vld [vmem:[%s349 + $0xb0] sm:$0xff]
        %v551 = vld [vmem:[%s349 + $0xb8] sm:$0xff]
        %v552 = vld [vmem:[%s349 + $0xc0] sm:$0xff]
        %v553 = vld [vmem:[%s349 + $0xc8] sm:$0xff]
        %v554 = vld [vmem:[%s349 + $0xd0] sm:$0xff]
        %v555 = vld [vmem:[%s349 + $0xd8] sm:$0xff]
        %v556 = vld [vmem:[%s349 + $0xe0] sm:$0xff]
        %v557 = vld [vmem:[%s349 + $0xe8] sm:$0xff]
        %v558 = vld [vmem:[%s349 + $0xf0] sm:$0xff]
        %v559 = vld [vmem:[%s349 + $0xf8] sm:$0xff]
        %s560 = scalar_lea.vmem [#allocation2], 24
        %561 = vst.msk [vmem:[%s560 + $0x1] sm:$0xff] %vm472, %v528
        %562 = vst.msk [vmem:[%s560 + $0x9] sm:$0xff] %vm472, %v529
        %563 = vst.msk [vmem:[%s560 + $0x19] sm:$0xff] %vm472, %v530
        %564 = vst.msk [vmem:[%s560 + $0x21] sm:$0xff] %vm472, %v531
        %565 = vst.msk [vmem:[%s560 + $0x31] sm:$0xff] %vm472, %v532
        %566 = vst.msk [vmem:[%s560 + $0x39] sm:$0xff] %vm472, %v533
        %567 = vst.msk [vmem:[%s560 + $0x49] sm:$0xff] %vm472, %v534
        %568 = vst.msk [vmem:[%s560 + $0x51] sm:$0xff] %vm472, %v535
        %569 = vst.msk [vmem:[%s560 + $0x61] sm:$0xff] %vm472, %v536
        %570 = vst.msk [vmem:[%s560 + $0x69] sm:$0xff] %vm472, %v537
        %571 = vst.msk [vmem:[%s560 + $0x79] sm:$0xff] %vm472, %v538
        %572 = vst.msk [vmem:[%s560 + $0x81] sm:$0xff] %vm472, %v539
        %573 = vst.msk [vmem:[%s560 + $0x91] sm:$0xff] %vm472, %v540
        %574 = vst.msk [vmem:[%s560 + $0x99] sm:$0xff] %vm472, %v541
        %575 = vst.msk [vmem:[%s560 + $0xa9] sm:$0xff] %vm472, %v542
        %576 = vst.msk [vmem:[%s560 + $0xb1] sm:$0xff] %vm472, %v543
        %577 = vst.msk [vmem:[%s560 + $0xc1] sm:$0xff] %vm472, %v544
        %578 = vst.msk [vmem:[%s560 + $0xc9] sm:$0xff] %vm472, %v545
        %579 = vst.msk [vmem:[%s560 + $0xd9] sm:$0xff] %vm472, %v546
        %580 = vst.msk [vmem:[%s560 + $0xe1] sm:$0xff] %vm472, %v547
        %581 = vst.msk [vmem:[%s560 + $0xf1] sm:$0xff] %vm472, %v548
        %582 = vst.msk [vmem:[%s560 + $0xf9] sm:$0xff] %vm472, %v549
        %583 = vst.msk [vmem:[%s560 + $0x109] sm:$0xff] %vm472, %v550
        %584 = vst.msk [vmem:[%s560 + $0x111] sm:$0xff] %vm472, %v551
        %585 = vst.msk [vmem:[%s560 + $0x121] sm:$0xff] %vm472, %v552
        %586 = vst.msk [vmem:[%s560 + $0x129] sm:$0xff] %vm472, %v553
        %587 = vst.msk [vmem:[%s560 + $0x139] sm:$0xff] %vm472, %v554
        %588 = vst.msk [vmem:[%s560 + $0x141] sm:$0xff] %vm472, %v555
        %589 = vst.msk [vmem:[%s560 + $0x151] sm:$0xff] %vm472, %v556
        %590 = vst.msk [vmem:[%s560 + $0x159] sm:$0xff] %vm472, %v557
        %591 = vst.msk [vmem:[%s560 + $0x169] sm:$0xff] %vm472, %v558
        %592 = vst.msk [vmem:[%s560 + $0x171] sm:$0xff] %vm472, %v559
        %v593 = vld [vmem:[#allocation2] sm:$0xff]
        %v594 = vld [vmem:[#allocation2 + $0x8] sm:$0xff]
        %v595 = vld [vmem:[#allocation2 + $0x10] sm:$0x3]
        %v596 = vld [vmem:[#allocation2 + $0x18] sm:$0xff]
        %v597 = vld [vmem:[#allocation2 + $0x20] sm:$0xff]
        %v598 = vld [vmem:[#allocation2 + $0x28] sm:$0x3]
        %v599 = vld [vmem:[#allocation2 + $0x30] sm:$0xff]
        %v600 = vld [vmem:[#allocation2 + $0x38] sm:$0xff]
        %v601 = vld [vmem:[#allocation2 + $0x40] sm:$0x3]
        %v602 = vld [vmem:[#allocation2 + $0x48] sm:$0xff]
        %v603 = vld [vmem:[#allocation2 + $0x50] sm:$0xff]
        %v604 = vld [vmem:[#allocation2 + $0x58] sm:$0x3]
        %v605 = vld [vmem:[#allocation2 + $0x60] sm:$0xff]
        %v606 = vld [vmem:[#allocation2 + $0x68] sm:$0xff]
        %v607 = vld [vmem:[#allocation2 + $0x70] sm:$0x3]
        %v608 = vld [vmem:[#allocation2 + $0x78] sm:$0xff]
        %v609 = vld [vmem:[#allocation2 + $0x80] sm:$0xff]
        %v610 = vld [vmem:[#allocation2 + $0x88] sm:$0x3]
        %v611 = vld [vmem:[#allocation2 + $0x90] sm:$0xff]
        %v612 = vld [vmem:[#allocation2 + $0x98] sm:$0xff]
        %v613 = vld [vmem:[#allocation2 + $0xa0] sm:$0x3]
        %v614 = vld [vmem:[#allocation2 + $0xa8] sm:$0xff]
        %v615 = vld [vmem:[#allocation2 + $0xb0] sm:$0xff]
        %v616 = vld [vmem:[#allocation2 + $0xb8] sm:$0x3]
        %v617 = vld [vmem:[#allocation2 + $0xc0] sm:$0xff]
        %v618 = vld [vmem:[#allocation2 + $0xc8] sm:$0xff]
        %v619 = vld [vmem:[#allocation2 + $0xd0] sm:$0x3]
        %v620 = vld [vmem:[#allocation2 + $0xd8] sm:$0xff]
        %v621 = vld [vmem:[#allocation2 + $0xe0] sm:$0xff]
        %v622 = vld [vmem:[#allocation2 + $0xe8] sm:$0x3]
        %v623 = vld [vmem:[#allocation2 + $0xf0] sm:$0xff]
        %v624 = vld [vmem:[#allocation2 + $0xf8] sm:$0xff]
        %v625 = vld [vmem:[#allocation2 + $0x100] sm:$0x3]
        %v626 = vld [vmem:[#allocation2 + $0x108] sm:$0xff]
        %v627 = vld [vmem:[#allocation2 + $0x110] sm:$0xff]
        %v628 = vld [vmem:[#allocation2 + $0x118] sm:$0x3]
        %v629 = vld [vmem:[#allocation2 + $0x120] sm:$0xff]
        %v630 = vld [vmem:[#allocation2 + $0x128] sm:$0xff]
        %v631 = vld [vmem:[#allocation2 + $0x130] sm:$0x3]
        %v632 = vld [vmem:[#allocation2 + $0x138] sm:$0xff]
        %v633 = vld [vmem:[#allocation2 + $0x140] sm:$0xff]
        %v634 = vld [vmem:[#allocation2 + $0x148] sm:$0x3]
        %v635 = vld [vmem:[#allocation2 + $0x150] sm:$0xff]
        %v636 = vld [vmem:[#allocation2 + $0x158] sm:$0xff]
        %v637 = vld [vmem:[#allocation2 + $0x160] sm:$0x3]
        %v638 = vld [vmem:[#allocation2 + $0x168] sm:$0xff]
        %v639 = vld [vmem:[#allocation2 + $0x170] sm:$0xff]
        %v640 = vld [vmem:[#allocation2 + $0x178] sm:$0x3]
        %v641 = vld [vmem:[#allocation2 + $0x180] sm:$0xff]
        %v642 = vld [vmem:[#allocation2 + $0x188] sm:$0xff]
        %v643 = vld [vmem:[#allocation2 + $0x190] sm:$0x3]
        %v644 = vld [vmem:[#allocation2 + $0x198] sm:$0xff]
        %v645 = vld [vmem:[#allocation2 + $0x1a0] sm:$0xff]
        %v646 = vld [vmem:[#allocation2 + $0x1a8] sm:$0x3]
        %vm695 = vcmask 1046528
        %v696 = vrot.slane %v593, 1
        %v697 = vrot.slane %v594, 1
        %v698 = vsel %vm695, %v696, %v697
        %v699 = vrot.slane %v595, 1
        %v700 = vsel %vm695, %v697, %v699
        %v701 = vrot.slane %v596, 1
        %v702 = vrot.slane %v597, 1
        %v703 = vsel %vm695, %v701, %v702
        %v704 = vrot.slane %v598, 1
        %v705 = vsel %vm695, %v702, %v704
        %v706 = vrot.slane %v599, 1
        %v707 = vrot.slane %v600, 1
        %v708 = vsel %vm695, %v706, %v707
        %v709 = vrot.slane %v601, 1
        %v710 = vsel %vm695, %v707, %v709
        %v711 = vrot.slane %v602, 1
        %v712 = vrot.slane %v603, 1
        %v713 = vsel %vm695, %v711, %v712
        %v714 = vrot.slane %v604, 1
        %v715 = vsel %vm695, %v712, %v714
        %v716 = vrot.slane %v605, 1
        %v717 = vrot.slane %v606, 1
        %v718 = vsel %vm695, %v716, %v717
        %v719 = vrot.slane %v607, 1
        %v720 = vsel %vm695, %v717, %v719
        %v721 = vrot.slane %v608, 1
        %v722 = vrot.slane %v609, 1
        %v723 = vsel %vm695, %v721, %v722
        %v724 = vrot.slane %v610, 1
        %v725 = vsel %vm695, %v722, %v724
        %v726 = vrot.slane %v611, 1
        %v727 = vrot.slane %v612, 1
        %v728 = vsel %vm695, %v726, %v727
        %v729 = vrot.slane %v613, 1
        %v730 = vsel %vm695, %v727, %v729
        %v731 = vrot.slane %v614, 1
        %v732 = vrot.slane %v615, 1
        %v733 = vsel %vm695, %v731, %v732
        %v734 = vrot.slane %v616, 1
        %v735 = vsel %vm695, %v732, %v734
        %v736 = vrot.slane %v617, 1
        %v737 = vrot.slane %v618, 1
        %v738 = vsel %vm695, %v736, %v737
        %v739 = vrot.slane %v619, 1
        %v740 = vsel %vm695, %v737, %v739
        %v741 = vrot.slane %v620, 1
        %v742 = vrot.slane %v621, 1
        %v743 = vsel %vm695, %v741, %v742
        %v744 = vrot.slane %v622, 1
        %v745 = vsel %vm695, %v742, %v744
        %v746 = vrot.slane %v623, 1
        %v747 = vrot.slane %v624, 1
        %v748 = vsel %vm695, %v746, %v747
        %v749 = vrot.slane %v625, 1
        %v750 = vsel %vm695, %v747, %v749
        %v751 = vrot.slane %v626, 1
        %v752 = vrot.slane %v627, 1
        %v753 = vsel %vm695, %v751, %v752
        %v754 = vrot.slane %v628, 1
        %v755 = vsel %vm695, %v752, %v754
        %v756 = vrot.slane %v629, 1
        %v757 = vrot.slane %v630, 1
        %v758 = vsel %vm695, %v756, %v757
        %v759 = vrot.slane %v631, 1
        %v760 = vsel %vm695, %v757, %v759
        %v761 = vrot.slane %v632, 1
        %v762 = vrot.slane %v633, 1
        %v763 = vsel %vm695, %v761, %v762
        %v764 = vrot.slane %v634, 1
        %v765 = vsel %vm695, %v762, %v764
        %v766 = vrot.slane %v635, 1
        %v767 = vrot.slane %v636, 1
        %v768 = vsel %vm695, %v766, %v767
        %v769 = vrot.slane %v637, 1
        %v770 = vsel %vm695, %v767, %v769
        %v771 = vrot.slane %v638, 1
        %v772 = vrot.slane %v639, 1
        %v773 = vsel %vm695, %v771, %v772
        %v774 = vrot.slane %v640, 1
        %v775 = vsel %vm695, %v772, %v774
        %776 = vrot.lane.b32.xlu0 %v698, 16
        %v777 = vpop.permute.xlu0 %776
        %778 = vrot.lane.b32.xlu0 %v700, 16
        %v779 = vpop.permute.xlu0 %778
        %780 = vrot.lane.b32.xlu0 %v703, 16
        %v781 = vpop.permute.xlu0 %780
        %782 = vrot.lane.b32.xlu0 %v705, 16
        %v783 = vpop.permute.xlu0 %782
        %784 = vrot.lane.b32.xlu0 %v708, 16
        %v785 = vpop.permute.xlu0 %784
        %786 = vrot.lane.b32.xlu0 %v710, 16
        %v787 = vpop.permute.xlu0 %786
        %788 = vrot.lane.b32.xlu0 %v713, 16
        %v789 = vpop.permute.xlu0 %788
        %790 = vrot.lane.b32.xlu0 %v715, 16
        %v791 = vpop.permute.xlu0 %790
        %792 = vrot.lane.b32.xlu0 %v718, 16
        %v793 = vpop.permute.xlu0 %792
        %794 = vrot.lane.b32.xlu0 %v720, 16
        %v795 = vpop.permute.xlu0 %794
        %796 = vrot.lane.b32.xlu0 %v723, 16
        %v797 = vpop.permute.xlu0 %796
        %798 = vrot.lane.b32.xlu0 %v725, 16
        %v799 = vpop.permute.xlu0 %798
        %800 = vrot.lane.b32.xlu0 %v728, 16
        %v801 = vpop.permute.xlu0 %800
        %802 = vrot.lane.b32.xlu0 %v730, 16
        %v803 = vpop.permute.xlu0 %802
        %804 = vrot.lane.b32.xlu0 %v733, 16
        %v805 = vpop.permute.xlu0 %804
        %806 = vrot.lane.b32.xlu0 %v735, 16
        %v807 = vpop.permute.xlu0 %806
        %808 = vrot.lane.b32.xlu0 %v738, 16
        %v809 = vpop.permute.xlu0 %808
        %810 = vrot.lane.b32.xlu0 %v740, 16
        %v811 = vpop.permute.xlu0 %810
        %812 = vrot.lane.b32.xlu0 %v743, 16
        %v813 = vpop.permute.xlu0 %812
        %814 = vrot.lane.b32.xlu0 %v745, 16
        %v815 = vpop.permute.xlu0 %814
        %816 = vrot.lane.b32.xlu0 %v748, 16
        %v817 = vpop.permute.xlu0 %816
        %818 = vrot.lane.b32.xlu0 %v750, 16
        %v819 = vpop.permute.xlu0 %818
        %820 = vrot.lane.b32.xlu0 %v753, 16
        %v821 = vpop.permute.xlu0 %820
        %822 = vrot.lane.b32.xlu0 %v755, 16
        %v823 = vpop.permute.xlu0 %822
        %824 = vrot.lane.b32.xlu0 %v758, 16
        %v825 = vpop.permute.xlu0 %824
        %826 = vrot.lane.b32.xlu0 %v760, 16
        %v827 = vpop.permute.xlu0 %826
        %828 = vrot.lane.b32.xlu0 %v763, 16
        %v829 = vpop.permute.xlu0 %828
        %830 = vrot.lane.b32.xlu0 %v765, 16
        %v831 = vpop.permute.xlu0 %830
        %832 = vrot.lane.b32.xlu0 %v768, 16
        %v833 = vpop.permute.xlu0 %832
        %834 = vrot.lane.b32.xlu0 %v770, 16
        %v835 = vpop.permute.xlu0 %834
        %836 = vrot.lane.b32.xlu0 %v773, 16
        %v837 = vpop.permute.xlu0 %836
        %838 = vrot.lane.b32.xlu0 %v775, 16
        %v839 = vpop.permute.xlu0 %838
        %vm872 = vcmask 1045504
        %v873 = vrot.slane %v593, 2
        %v874 = vrot.slane %v594, 2
        %v875 = vsel %vm872, %v873, %v874
        %v876 = vrot.slane %v595, 2
        %v877 = vsel %vm872, %v874, %v876
        %v878 = vrot.slane %v596, 2
        %v879 = vrot.slane %v597, 2
        %v880 = vsel %vm872, %v878, %v879
        %v881 = vrot.slane %v598, 2
        %v882 = vsel %vm872, %v879, %v881
        %v883 = vrot.slane %v599, 2
        %v884 = vrot.slane %v600, 2
        %v885 = vsel %vm872, %v883, %v884
        %v886 = vrot.slane %v601, 2
        %v887 = vsel %vm872, %v884, %v886
        %v888 = vrot.slane %v602, 2
        %v889 = vrot.slane %v603, 2
        %v890 = vsel %vm872, %v888, %v889
        %v891 = vrot.slane %v604, 2
        %v892 = vsel %vm872, %v889, %v891
        %v893 = vrot.slane %v605, 2
        %v894 = vrot.slane %v606, 2
        %v895 = vsel %vm872, %v893, %v894
        %v896 = vrot.slane %v607, 2
        %v897 = vsel %vm872, %v894, %v896
        %v898 = vrot.slane %v608, 2
        %v899 = vrot.slane %v609, 2
        %v900 = vsel %vm872, %v898, %v899
        %v901 = vrot.slane %v610, 2
        %v902 = vsel %vm872, %v899, %v901
        %v903 = vrot.slane %v611, 2
        %v904 = vrot.slane %v612, 2
        %v905 = vsel %vm872, %v903, %v904
        %v906 = vrot.slane %v613, 2
        %v907 = vsel %vm872, %v904, %v906
        %v908 = vrot.slane %v614, 2
        %v909 = vrot.slane %v615, 2
        %v910 = vsel %vm872, %v908, %v909
        %v911 = vrot.slane %v616, 2
        %v912 = vsel %vm872, %v909, %v911
        %v913 = vrot.slane %v617, 2
        %v914 = vrot.slane %v618, 2
        %v915 = vsel %vm872, %v913, %v914
        %v916 = vrot.slane %v619, 2
        %v917 = vsel %vm872, %v914, %v916
        %v918 = vrot.slane %v620, 2
        %v919 = vrot.slane %v621, 2
        %v920 = vsel %vm872, %v918, %v919
        %v921 = vrot.slane %v622, 2
        %v922 = vsel %vm872, %v919, %v921
        %v923 = vrot.slane %v623, 2
        %v924 = vrot.slane %v624, 2
        %v925 = vsel %vm872, %v923, %v924
        %v926 = vrot.slane %v625, 2
        %v927 = vsel %vm872, %v924, %v926
        %v928 = vrot.slane %v626, 2
        %v929 = vrot.slane %v627, 2
        %v930 = vsel %vm872, %v928, %v929
        %v931 = vrot.slane %v628, 2
        %v932 = vsel %vm872, %v929, %v931
        %v933 = vrot.slane %v629, 2
        %v934 = vrot.slane %v630, 2
        %v935 = vsel %vm872, %v933, %v934
        %v936 = vrot.slane %v631, 2
        %v937 = vsel %vm872, %v934, %v936
        %v938 = vrot.slane %v632, 2
        %v939 = vrot.slane %v633, 2
        %v940 = vsel %vm872, %v938, %v939
        %v941 = vrot.slane %v634, 2
        %v942 = vsel %vm872, %v939, %v941
        %v943 = vrot.slane %v635, 2
        %v944 = vrot.slane %v636, 2
        %v945 = vsel %vm872, %v943, %v944
        %v946 = vrot.slane %v637, 2
        %v947 = vsel %vm872, %v944, %v946
        %v948 = vrot.slane %v638, 2
        %v949 = vrot.slane %v639, 2
        %v950 = vsel %vm872, %v948, %v949
        %v951 = vrot.slane %v640, 2
        %v952 = vsel %vm872, %v949, %v951
        %953 = vrot.lane.b32.xlu0 %v875, 32
        %v954 = vpop.permute.xlu0 %953
        %955 = vrot.lane.b32.xlu0 %v877, 32
        %v956 = vpop.permute.xlu0 %955
        %957 = vrot.lane.b32.xlu0 %v880, 32
        %v958 = vpop.permute.xlu0 %957
        %959 = vrot.lane.b32.xlu0 %v882, 32
        %v960 = vpop.permute.xlu0 %959
        %961 = vrot.lane.b32.xlu0 %v885, 32
        %v962 = vpop.permute.xlu0 %961
        %963 = vrot.lane.b32.xlu0 %v887, 32
        %v964 = vpop.permute.xlu0 %963
        %965 = vrot.lane.b32.xlu0 %v890, 32
        %v966 = vpop.permute.xlu0 %965
        %967 = vrot.lane.b32.xlu0 %v892, 32
        %v968 = vpop.permute.xlu0 %967
        %969 = vrot.lane.b32.xlu0 %v895, 32
        %v970 = vpop.permute.xlu0 %969
        %971 = vrot.lane.b32.xlu0 %v897, 32
        %v972 = vpop.permute.xlu0 %971
        %973 = vrot.lane.b32.xlu0 %v900, 32
        %v974 = vpop.permute.xlu0 %973
        %975 = vrot.lane.b32.xlu0 %v902, 32
        %v976 = vpop.permute.xlu0 %975
        %977 = vrot.lane.b32.xlu0 %v905, 32
        %v978 = vpop.permute.xlu0 %977
        %979 = vrot.lane.b32.xlu0 %v907, 32
        %v980 = vpop.permute.xlu0 %979
        %981 = vrot.lane.b32.xlu0 %v910, 32
        %v982 = vpop.permute.xlu0 %981
        %983 = vrot.lane.b32.xlu0 %v912, 32
        %v984 = vpop.permute.xlu0 %983
        %985 = vrot.lane.b32.xlu0 %v915, 32
        %v986 = vpop.permute.xlu0 %985
        %987 = vrot.lane.b32.xlu0 %v917, 32
        %v988 = vpop.permute.xlu0 %987
        %989 = vrot.lane.b32.xlu0 %v920, 32
        %v990 = vpop.permute.xlu0 %989
        %991 = vrot.lane.b32.xlu0 %v922, 32
        %v992 = vpop.permute.xlu0 %991
        %993 = vrot.lane.b32.xlu0 %v925, 32
        %v994 = vpop.permute.xlu0 %993
        %995 = vrot.lane.b32.xlu0 %v927, 32
        %v996 = vpop.permute.xlu0 %995
        %997 = vrot.lane.b32.xlu0 %v930, 32
        %v998 = vpop.permute.xlu0 %997
        %999 = vrot.lane.b32.xlu0 %v932, 32
        %v1000 = vpop.permute.xlu0 %999
        %1001 = vrot.lane.b32.xlu0 %v935, 32
        %v1002 = vpop.permute.xlu0 %1001
        %1003 = vrot.lane.b32.xlu0 %v937, 32
        %v1004 = vpop.permute.xlu0 %1003
        %1005 = vrot.lane.b32.xlu0 %v940, 32
        %v1006 = vpop.permute.xlu0 %1005
        %1007 = vrot.lane.b32.xlu0 %v942, 32
        %v1008 = vpop.permute.xlu0 %1007
        %1009 = vrot.lane.b32.xlu0 %v945, 32
        %v1010 = vpop.permute.xlu0 %1009
        %1011 = vrot.lane.b32.xlu0 %v947, 32
        %v1012 = vpop.permute.xlu0 %1011
        %1013 = vrot.lane.b32.xlu0 %v950, 32
        %v1014 = vpop.permute.xlu0 %1013
        %1015 = vrot.lane.b32.xlu0 %v952, 32
        %v1016 = vpop.permute.xlu0 %1015
        %1051 = vrot.lane.b32.xlu0 %v596, 48
        %v1052 = vpop.permute.xlu0 %1051
        %1053 = vrot.lane.b32.xlu0 %v597, 48
        %v1054 = vpop.permute.xlu0 %1053
        %1055 = vrot.lane.b32.xlu0 %v599, 48
        %v1056 = vpop.permute.xlu0 %1055
        %1057 = vrot.lane.b32.xlu0 %v600, 48
        %v1058 = vpop.permute.xlu0 %1057
        %1059 = vrot.lane.b32.xlu0 %v602, 48
        %v1060 = vpop.permute.xlu0 %1059
        %1061 = vrot.lane.b32.xlu0 %v603, 48
        %v1062 = vpop.permute.xlu0 %1061
        %1063 = vrot.lane.b32.xlu0 %v605, 48
        %v1064 = vpop.permute.xlu0 %1063
        %1065 = vrot.lane.b32.xlu0 %v606, 48
        %v1066 = vpop.permute.xlu0 %1065
        %1067 = vrot.lane.b32.xlu0 %v608, 48
        %v1068 = vpop.permute.xlu0 %1067
        %1069 = vrot.lane.b32.xlu0 %v609, 48
        %v1070 = vpop.permute.xlu0 %1069
        %1071 = vrot.lane.b32.xlu0 %v611, 48
        %v1072 = vpop.permute.xlu0 %1071
        %1073 = vrot.lane.b32.xlu0 %v612, 48
        %v1074 = vpop.permute.xlu0 %1073
        %1075 = vrot.lane.b32.xlu0 %v614, 48
        %v1076 = vpop.permute.xlu0 %1075
        %1077 = vrot.lane.b32.xlu0 %v615, 48
        %v1078 = vpop.permute.xlu0 %1077
        %1079 = vrot.lane.b32.xlu0 %v617, 48
        %v1080 = vpop.permute.xlu0 %1079
        %1081 = vrot.lane.b32.xlu0 %v618, 48
        %v1082 = vpop.permute.xlu0 %1081
        %1083 = vrot.lane.b32.xlu0 %v620, 48
        %v1084 = vpop.permute.xlu0 %1083
        %1085 = vrot.lane.b32.xlu0 %v621, 48
        %v1086 = vpop.permute.xlu0 %1085
        %1087 = vrot.lane.b32.xlu0 %v623, 48
        %v1088 = vpop.permute.xlu0 %1087
        %1089 = vrot.lane.b32.xlu0 %v624, 48
        %v1090 = vpop.permute.xlu0 %1089
        %1091 = vrot.lane.b32.xlu0 %v626, 48
        %v1092 = vpop.permute.xlu0 %1091
        %1093 = vrot.lane.b32.xlu0 %v627, 48
        %v1094 = vpop.permute.xlu0 %1093
        %1095 = vrot.lane.b32.xlu0 %v629, 48
        %v1096 = vpop.permute.xlu0 %1095
        %1097 = vrot.lane.b32.xlu0 %v630, 48
        %v1098 = vpop.permute.xlu0 %1097
        %1099 = vrot.lane.b32.xlu0 %v632, 48
        %v1100 = vpop.permute.xlu0 %1099
        %1101 = vrot.lane.b32.xlu0 %v633, 48
        %v1102 = vpop.permute.xlu0 %1101
        %1103 = vrot.lane.b32.xlu0 %v635, 48
        %v1104 = vpop.permute.xlu0 %1103
        %1105 = vrot.lane.b32.xlu0 %v636, 48
        %v1106 = vpop.permute.xlu0 %1105
        %1107 = vrot.lane.b32.xlu0 %v638, 48
        %v1108 = vpop.permute.xlu0 %1107
        %1109 = vrot.lane.b32.xlu0 %v639, 48
        %v1110 = vpop.permute.xlu0 %1109
        %1111 = vrot.lane.b32.xlu0 %v641, 48
        %v1112 = vpop.permute.xlu0 %1111
        %1113 = vrot.lane.b32.xlu0 %v642, 48
        %v1114 = vpop.permute.xlu0 %1113
        %v1148 = vrot.slane %v641, 1
        %v1149 = vrot.slane %v642, 1
        %v1150 = vsel %vm695, %v1148, %v1149
        %v1151 = vrot.slane %v643, 1
        %v1152 = vsel %vm695, %v1149, %v1151
        %1153 = vrot.lane.b32.xlu0 %v703, 64
        %v1154 = vpop.permute.xlu0 %1153
        %1155 = vrot.lane.b32.xlu0 %v705, 64
        %v1156 = vpop.permute.xlu0 %1155
        %1157 = vrot.lane.b32.xlu0 %v708, 64
        %v1158 = vpop.permute.xlu0 %1157
        %1159 = vrot.lane.b32.xlu0 %v710, 64
        %v1160 = vpop.permute.xlu0 %1159
        %1161 = vrot.lane.b32.xlu0 %v713, 64
        %v1162 = vpop.permute.xlu0 %1161
        %1163 = vrot.lane.b32.xlu0 %v715, 64
        %v1164 = vpop.permute.xlu0 %1163
        %1165 = vrot.lane.b32.xlu0 %v718, 64
        %v1166 = vpop.permute.xlu0 %1165
        %1167 = vrot.lane.b32.xlu0 %v720, 64
        %v1168 = vpop.permute.xlu0 %1167
        %1169 = vrot.lane.b32.xlu0 %v723, 64
        %v1170 = vpop.permute.xlu0 %1169
        %1171 = vrot.lane.b32.xlu0 %v725, 64
        %v1172 = vpop.permute.xlu0 %1171
        %1173 = vrot.lane.b32.xlu0 %v728, 64
        %v1174 = vpop.permute.xlu0 %1173
        %1175 = vrot.lane.b32.xlu0 %v730, 64
        %v1176 = vpop.permute.xlu0 %1175
        %1177 = vrot.lane.b32.xlu0 %v733, 64
        %v1178 = vpop.permute.xlu0 %1177
        %1179 = vrot.lane.b32.xlu0 %v735, 64
        %v1180 = vpop.permute.xlu0 %1179
        %1181 = vrot.lane.b32.xlu0 %v738, 64
        %v1182 = vpop.permute.xlu0 %1181
        %1183 = vrot.lane.b32.xlu0 %v740, 64
        %v1184 = vpop.permute.xlu0 %1183
        %1185 = vrot.lane.b32.xlu0 %v743, 64
        %v1186 = vpop.permute.xlu0 %1185
        %1187 = vrot.lane.b32.xlu0 %v745, 64
        %v1188 = vpop.permute.xlu0 %1187
        %1189 = vrot.lane.b32.xlu0 %v748, 64
        %v1190 = vpop.permute.xlu0 %1189
        %1191 = vrot.lane.b32.xlu0 %v750, 64
        %v1192 = vpop.permute.xlu0 %1191
        %1193 = vrot.lane.b32.xlu0 %v753, 64
        %v1194 = vpop.permute.xlu0 %1193
        %1195 = vrot.lane.b32.xlu0 %v755, 64
        %v1196 = vpop.permute.xlu0 %1195
        %1197 = vrot.lane.b32.xlu0 %v758, 64
        %v1198 = vpop.permute.xlu0 %1197
        %1199 = vrot.lane.b32.xlu0 %v760, 64
        %v1200 = vpop.permute.xlu0 %1199
        %1201 = vrot.lane.b32.xlu0 %v763, 64
        %v1202 = vpop.permute.xlu0 %1201
        %1203 = vrot.lane.b32.xlu0 %v765, 64
        %v1204 = vpop.permute.xlu0 %1203
        %1205 = vrot.lane.b32.xlu0 %v768, 64
        %v1206 = vpop.permute.xlu0 %1205
        %1207 = vrot.lane.b32.xlu0 %v770, 64
        %v1208 = vpop.permute.xlu0 %1207
        %1209 = vrot.lane.b32.xlu0 %v773, 64
        %v1210 = vpop.permute.xlu0 %1209
        %1211 = vrot.lane.b32.xlu0 %v775, 64
        %v1212 = vpop.permute.xlu0 %1211
        %1213 = vrot.lane.b32.xlu0 %v1150, 64
        %v1214 = vpop.permute.xlu0 %1213
        %1215 = vrot.lane.b32.xlu0 %v1152, 64
        %v1216 = vpop.permute.xlu0 %1215
        %v1249 = vrot.slane %v641, 2
        %v1250 = vrot.slane %v642, 2
        %v1251 = vsel %vm872, %v1249, %v1250
        %v1252 = vrot.slane %v643, 2
        %v1253 = vsel %vm872, %v1250, %v1252
        %1254 = vrot.lane.b32.xlu0 %v880, 80
        %v1255 = vpop.permute.xlu0 %1254
        %1256 = vrot.lane.b32.xlu0 %v882, 80
        %v1257 = vpop.permute.xlu0 %1256
        %1258 = vrot.lane.b32.xlu0 %v885, 80
        %v1259 = vpop.permute.xlu0 %1258
        %1260 = vrot.lane.b32.xlu0 %v887, 80
        %v1261 = vpop.permute.xlu0 %1260
        %1262 = vrot.lane.b32.xlu0 %v890, 80
        %v1263 = vpop.permute.xlu0 %1262
        %1264 = vrot.lane.b32.xlu0 %v892, 80
        %v1265 = vpop.permute.xlu0 %1264
        %1266 = vrot.lane.b32.xlu0 %v895, 80
        %v1267 = vpop.permute.xlu0 %1266
        %1268 = vrot.lane.b32.xlu0 %v897, 80
        %v1269 = vpop.permute.xlu0 %1268
        %1270 = vrot.lane.b32.xlu0 %v900, 80
        %v1271 = vpop.permute.xlu0 %1270
        %1272 = vrot.lane.b32.xlu0 %v902, 80
        %v1273 = vpop.permute.xlu0 %1272
        %1274 = vrot.lane.b32.xlu0 %v905, 80
        %v1275 = vpop.permute.xlu0 %1274
        %1276 = vrot.lane.b32.xlu0 %v907, 80
        %v1277 = vpop.permute.xlu0 %1276
        %1278 = vrot.lane.b32.xlu0 %v910, 80
        %v1279 = vpop.permute.xlu0 %1278
        %1280 = vrot.lane.b32.xlu0 %v912, 80
        %v1281 = vpop.permute.xlu0 %1280
        %1282 = vrot.lane.b32.xlu0 %v915, 80
        %v1283 = vpop.permute.xlu0 %1282
        %1284 = vrot.lane.b32.xlu0 %v917, 80
        %v1285 = vpop.permute.xlu0 %1284
        %1286 = vrot.lane.b32.xlu0 %v920, 80
        %v1287 = vpop.permute.xlu0 %1286
        %1288 = vrot.lane.b32.xlu0 %v922, 80
        %v1289 = vpop.permute.xlu0 %1288
        %1290 = vrot.lane.b32.xlu0 %v925, 80
        %v1291 = vpop.permute.xlu0 %1290
        %1292 = vrot.lane.b32.xlu0 %v927, 80
        %v1293 = vpop.permute.xlu0 %1292
        %1294 = vrot.lane.b32.xlu0 %v930, 80
        %v1295 = vpop.permute.xlu0 %1294
        %1296 = vrot.lane.b32.xlu0 %v932, 80
        %v1297 = vpop.permute.xlu0 %1296
        %1298 = vrot.lane.b32.xlu0 %v935, 80
        %v1299 = vpop.permute.xlu0 %1298
        %1300 = vrot.lane.b32.xlu0 %v937, 80
        %v1301 = vpop.permute.xlu0 %1300
        %1302 = vrot.lane.b32.xlu0 %v940, 80
        %v1303 = vpop.permute.xlu0 %1302
        %1304 = vrot.lane.b32.xlu0 %v942, 80
        %v1305 = vpop.permute.xlu0 %1304
        %1306 = vrot.lane.b32.xlu0 %v945, 80
        %v1307 = vpop.permute.xlu0 %1306
        %1308 = vrot.lane.b32.xlu0 %v947, 80
        %v1309 = vpop.permute.xlu0 %1308
        %1310 = vrot.lane.b32.xlu0 %v950, 80
        %v1311 = vpop.permute.xlu0 %1310
        %1312 = vrot.lane.b32.xlu0 %v952, 80
        %v1313 = vpop.permute.xlu0 %1312
        %1314 = vrot.lane.b32.xlu0 %v1251, 80
        %v1315 = vpop.permute.xlu0 %1314
        %1316 = vrot.lane.b32.xlu0 %v1253, 80
        %v1317 = vpop.permute.xlu0 %1316
        %1352 = vrot.lane.b32.xlu0 %v599, 96
        %v1353 = vpop.permute.xlu0 %1352
        %1354 = vrot.lane.b32.xlu0 %v600, 96
        %v1355 = vpop.permute.xlu0 %1354
        %1356 = vrot.lane.b32.xlu0 %v602, 96
        %v1357 = vpop.permute.xlu0 %1356
        %1358 = vrot.lane.b32.xlu0 %v603, 96
        %v1359 = vpop.permute.xlu0 %1358
        %1360 = vrot.lane.b32.xlu0 %v605, 96
        %v1361 = vpop.permute.xlu0 %1360
        %1362 = vrot.lane.b32.xlu0 %v606, 96
        %v1363 = vpop.permute.xlu0 %1362
        %1364 = vrot.lane.b32.xlu0 %v608, 96
        %v1365 = vpop.permute.xlu0 %1364
        %1366 = vrot.lane.b32.xlu0 %v609, 96
        %v1367 = vpop.permute.xlu0 %1366
        %1368 = vrot.lane.b32.xlu0 %v611, 96
        %v1369 = vpop.permute.xlu0 %1368
        %1370 = vrot.lane.b32.xlu0 %v612, 96
        %v1371 = vpop.permute.xlu0 %1370
        %1372 = vrot.lane.b32.xlu0 %v614, 96
        %v1373 = vpop.permute.xlu0 %1372
        %1374 = vrot.lane.b32.xlu0 %v615, 96
        %v1375 = vpop.permute.xlu0 %1374
        %1376 = vrot.lane.b32.xlu0 %v617, 96
        %v1377 = vpop.permute.xlu0 %1376
        %1378 = vrot.lane.b32.xlu0 %v618, 96
        %v1379 = vpop.permute.xlu0 %1378
        %1380 = vrot.lane.b32.xlu0 %v620, 96
        %v1381 = vpop.permute.xlu0 %1380
        %1382 = vrot.lane.b32.xlu0 %v621, 96
        %v1383 = vpop.permute.xlu0 %1382
        %1384 = vrot.lane.b32.xlu0 %v623, 96
        %v1385 = vpop.permute.xlu0 %1384
        %1386 = vrot.lane.b32.xlu0 %v624, 96
        %v1387 = vpop.permute.xlu0 %1386
        %1388 = vrot.lane.b32.xlu0 %v626, 96
        %v1389 = vpop.permute.xlu0 %1388
        %1390 = vrot.lane.b32.xlu0 %v627, 96
        %v1391 = vpop.permute.xlu0 %1390
        %1392 = vrot.lane.b32.xlu0 %v629, 96
        %v1393 = vpop.permute.xlu0 %1392
        %1394 = vrot.lane.b32.xlu0 %v630, 96
        %v1395 = vpop.permute.xlu0 %1394
        %1396 = vrot.lane.b32.xlu0 %v632, 96
        %v1397 = vpop.permute.xlu0 %1396
        %1398 = vrot.lane.b32.xlu0 %v633, 96
        %v1399 = vpop.permute.xlu0 %1398
        %1400 = vrot.lane.b32.xlu0 %v635, 96
        %v1401 = vpop.permute.xlu0 %1400
        %1402 = vrot.lane.b32.xlu0 %v636, 96
        %v1403 = vpop.permute.xlu0 %1402
        %1404 = vrot.lane.b32.xlu0 %v638, 96
        %v1405 = vpop.permute.xlu0 %1404
        %1406 = vrot.lane.b32.xlu0 %v639, 96
        %v1407 = vpop.permute.xlu0 %1406
        %1408 = vrot.lane.b32.xlu0 %v641, 96
        %v1409 = vpop.permute.xlu0 %1408
        %1410 = vrot.lane.b32.xlu0 %v642, 96
        %v1411 = vpop.permute.xlu0 %1410
        %1412 = vrot.lane.b32.xlu0 %v644, 96
        %v1413 = vpop.permute.xlu0 %1412
        %1414 = vrot.lane.b32.xlu0 %v645, 96
        %v1415 = vpop.permute.xlu0 %1414
        %v1449 = vrot.slane %v644, 1
        %v1450 = vrot.slane %v645, 1
        %v1451 = vsel %vm695, %v1449, %v1450
        %v1452 = vrot.slane %v646, 1
        %v1453 = vsel %vm695, %v1450, %v1452
        %1454 = vrot.lane.b32.xlu0 %v708, 112
        %v1455 = vpop.permute.xlu0 %1454
        %1456 = vrot.lane.b32.xlu0 %v710, 112
        %v1457 = vpop.permute.xlu0 %1456
        %1458 = vrot.lane.b32.xlu0 %v713, 112
        %v1459 = vpop.permute.xlu0 %1458
        %1460 = vrot.lane.b32.xlu0 %v715, 112
        %v1461 = vpop.permute.xlu0 %1460
        %1462 = vrot.lane.b32.xlu0 %v718, 112
        %v1463 = vpop.permute.xlu0 %1462
        %1464 = vrot.lane.b32.xlu0 %v720, 112
        %v1465 = vpop.permute.xlu0 %1464
        %1466 = vrot.lane.b32.xlu0 %v723, 112
        %v1467 = vpop.permute.xlu0 %1466
        %1468 = vrot.lane.b32.xlu0 %v725, 112
        %v1469 = vpop.permute.xlu0 %1468
        %1470 = vrot.lane.b32.xlu0 %v728, 112
        %v1471 = vpop.permute.xlu0 %1470
        %1472 = vrot.lane.b32.xlu0 %v730, 112
        %v1473 = vpop.permute.xlu0 %1472
        %1474 = vrot.lane.b32.xlu0 %v733, 112
        %v1475 = vpop.permute.xlu0 %1474
        %1476 = vrot.lane.b32.xlu0 %v735, 112
        %v1477 = vpop.permute.xlu0 %1476
        %1478 = vrot.lane.b32.xlu0 %v738, 112
        %v1479 = vpop.permute.xlu0 %1478
        %1480 = vrot.lane.b32.xlu0 %v740, 112
        %v1481 = vpop.permute.xlu0 %1480
        %1482 = vrot.lane.b32.xlu0 %v743, 112
        %v1483 = vpop.permute.xlu0 %1482
        %1484 = vrot.lane.b32.xlu0 %v745, 112
        %v1485 = vpop.permute.xlu0 %1484
        %1486 = vrot.lane.b32.xlu0 %v748, 112
        %v1487 = vpop.permute.xlu0 %1486
        %1488 = vrot.lane.b32.xlu0 %v750, 112
        %v1489 = vpop.permute.xlu0 %1488
        %1490 = vrot.lane.b32.xlu0 %v753, 112
        %v1491 = vpop.permute.xlu0 %1490
        %1492 = vrot.lane.b32.xlu0 %v755, 112
        %v1493 = vpop.permute.xlu0 %1492
        %1494 = vrot.lane.b32.xlu0 %v758, 112
        %v1495 = vpop.permute.xlu0 %1494
        %1496 = vrot.lane.b32.xlu0 %v760, 112
        %v1497 = vpop.permute.xlu0 %1496
        %1498 = vrot.lane.b32.xlu0 %v763, 112
        %v1499 = vpop.permute.xlu0 %1498
        %1500 = vrot.lane.b32.xlu0 %v765, 112
        %v1501 = vpop.permute.xlu0 %1500
        %1502 = vrot.lane.b32.xlu0 %v768, 112
        %v1503 = vpop.permute.xlu0 %1502
        %1504 = vrot.lane.b32.xlu0 %v770, 112
        %v1505 = vpop.permute.xlu0 %1504
        %1506 = vrot.lane.b32.xlu0 %v773, 112
        %v1507 = vpop.permute.xlu0 %1506
        %1508 = vrot.lane.b32.xlu0 %v775, 112
        %v1509 = vpop.permute.xlu0 %1508
        %1510 = vrot.lane.b32.xlu0 %v1150, 112
        %v1511 = vpop.permute.xlu0 %1510
        %1512 = vrot.lane.b32.xlu0 %v1152, 112
        %v1513 = vpop.permute.xlu0 %1512
        %1514 = vrot.lane.b32.xlu0 %v1451, 112
        %v1515 = vpop.permute.xlu0 %1514
        %1516 = vrot.lane.b32.xlu0 %v1453, 112
        %v1517 = vpop.permute.xlu0 %1516
        %v1550 = vrot.slane %v644, 2
        %v1551 = vrot.slane %v645, 2
        %v1552 = vsel %vm872, %v1550, %v1551
        %v1553 = vrot.slane %v646, 2
        %v1554 = vsel %vm872, %v1551, %v1553
        %v1555 = vsel %vm472, %v593, %v777
        %v1556 = vsel %vm472, %v594, %v779
        %v1557 = vsel %vm472, %v596, %v781
        %v1558 = vsel %vm472, %v597, %v783
        %v1559 = vsel %vm472, %v599, %v785
        %v1560 = vsel %vm472, %v600, %v787
        %v1561 = vsel %vm472, %v602, %v789
        %v1562 = vsel %vm472, %v603, %v791
        %v1563 = vsel %vm472, %v605, %v793
        %v1564 = vsel %vm472, %v606, %v795
        %v1565 = vsel %vm472, %v608, %v797
        %v1566 = vsel %vm472, %v609, %v799
        %v1567 = vsel %vm472, %v611, %v801
        %v1568 = vsel %vm472, %v612, %v803
        %v1569 = vsel %vm472, %v614, %v805
        %v1570 = vsel %vm472, %v615, %v807
        %v1571 = vsel %vm472, %v617, %v809
        %v1572 = vsel %vm472, %v618, %v811
        %v1573 = vsel %vm472, %v620, %v813
        %v1574 = vsel %vm472, %v621, %v815
        %v1575 = vsel %vm472, %v623, %v817
        %v1576 = vsel %vm472, %v624, %v819
        %v1577 = vsel %vm472, %v626, %v821
        %v1578 = vsel %vm472, %v627, %v823
        %v1579 = vsel %vm472, %v629, %v825
        %v1580 = vsel %vm472, %v630, %v827
        %v1581 = vsel %vm472, %v632, %v829
        %v1582 = vsel %vm472, %v633, %v831
        %v1583 = vsel %vm472, %v635, %v833
        %v1584 = vsel %vm472, %v636, %v835
        %v1585 = vsel %vm472, %v638, %v837
        %v1586 = vsel %vm472, %v639, %v839
        %v1587 = vsel %vm398, %v1555, %v954
        %v1588 = vsel %vm398, %v1556, %v956
        %v1589 = vsel %vm398, %v1557, %v958
        %v1590 = vsel %vm398, %v1558, %v960
        %v1591 = vsel %vm398, %v1559, %v962
        %v1592 = vsel %vm398, %v1560, %v964
        %v1593 = vsel %vm398, %v1561, %v966
        %v1594 = vsel %vm398, %v1562, %v968
        %v1595 = vsel %vm398, %v1563, %v970
        %v1596 = vsel %vm398, %v1564, %v972
        %v1597 = vsel %vm398, %v1565, %v974
        %v1598 = vsel %vm398, %v1566, %v976
        %v1599 = vsel %vm398, %v1567, %v978
        %v1600 = vsel %vm398, %v1568, %v980
        %v1601 = vsel %vm398, %v1569, %v982
        %v1602 = vsel %vm398, %v1570, %v984
        %v1603 = vsel %vm398, %v1571, %v986
        %v1604 = vsel %vm398, %v1572, %v988
        %v1605 = vsel %vm398, %v1573, %v990
        %v1606 = vsel %vm398, %v1574, %v992
        %v1607 = vsel %vm398, %v1575, %v994
        %v1608 = vsel %vm398, %v1576, %v996
        %v1609 = vsel %vm398, %v1577, %v998
        %v1610 = vsel %vm398, %v1578, %v1000
        %v1611 = vsel %vm398, %v1579, %v1002
        %v1612 = vsel %vm398, %v1580, %v1004
        %v1613 = vsel %vm398, %v1581, %v1006
        %v1614 = vsel %vm398, %v1582, %v1008
        %v1615 = vsel %vm398, %v1583, %v1010
        %v1616 = vsel %vm398, %v1584, %v1012
        %v1617 = vsel %vm398, %v1585, %v1014
        %v1618 = vsel %vm398, %v1586, %v1016
        %vm1619 = vcmask 392192
        %v1620 = vsel %vm1619, %v1587, %v1052
        %v1621 = vsel %vm1619, %v1588, %v1054
        %v1622 = vsel %vm1619, %v1589, %v1056
        %v1623 = vsel %vm1619, %v1590, %v1058
        %v1624 = vsel %vm1619, %v1591, %v1060
        %v1625 = vsel %vm1619, %v1592, %v1062
        %v1626 = vsel %vm1619, %v1593, %v1064
        %v1627 = vsel %vm1619, %v1594, %v1066
        %v1628 = vsel %vm1619, %v1595, %v1068
        %v1629 = vsel %vm1619, %v1596, %v1070
        %v1630 = vsel %vm1619, %v1597, %v1072
        %v1631 = vsel %vm1619, %v1598, %v1074
        %v1632 = vsel %vm1619, %v1599, %v1076
        %v1633 = vsel %vm1619, %v1600, %v1078
        %v1634 = vsel %vm1619, %v1601, %v1080
        %v1635 = vsel %vm1619, %v1602, %v1082
        %v1636 = vsel %vm1619, %v1603, %v1084
        %v1637 = vsel %vm1619, %v1604, %v1086
        %v1638 = vsel %vm1619, %v1605, %v1088
        %v1639 = vsel %vm1619, %v1606, %v1090
        %v1640 = vsel %vm1619, %v1607, %v1092
        %v1641 = vsel %vm1619, %v1608, %v1094
        %v1642 = vsel %vm1619, %v1609, %v1096
        %v1643 = vsel %vm1619, %v1610, %v1098
        %v1644 = vsel %vm1619, %v1611, %v1100
        %v1645 = vsel %vm1619, %v1612, %v1102
        %v1646 = vsel %vm1619, %v1613, %v1104
        %v1647 = vsel %vm1619, %v1614, %v1106
        %v1648 = vsel %vm1619, %v1615, %v1108
        %v1649 = vsel %vm1619, %v1616, %v1110
        %v1650 = vsel %vm1619, %v1617, %v1112
        %v1651 = vsel %vm1619, %v1618, %v1114
        %vm1652 = vcmask 523264
        %v1653 = vsel %vm1652, %v1620, %v1154
        %v1654 = vsel %vm1652, %v1621, %v1156
        %v1655 = vsel %vm1652, %v1622, %v1158
        %v1656 = vsel %vm1652, %v1623, %v1160
        %v1657 = vsel %vm1652, %v1624, %v1162
        %v1658 = vsel %vm1652, %v1625, %v1164
        %v1659 = vsel %vm1652, %v1626, %v1166
        %v1660 = vsel %vm1652, %v1627, %v1168
        %v1661 = vsel %vm1652, %v1628, %v1170
        %v1662 = vsel %vm1652, %v1629, %v1172
        %v1663 = vsel %vm1652, %v1630, %v1174
        %v1664 = vsel %vm1652, %v1631, %v1176
        %v1665 = vsel %vm1652, %v1632, %v1178
        %v1666 = vsel %vm1652, %v1633, %v1180
        %v1667 = vsel %vm1652, %v1634, %v1182
        %v1668 = vsel %vm1652, %v1635, %v1184
        %v1669 = vsel %vm1652, %v1636, %v1186
        %v1670 = vsel %vm1652, %v1637, %v1188
        %v1671 = vsel %vm1652, %v1638, %v1190
        %v1672 = vsel %vm1652, %v1639, %v1192
        %v1673 = vsel %vm1652, %v1640, %v1194
        %v1674 = vsel %vm1652, %v1641, %v1196
        %v1675 = vsel %vm1652, %v1642, %v1198
        %v1676 = vsel %vm1652, %v1643, %v1200
        %v1677 = vsel %vm1652, %v1644, %v1202
        %v1678 = vsel %vm1652, %v1645, %v1204
        %v1679 = vsel %vm1652, %v1646, %v1206
        %v1680 = vsel %vm1652, %v1647, %v1208
        %v1681 = vsel %vm1652, %v1648, %v1210
        %v1682 = vsel %vm1652, %v1649, %v1212
        %v1683 = vsel %vm1652, %v1650, %v1214
        %v1684 = vsel %vm1652, %v1651, %v1216
        %vm1685 = vcmask 654336
        %v1686 = vsel %vm1685, %v1653, %v1255
        %v1687 = vsel %vm1685, %v1654, %v1257
        %v1688 = vsel %vm1685, %v1655, %v1259
        %v1689 = vsel %vm1685, %v1656, %v1261
        %v1690 = vsel %vm1685, %v1657, %v1263
        %v1691 = vsel %vm1685, %v1658, %v1265
        %v1692 = vsel %vm1685, %v1659, %v1267
        %v1693 = vsel %vm1685, %v1660, %v1269
        %v1694 = vsel %vm1685, %v1661, %v1271
        %v1695 = vsel %vm1685, %v1662, %v1273
        %v1696 = vsel %vm1685, %v1663, %v1275
        %v1697 = vsel %vm1685, %v1664, %v1277
        %v1698 = vsel %vm1685, %v1665, %v1279
        %v1699 = vsel %vm1685, %v1666, %v1281
        %v1700 = vsel %vm1685, %v1667, %v1283
        %v1701 = vsel %vm1685, %v1668, %v1285
        %v1702 = vsel %vm1685, %v1669, %v1287
        %v1703 = vsel %vm1685, %v1670, %v1289
        %v1704 = vsel %vm1685, %v1671, %v1291
        %v1705 = vsel %vm1685, %v1672, %v1293
        %v1706 = vsel %vm1685, %v1673, %v1295
        %v1707 = vsel %vm1685, %v1674, %v1297
        %v1708 = vsel %vm1685, %v1675, %v1299
        %v1709 = vsel %vm1685, %v1676, %v1301
        %v1710 = vsel %vm1685, %v1677, %v1303
        %v1711 = vsel %vm1685, %v1678, %v1305
        %v1712 = vsel %vm1685, %v1679, %v1307
        %v1713 = vsel %vm1685, %v1680, %v1309
        %v1714 = vsel %vm1685, %v1681, %v1311
        %v1715 = vsel %vm1685, %v1682, %v1313
        %v1716 = vsel %vm1685, %v1683, %v1315
        %v1717 = vsel %vm1685, %v1684, %v1317
        %vm1718 = vcmask 785408
        %v1719 = vsel %vm1718, %v1686, %v1353
        %v1720 = vsel %vm1718, %v1687, %v1355
        %v1721 = vsel %vm1718, %v1688, %v1357
        %v1722 = vsel %vm1718, %v1689, %v1359
        %v1723 = vsel %vm1718, %v1690, %v1361
        %v1724 = vsel %vm1718, %v1691, %v1363
        %v1725 = vsel %vm1718, %v1692, %v1365
        %v1726 = vsel %vm1718, %v1693, %v1367
        %v1727 = vsel %vm1718, %v1694, %v1369
        %v1728 = vsel %vm1718, %v1695, %v1371
        %v1729 = vsel %vm1718, %v1696, %v1373
        %v1730 = vsel %vm1718, %v1697, %v1375
        %v1731 = vsel %vm1718, %v1698, %v1377
        %v1732 = vsel %vm1718, %v1699, %v1379
        %v1733 = vsel %vm1718, %v1700, %v1381
        %v1734 = vsel %vm1718, %v1701, %v1383
        %v1735 = vsel %vm1718, %v1702, %v1385
        %v1736 = vsel %vm1718, %v1703, %v1387
        %v1737 = vsel %vm1718, %v1704, %v1389
        %v1738 = vsel %vm1718, %v1705, %v1391
        %v1739 = vsel %vm1718, %v1706, %v1393
        %v1740 = vsel %vm1718, %v1707, %v1395
        %v1741 = vsel %vm1718, %v1708, %v1397
        %v1742 = vsel %vm1718, %v1709, %v1399
        %v1743 = vsel %vm1718, %v1710, %v1401
        %v1744 = vsel %vm1718, %v1711, %v1403
        %v1745 = vsel %vm1718, %v1712, %v1405
        %v1746 = vsel %vm1718, %v1713, %v1407
        %v1747 = vsel %vm1718, %v1714, %v1409
        %v1748 = vsel %vm1718, %v1715, %v1411
        %v1749 = vsel %vm1718, %v1716, %v1413
        %v1750 = vsel %vm1718, %v1717, %v1415
        %vm1751 = vcmask 916480
        %v1752 = vsel %vm1751, %v1719, %v1455
        %v1753 = vsel %vm1751, %v1720, %v1457
        %v1754 = vsel %vm1751, %v1721, %v1459
        %v1755 = vsel %vm1751, %v1722, %v1461
        %v1756 = vsel %vm1751, %v1723, %v1463
        %v1757 = vsel %vm1751, %v1724, %v1465
        %v1758 = vsel %vm1751, %v1725, %v1467
        %v1759 = vsel %vm1751, %v1726, %v1469
        %v1760 = vsel %vm1751, %v1727, %v1471
        %v1761 = vsel %vm1751, %v1728, %v1473
        %v1762 = vsel %vm1751, %v1729, %v1475
        %v1763 = vsel %vm1751, %v1730, %v1477
        %v1764 = vsel %vm1751, %v1731, %v1479
        %v1765 = vsel %vm1751, %v1732, %v1481
        %v1766 = vsel %vm1751, %v1733, %v1483
        %v1767 = vsel %vm1751, %v1734, %v1485
        %v1768 = vsel %vm1751, %v1735, %v1487
        %v1769 = vsel %vm1751, %v1736, %v1489
        %v1770 = vsel %vm1751, %v1737, %v1491
        %v1771 = vsel %vm1751, %v1738, %v1493
        %v1772 = vsel %vm1751, %v1739, %v1495
        %v1773 = vsel %vm1751, %v1740, %v1497
        %v1774 = vsel %vm1751, %v1741, %v1499
        %v1775 = vsel %vm1751, %v1742, %v1501
        %v1776 = vsel %vm1751, %v1743, %v1503
        %v1777 = vsel %vm1751, %v1744, %v1505
        %v1778 = vsel %vm1751, %v1745, %v1507
        %v1779 = vsel %vm1751, %v1746, %v1509
        %v1780 = vsel %vm1751, %v1747, %v1511
        %v1781 = vsel %vm1751, %v1748, %v1513
        %v1782 = vsel %vm1751, %v1749, %v1515
        %v1783 = vsel %vm1751, %v1750, %v1517
        %v1784 = vld [vmem:[%s1] sm:$0xff]
        %v1785 = vld [vmem:[%s1 + $0x8] sm:$0xff]
        %v1786 = vld [vmem:[%s1 + $0x10] sm:$0xff]
        %v1787 = vld [vmem:[%s1 + $0x18] sm:$0xff]
        %v1788 = vld [vmem:[%s1 + $0x20] sm:$0xff]
        %v1789 = vld [vmem:[%s1 + $0x28] sm:$0xff]
        %v1790 = vld [vmem:[%s1 + $0x30] sm:$0xff]
        %v1791 = vld [vmem:[%s1 + $0x38] sm:$0xff]
        %v1792 = vld [vmem:[%s1 + $0x40] sm:$0xff]
        %v1793 = vld [vmem:[%s1 + $0x48] sm:$0xff]
        %v1794 = vld [vmem:[%s1 + $0x50] sm:$0xff]
        %v1795 = vld [vmem:[%s1 + $0x58] sm:$0xff]
        %v1796 = vld [vmem:[%s1 + $0x60] sm:$0xff]
        %v1797 = vld [vmem:[%s1 + $0x68] sm:$0xff]
        %v1798 = vld [vmem:[%s1 + $0x70] sm:$0xff]
        %v1799 = vld [vmem:[%s1 + $0x78] sm:$0xff]
        %v1800 = vld [vmem:[%s1 + $0x80] sm:$0xff]
        %v1801 = vld [vmem:[%s1 + $0x88] sm:$0xff]
        %v1802 = vld [vmem:[%s2] sm:$0x1]
        %v1804 = vlaneseq
        %v1805 = vshrl.u32 %v1804, 7
        %v1806 = vsub.s32 0, %v1805
        %v1807 = vrot.slane %v1802, %v1806
        %v1809 = vsel %vm472, %v885, 0
        %v1811 = vsel %vm472, %v887, 0
        %v1813 = vsel %vm472, %v890, 0
        %v1815 = vsel %vm472, %v892, 0
        %v1817 = vsel %vm472, %v895, 0
        %v1819 = vsel %vm472, %v897, 0
        %v1821 = vsel %vm472, %v900, 0
        %v1823 = vsel %vm472, %v902, 0
        %v1825 = vsel %vm472, %v905, 0
        %v1827 = vsel %vm472, %v907, 0
        %v1829 = vsel %vm472, %v910, 0
        %v1831 = vsel %vm472, %v912, 0
        %v1833 = vsel %vm472, %v915, 0
        %v1835 = vsel %vm472, %v917, 0
        %v1837 = vsel %vm472, %v920, 0
        %v1839 = vsel %vm472, %v922, 0
        %v1841 = vsel %vm472, %v925, 0
        %v1843 = vsel %vm472, %v927, 0
        %v1845 = vsel %vm472, %v930, 0
        %v1847 = vsel %vm472, %v932, 0
        %v1849 = vsel %vm472, %v935, 0
        %v1851 = vsel %vm472, %v937, 0
        %v1853 = vsel %vm472, %v940, 0
        %v1855 = vsel %vm472, %v942, 0
        %v1857 = vsel %vm472, %v945, 0
        %v1859 = vsel %vm472, %v947, 0
        %v1861 = vsel %vm472, %v950, 0
        %v1863 = vsel %vm472, %v952, 0
        %v1865 = vsel %vm472, %v1251, 0
        %v1867 = vsel %vm472, %v1253, 0
        %v1869 = vsel %vm472, %v1552, 0
        %v1871 = vsel %vm472, %v1554, 0
        %1873 = vmatprep.subr.mxu0 0.0
        %1874 = vmatpush1.msra.mxu0 %v1799
        %1875 = vmatprep.subr.mxu0 0.0
        %1876 = vmatpush1.msra.mxu0 %v1798
        %1877 = vmatprep.subr.mxu0 0.0
        %1878 = vmatpush1.msra.mxu0 %v1797
        %1879 = vmatprep.subr.mxu0 0.0
        %1880 = vmatpush1.msra.mxu0 %v1796
        %1881 = vmatprep.subr.mxu0 0.0
        %1882 = vmatpush1.msra.mxu0 %v1795
        %1883 = vmatprep.subr.mxu0 0.0
        %1884 = vmatpush1.msra.mxu0 %v1794
        %1885 = vmatprep.subr.mxu0 0.0
        %1886 = vmatpush1.msra.mxu0 %v1793
        %1887 = vmatprep.subr.mxu0 0.0
        %1888 = vmatpush1.msra.mxu0 %v1792
        %1889 = vmatprep.subr.mxu0 0.0
        %1890 = vmatpush1.msra.mxu0 %v1791
        %1891 = vmatprep.subr.mxu0 0.0
        %1892 = vmatpush1.msra.mxu0 %v1790
        %1893 = vmatprep.subr.mxu0 0.0
        %1894 = vmatpush1.msra.mxu0 %v1789
        %1895 = vmatprep.subr.mxu0 0.0
        %1896 = vmatpush1.msra.mxu0 %v1788
        %1897 = vmatprep.subr.mxu0 0.0
        %1898 = vmatpush1.msra.mxu0 %v1787
        %1899 = vmatprep.subr.mxu0 0.0
        %1900 = vmatpush1.msra.mxu0 %v1786
        %1901 = vmatprep.subr.mxu0 0.0
        %1902 = vmatpush1.msra.mxu0 %v1785
        %1903 = vmatprep.subr.mxu0 0.0
        %1904 = vmatpush1.msra.mxu0 %v1784
        %1905 = vmatprep.subr.mxu0 0.0
        %1906 = vmatpush2.msra.mxu0 0.0
        %1907 = vmatprep.subr.mxu0 0.0
        %1908 = vmatpush2.msra.mxu0 0.0
        %1909 = vmatprep.subr.mxu0 0.0
        %1910 = vmatpush2.msra.mxu0 0.0
        %1911 = vmatprep.subr.mxu0 0.0
        %1912 = vmatpush2.msra.mxu0 0.0
        %1913 = vmatprep.subr.mxu0 0.0
        %1914 = vmatpush2.msra.mxu0 0.0
        %1915 = vmatprep.subr.mxu0 0.0
        %1916 = vmatpush2.msra.mxu0 0.0
        %1917 = vmatprep.subr.mxu0 0.0
        %1918 = vmatpush2.msra.mxu0 0.0
        %1919 = vmatprep.subr.mxu0 0.0
        %1920 = vmatpush2.msra.mxu0 0.0
        %1921 = vmatprep.subr.mxu0 0.0
        %1922 = vmatpush2.msra.mxu0 0.0
        %1923 = vmatprep.subr.mxu0 0.0
        %1924 = vmatpush2.msra.mxu0 0.0
        %1925 = vmatprep.subr.mxu0 0.0
        %1926 = vmatpush2.msra.mxu0 0.0
        %1927 = vmatprep.subr.mxu0 0.0
        %1928 = vmatpush2.msra.mxu0 0.0
        %1929 = vmatprep.subr.mxu0 0.0
        %1930 = vmatpush2.msra.mxu0 0.0
        %1931 = vmatprep.subr.mxu0 0.0
        %1932 = vmatpush2.msra.mxu0 0.0
        %1933 = vmatprep.subr.mxu0 0.0
        %1934 = vmatpush2.msra.mxu0 %v1801
        %1935 = vmatprep.subr.mxu0 0.0
        %1936 = vmatpush2.msra.mxu0 %v1800
        %1937 = vmatprep.mubr.f32.mxu0 %v1809
        %1938 = vmatmul.mubr.f32.gmra.mxu0 %v1752
        %v1939 = vpop.f32.mrf.mxu0
        %v1940 = vadd.f32 %v1807, %v1939
        %v1941 = vpop.f32.mrf.mxu0
        %1942 = vmatprep.mubr.f32.mxu0 %v1811
        %1943 = vmatmul.mubr.f32.gmra.mxu0 %v1753
        %v1944 = vpop.f32.mrf.mxu0
        %v1945 = vadd.f32 %v1807, %v1944
        %v1946 = vpop.f32.mrf.mxu0
        %1947 = vmatprep.mubr.f32.mxu0 %v1813
        %1948 = vmatmul.mubr.f32.gmra.mxu0 %v1754
        %v1949 = vpop.f32.mrf.mxu0
        %v1950 = vadd.f32 %v1807, %v1949
        %v1951 = vpop.f32.mrf.mxu0
        %1952 = vmatprep.mubr.f32.mxu0 %v1815
        %1953 = vmatmul.mubr.f32.gmra.mxu0 %v1755
        %v1954 = vpop.f32.mrf.mxu0
        %v1955 = vadd.f32 %v1807, %v1954
        %v1956 = vpop.f32.mrf.mxu0
        %1957 = vmatprep.mubr.f32.mxu0 %v1817
        %1958 = vmatmul.mubr.f32.gmra.mxu0 %v1756
        %v1959 = vpop.f32.mrf.mxu0
        %v1960 = vadd.f32 %v1807, %v1959
        %v1961 = vpop.f32.mrf.mxu0
        %1962 = vmatprep.mubr.f32.mxu0 %v1819
        %1963 = vmatmul.mubr.f32.gmra.mxu0 %v1757
        %v1964 = vpop.f32.mrf.mxu0
        %v1965 = vadd.f32 %v1807, %v1964
        %v1966 = vpop.f32.mrf.mxu0
        %1967 = vmatprep.mubr.f32.mxu0 %v1821
        %1968 = vmatmul.mubr.f32.gmra.mxu0 %v1758
        %v1969 = vpop.f32.mrf.mxu0
        %v1970 = vadd.f32 %v1807, %v1969
        %v1971 = vpop.f32.mrf.mxu0
        %1972 = vmatprep.mubr.f32.mxu0 %v1823
        %1973 = vmatmul.mubr.f32.gmra.mxu0 %v1759
        %v1974 = vpop.f32.mrf.mxu0
        %v1975 = vadd.f32 %v1807, %v1974
        %v1976 = vpop.f32.mrf.mxu0
        %1977 = vmatprep.mubr.f32.mxu0 %v1825
        %1978 = vmatmul.mubr.f32.gmra.mxu0 %v1760
        %v1979 = vpop.f32.mrf.mxu0
        %v1980 = vadd.f32 %v1807, %v1979
        %v1981 = vpop.f32.mrf.mxu0
        %1982 = vmatprep.mubr.f32.mxu0 %v1827
        %1983 = vmatmul.mubr.f32.gmra.mxu0 %v1761
        %v1984 = vpop.f32.mrf.mxu0
        %v1985 = vadd.f32 %v1807, %v1984
        %v1986 = vpop.f32.mrf.mxu0
        %1987 = vmatprep.mubr.f32.mxu0 %v1829
        %1988 = vmatmul.mubr.f32.gmra.mxu0 %v1762
        %v1989 = vpop.f32.mrf.mxu0
        %v1990 = vadd.f32 %v1807, %v1989
        %v1991 = vpop.f32.mrf.mxu0
        %1992 = vmatprep.mubr.f32.mxu0 %v1831
        %1993 = vmatmul.mubr.f32.gmra.mxu0 %v1763
        %v1994 = vpop.f32.mrf.mxu0
        %v1995 = vadd.f32 %v1807, %v1994
        %v1996 = vpop.f32.mrf.mxu0
        %1997 = vmatprep.mubr.f32.mxu0 %v1833
        %1998 = vmatmul.mubr.f32.gmra.mxu0 %v1764
        %v1999 = vpop.f32.mrf.mxu0
        %v2000 = vadd.f32 %v1807, %v1999
        %v2001 = vpop.f32.mrf.mxu0
        %2002 = vmatprep.mubr.f32.mxu0 %v1835
        %2003 = vmatmul.mubr.f32.gmra.mxu0 %v1765
        %v2004 = vpop.f32.mrf.mxu0
        %v2005 = vadd.f32 %v1807, %v2004
        %v2006 = vpop.f32.mrf.mxu0
        %2007 = vmatprep.mubr.f32.mxu0 %v1837
        %2008 = vmatmul.mubr.f32.gmra.mxu0 %v1766
        %v2009 = vpop.f32.mrf.mxu0
        %v2010 = vadd.f32 %v1807, %v2009
        %v2011 = vpop.f32.mrf.mxu0
        %2012 = vmatprep.mubr.f32.mxu0 %v1839
        %2013 = vmatmul.mubr.f32.gmra.mxu0 %v1767
        %v2014 = vpop.f32.mrf.mxu0
        %v2015 = vadd.f32 %v1807, %v2014
        %v2016 = vpop.f32.mrf.mxu0
        %2017 = vmatprep.mubr.f32.mxu0 %v1841
        %2018 = vmatmul.mubr.f32.gmra.mxu0 %v1768
        %v2019 = vpop.f32.mrf.mxu0
        %v2020 = vadd.f32 %v1807, %v2019
        %v2021 = vpop.f32.mrf.mxu0
        %2022 = vmatprep.mubr.f32.mxu0 %v1843
        %2023 = vmatmul.mubr.f32.gmra.mxu0 %v1769
        %v2024 = vpop.f32.mrf.mxu0
        %v2025 = vadd.f32 %v1807, %v2024
        %v2026 = vpop.f32.mrf.mxu0
        %2027 = vmatprep.mubr.f32.mxu0 %v1845
        %2028 = vmatmul.mubr.f32.gmra.mxu0 %v1770
        %v2029 = vpop.f32.mrf.mxu0
        %v2030 = vadd.f32 %v1807, %v2029
        %v2031 = vpop.f32.mrf.mxu0
        %2032 = vmatprep.mubr.f32.mxu0 %v1847
        %2033 = vmatmul.mubr.f32.gmra.mxu0 %v1771
        %v2034 = vpop.f32.mrf.mxu0
        %v2035 = vadd.f32 %v1807, %v2034
        %v2036 = vpop.f32.mrf.mxu0
        %2037 = vmatprep.mubr.f32.mxu0 %v1849
        %2038 = vmatmul.mubr.f32.gmra.mxu0 %v1772
        %v2039 = vpop.f32.mrf.mxu0
        %v2040 = vadd.f32 %v1807, %v2039
        %v2041 = vpop.f32.mrf.mxu0
        %2042 = vmatprep.mubr.f32.mxu0 %v1851
        %2043 = vmatmul.mubr.f32.gmra.mxu0 %v1773
        %v2044 = vpop.f32.mrf.mxu0
        %v2045 = vadd.f32 %v1807, %v2044
        %v2046 = vpop.f32.mrf.mxu0
        %2047 = vmatprep.mubr.f32.mxu0 %v1853
        %2048 = vmatmul.mubr.f32.gmra.mxu0 %v1774
        %v2049 = vpop.f32.mrf.mxu0
        %v2050 = vadd.f32 %v1807, %v2049
        %v2051 = vpop.f32.mrf.mxu0
        %2052 = vmatprep.mubr.f32.mxu0 %v1855
        %2053 = vmatmul.mubr.f32.gmra.mxu0 %v1775
        %v2054 = vpop.f32.mrf.mxu0
        %v2055 = vadd.f32 %v1807, %v2054
        %v2056 = vpop.f32.mrf.mxu0
        %2057 = vmatprep.mubr.f32.mxu0 %v1857
        %2058 = vmatmul.mubr.f32.gmra.mxu0 %v1776
        %v2059 = vpop.f32.mrf.mxu0
        %v2060 = vadd.f32 %v1807, %v2059
        %v2061 = vpop.f32.mrf.mxu0
        %2062 = vmatprep.mubr.f32.mxu0 %v1859
        %2063 = vmatmul.mubr.f32.gmra.mxu0 %v1777
        %v2064 = vpop.f32.mrf.mxu0
        %v2065 = vadd.f32 %v1807, %v2064
        %v2066 = vpop.f32.mrf.mxu0
        %2067 = vmatprep.mubr.f32.mxu0 %v1861
        %2068 = vmatmul.mubr.f32.gmra.mxu0 %v1778
        %v2069 = vpop.f32.mrf.mxu0
        %v2070 = vadd.f32 %v1807, %v2069
        %v2071 = vpop.f32.mrf.mxu0
        %2072 = vmatprep.mubr.f32.mxu0 %v1863
        %2073 = vmatmul.mubr.f32.gmra.mxu0 %v1779
        %v2074 = vpop.f32.mrf.mxu0
        %v2075 = vadd.f32 %v1807, %v2074
        %v2076 = vpop.f32.mrf.mxu0
        %2077 = vmatprep.mubr.f32.mxu0 %v1865
        %2078 = vmatmul.mubr.f32.gmra.mxu0 %v1780
        %v2079 = vpop.f32.mrf.mxu0
        %v2080 = vadd.f32 %v1807, %v2079
        %v2081 = vpop.f32.mrf.mxu0
        %2082 = vmatprep.mubr.f32.mxu0 %v1867
        %2083 = vmatmul.mubr.f32.gmra.mxu0 %v1781
        %v2084 = vpop.f32.mrf.mxu0
        %v2085 = vadd.f32 %v1807, %v2084
        %v2086 = vpop.f32.mrf.mxu0
        %2087 = vmatprep.mubr.f32.mxu0 %v1869
        %2088 = vmatmul.mubr.f32.gmra.mxu0 %v1782
        %v2089 = vpop.f32.mrf.mxu0
        %v2090 = vadd.f32 %v1807, %v2089
        %v2091 = vpop.f32.mrf.mxu0
        %2092 = vmatprep.mubr.f32.mxu0 %v1871
        %2093 = vmatmul.mubr.f32.gmra.mxu0 %v1783
        %v2094 = vpop.f32.mrf.mxu0
        %v2095 = vadd.f32 %v1807, %v2094
        %v2096 = vpop.f32.mrf.mxu0
        %2097 = vdwg.mxu0
        %v2098 = vmax.f32 %v1940, 0.0
        %v2099 = vmax.f32 %v1945, 0.0
        %v2100 = vmax.f32 %v1950, 0.0
        %v2101 = vmax.f32 %v1955, 0.0
        %v2102 = vmax.f32 %v1960, 0.0
        %v2103 = vmax.f32 %v1965, 0.0
        %v2104 = vmax.f32 %v1970, 0.0
        %v2105 = vmax.f32 %v1975, 0.0
        %v2106 = vmax.f32 %v1980, 0.0
        %v2107 = vmax.f32 %v1985, 0.0
        %v2108 = vmax.f32 %v1990, 0.0
        %v2109 = vmax.f32 %v1995, 0.0
        %v2110 = vmax.f32 %v2000, 0.0
        %v2111 = vmax.f32 %v2005, 0.0
        %v2112 = vmax.f32 %v2010, 0.0
        %v2113 = vmax.f32 %v2015, 0.0
        %v2114 = vmax.f32 %v2020, 0.0
        %v2115 = vmax.f32 %v2025, 0.0
        %v2116 = vmax.f32 %v2030, 0.0
        %v2117 = vmax.f32 %v2035, 0.0
        %v2118 = vmax.f32 %v2040, 0.0
        %v2119 = vmax.f32 %v2045, 0.0
        %v2120 = vmax.f32 %v2050, 0.0
        %v2121 = vmax.f32 %v2055, 0.0
        %v2122 = vmax.f32 %v2060, 0.0
        %v2123 = vmax.f32 %v2065, 0.0
        %v2124 = vmax.f32 %v2070, 0.0
        %v2125 = vmax.f32 %v2075, 0.0
        %v2126 = vmax.f32 %v2080, 0.0
        %v2127 = vmax.f32 %v2085, 0.0
        %v2128 = vmax.f32 %v2090, 0.0
        %v2129 = vmax.f32 %v2095, 0.0
        %2130 = vst.msk [vmem:[%s560 + $0x1] sm:$0xff] %vm472, %v2098
        %2131 = vst.msk [vmem:[%s560 + $0x9] sm:$0xff] %vm472, %v2099
        %2132 = vst.msk [vmem:[%s560 + $0x19] sm:$0xff] %vm472, %v2100
        %2133 = vst.msk [vmem:[%s560 + $0x21] sm:$0xff] %vm472, %v2101
        %2134 = vst.msk [vmem:[%s560 + $0x31] sm:$0xff] %vm472, %v2102
        %2135 = vst.msk [vmem:[%s560 + $0x39] sm:$0xff] %vm472, %v2103
        %2136 = vst.msk [vmem:[%s560 + $0x49] sm:$0xff] %vm472, %v2104
        %2137 = vst.msk [vmem:[%s560 + $0x51] sm:$0xff] %vm472, %v2105
        %2138 = vst.msk [vmem:[%s560 + $0x61] sm:$0xff] %vm472, %v2106
        %2139 = vst.msk [vmem:[%s560 + $0x69] sm:$0xff] %vm472, %v2107
        %2140 = vst.msk [vmem:[%s560 + $0x79] sm:$0xff] %vm472, %v2108
        %2141 = vst.msk [vmem:[%s560 + $0x81] sm:$0xff] %vm472, %v2109
        %2142 = vst.msk [vmem:[%s560 + $0x91] sm:$0xff] %vm472, %v2110
        %2143 = vst.msk [vmem:[%s560 + $0x99] sm:$0xff] %vm472, %v2111
        %2144 = vst.msk [vmem:[%s560 + $0xa9] sm:$0xff] %vm472, %v2112
        %2145 = vst.msk [vmem:[%s560 + $0xb1] sm:$0xff] %vm472, %v2113
        %2146 = vst.msk [vmem:[%s560 + $0xc1] sm:$0xff] %vm472, %v2114
        %2147 = vst.msk [vmem:[%s560 + $0xc9] sm:$0xff] %vm472, %v2115
        %2148 = vst.msk [vmem:[%s560 + $0xd9] sm:$0xff] %vm472, %v2116
        %2149 = vst.msk [vmem:[%s560 + $0xe1] sm:$0xff] %vm472, %v2117
        %2150 = vst.msk [vmem:[%s560 + $0xf1] sm:$0xff] %vm472, %v2118
        %2151 = vst.msk [vmem:[%s560 + $0xf9] sm:$0xff] %vm472, %v2119
        %2152 = vst.msk [vmem:[%s560 + $0x109] sm:$0xff] %vm472, %v2120
        %2153 = vst.msk [vmem:[%s560 + $0x111] sm:$0xff] %vm472, %v2121
        %2154 = vst.msk [vmem:[%s560 + $0x121] sm:$0xff] %vm472, %v2122
        %2155 = vst.msk [vmem:[%s560 + $0x129] sm:$0xff] %vm472, %v2123
        %2156 = vst.msk [vmem:[%s560 + $0x139] sm:$0xff] %vm472, %v2124
        %2157 = vst.msk [vmem:[%s560 + $0x141] sm:$0xff] %vm472, %v2125
        %2158 = vst.msk [vmem:[%s560 + $0x151] sm:$0xff] %vm472, %v2126
        %2159 = vst.msk [vmem:[%s560 + $0x159] sm:$0xff] %vm472, %v2127
        %2160 = vst.msk [vmem:[%s560 + $0x169] sm:$0xff] %vm472, %v2128
        %2161 = vst.msk [vmem:[%s560 + $0x171] sm:$0xff] %vm472, %v2129
        %v2162 = vld [vmem:[#allocation2] sm:$0xff]
        %v2163 = vld [vmem:[#allocation2 + $0x8] sm:$0xff]
        %v2164 = vld [vmem:[#allocation2 + $0x10] sm:$0x3]
        %v2165 = vld [vmem:[#allocation2 + $0x18] sm:$0xff]
        %v2166 = vld [vmem:[#allocation2 + $0x20] sm:$0xff]
        %v2167 = vld [vmem:[#allocation2 + $0x28] sm:$0x3]
        %v2168 = vld [vmem:[#allocation2 + $0x30] sm:$0xff]
        %v2169 = vld [vmem:[#allocation2 + $0x38] sm:$0xff]
        %v2170 = vld [vmem:[#allocation2 + $0x40] sm:$0x3]
        %v2171 = vld [vmem:[#allocation2 + $0x48] sm:$0xff]
        %v2172 = vld [vmem:[#allocation2 + $0x50] sm:$0xff]
        %v2173 = vld [vmem:[#allocation2 + $0x58] sm:$0x3]
        %v2174 = vld [vmem:[#allocation2 + $0x60] sm:$0xff]
        %v2175 = vld [vmem:[#allocation2 + $0x68] sm:$0xff]
        %v2176 = vld [vmem:[#allocation2 + $0x70] sm:$0x3]
        %v2177 = vld [vmem:[#allocation2 + $0x78] sm:$0xff]
        %v2178 = vld [vmem:[#allocation2 + $0x80] sm:$0xff]
        %v2179 = vld [vmem:[#allocation2 + $0x88] sm:$0x3]
        %v2180 = vld [vmem:[#allocation2 + $0x90] sm:$0xff]
        %v2181 = vld [vmem:[#allocation2 + $0x98] sm:$0xff]
        %v2182 = vld [vmem:[#allocation2 + $0xa0] sm:$0x3]
        %v2183 = vld [vmem:[#allocation2 + $0xa8] sm:$0xff]
        %v2184 = vld [vmem:[#allocation2 + $0xb0] sm:$0xff]
        %v2185 = vld [vmem:[#allocation2 + $0xb8] sm:$0x3]
        %v2186 = vld [vmem:[#allocation2 + $0xc0] sm:$0xff]
        %v2187 = vld [vmem:[#allocation2 + $0xc8] sm:$0xff]
        %v2188 = vld [vmem:[#allocation2 + $0xd0] sm:$0x3]
        %v2189 = vld [vmem:[#allocation2 + $0xd8] sm:$0xff]
        %v2190 = vld [vmem:[#allocation2 + $0xe0] sm:$0xff]
        %v2191 = vld [vmem:[#allocation2 + $0xe8] sm:$0x3]
        %v2192 = vld [vmem:[#allocation2 + $0xf0] sm:$0xff]
        %v2193 = vld [vmem:[#allocation2 + $0xf8] sm:$0xff]
        %v2194 = vld [vmem:[#allocation2 + $0x100] sm:$0x3]
        %v2195 = vld [vmem:[#allocation2 + $0x108] sm:$0xff]
        %v2196 = vld [vmem:[#allocation2 + $0x110] sm:$0xff]
        %v2197 = vld [vmem:[#allocation2 + $0x118] sm:$0x3]
        %v2198 = vld [vmem:[#allocation2 + $0x120] sm:$0xff]
        %v2199 = vld [vmem:[#allocation2 + $0x128] sm:$0xff]
        %v2200 = vld [vmem:[#allocation2 + $0x130] sm:$0x3]
        %v2201 = vld [vmem:[#allocation2 + $0x138] sm:$0xff]
        %v2202 = vld [vmem:[#allocation2 + $0x140] sm:$0xff]
        %v2203 = vld [vmem:[#allocation2 + $0x148] sm:$0x3]
        %v2204 = vld [vmem:[#allocation2 + $0x150] sm:$0xff]
        %v2205 = vld [vmem:[#allocation2 + $0x158] sm:$0xff]
        %v2206 = vld [vmem:[#allocation2 + $0x160] sm:$0x3]
        %v2207 = vld [vmem:[#allocation2 + $0x168] sm:$0xff]
        %v2208 = vld [vmem:[#allocation2 + $0x170] sm:$0xff]
        %v2209 = vld [vmem:[#allocation2 + $0x178] sm:$0x3]
        %v2210 = vld [vmem:[#allocation2 + $0x180] sm:$0xff]
        %v2211 = vld [vmem:[#allocation2 + $0x188] sm:$0xff]
        %v2212 = vld [vmem:[#allocation2 + $0x190] sm:$0x3]
        %v2213 = vld [vmem:[#allocation2 + $0x198] sm:$0xff]
        %v2214 = vld [vmem:[#allocation2 + $0x1a0] sm:$0xff]
        %v2215 = vld [vmem:[#allocation2 + $0x1a8] sm:$0x3]
        %v2264 = vrot.slane %v2162, 1
        %v2265 = vrot.slane %v2163, 1
        %v2266 = vsel %vm695, %v2264, %v2265
        %v2267 = vrot.slane %v2164, 1
        %v2268 = vsel %vm695, %v2265, %v2267
        %v2269 = vrot.slane %v2165, 1
        %v2270 = vrot.slane %v2166, 1
        %v2271 = vsel %vm695, %v2269, %v2270
        %v2272 = vrot.slane %v2167, 1
        %v2273 = vsel %vm695, %v2270, %v2272
        %v2274 = vrot.slane %v2168, 1
        %v2275 = vrot.slane %v2169, 1
        %v2276 = vsel %vm695, %v2274, %v2275
        %v2277 = vrot.slane %v2170, 1
        %v2278 = vsel %vm695, %v2275, %v2277
        %v2279 = vrot.slane %v2171, 1
        %v2280 = vrot.slane %v2172, 1
        %v2281 = vsel %vm695, %v2279, %v2280
        %v2282 = vrot.slane %v2173, 1
        %v2283 = vsel %vm695, %v2280, %v2282
        %v2284 = vrot.slane %v2174, 1
        %v2285 = vrot.slane %v2175, 1
        %v2286 = vsel %vm695, %v2284, %v2285
        %v2287 = vrot.slane %v2176, 1
        %v2288 = vsel %vm695, %v2285, %v2287
        %v2289 = vrot.slane %v2177, 1
        %v2290 = vrot.slane %v2178, 1
        %v2291 = vsel %vm695, %v2289, %v2290
        %v2292 = vrot.slane %v2179, 1
        %v2293 = vsel %vm695, %v2290, %v2292
        %v2294 = vrot.slane %v2180, 1
        %v2295 = vrot.slane %v2181, 1
        %v2296 = vsel %vm695, %v2294, %v2295
        %v2297 = vrot.slane %v2182, 1
        %v2298 = vsel %vm695, %v2295, %v2297
        %v2299 = vrot.slane %v2183, 1
        %v2300 = vrot.slane %v2184, 1
        %v2301 = vsel %vm695, %v2299, %v2300
        %v2302 = vrot.slane %v2185, 1
        %v2303 = vsel %vm695, %v2300, %v2302
        %v2304 = vrot.slane %v2186, 1
        %v2305 = vrot.slane %v2187, 1
        %v2306 = vsel %vm695, %v2304, %v2305
        %v2307 = vrot.slane %v2188, 1
        %v2308 = vsel %vm695, %v2305, %v2307
        %v2309 = vrot.slane %v2189, 1
        %v2310 = vrot.slane %v2190, 1
        %v2311 = vsel %vm695, %v2309, %v2310
        %v2312 = vrot.slane %v2191, 1
        %v2313 = vsel %vm695, %v2310, %v2312
        %v2314 = vrot.slane %v2192, 1
        %v2315 = vrot.slane %v2193, 1
        %v2316 = vsel %vm695, %v2314, %v2315
        %v2317 = vrot.slane %v2194, 1
        %v2318 = vsel %vm695, %v2315, %v2317
        %v2319 = vrot.slane %v2195, 1
        %v2320 = vrot.slane %v2196, 1
        %v2321 = vsel %vm695, %v2319, %v2320
        %v2322 = vrot.slane %v2197, 1
        %v2323 = vsel %vm695, %v2320, %v2322
        %v2324 = vrot.slane %v2198, 1
        %v2325 = vrot.slane %v2199, 1
        %v2326 = vsel %vm695, %v2324, %v2325
        %v2327 = vrot.slane %v2200, 1
        %v2328 = vsel %vm695, %v2325, %v2327
        %v2329 = vrot.slane %v2201, 1
        %v2330 = vrot.slane %v2202, 1
        %v2331 = vsel %vm695, %v2329, %v2330
        %v2332 = vrot.slane %v2203, 1
        %v2333 = vsel %vm695, %v2330, %v2332
        %v2334 = vrot.slane %v2204, 1
        %v2335 = vrot.slane %v2205, 1
        %v2336 = vsel %vm695, %v2334, %v2335
        %v2337 = vrot.slane %v2206, 1
        %v2338 = vsel %vm695, %v2335, %v2337
        %v2339 = vrot.slane %v2207, 1
        %v2340 = vrot.slane %v2208, 1
        %v2341 = vsel %vm695, %v2339, %v2340
        %v2342 = vrot.slane %v2209, 1
        %v2343 = vsel %vm695, %v2340, %v2342
        %2344 = vrot.lane.b32.xlu0 %v2266, 16
        %v2345 = vpop.permute.xlu0 %2344
        %2346 = vrot.lane.b32.xlu0 %v2268, 16
        %v2347 = vpop.permute.xlu0 %2346
        %2348 = vrot.lane.b32.xlu0 %v2271, 16
        %v2349 = vpop.permute.xlu0 %2348
        %2350 = vrot.lane.b32.xlu0 %v2273, 16
        %v2351 = vpop.permute.xlu0 %2350
        %2352 = vrot.lane.b32.xlu0 %v2276, 16
        %v2353 = vpop.permute.xlu0 %2352
        %2354 = vrot.lane.b32.xlu0 %v2278, 16
        %v2355 = vpop.permute.xlu0 %2354
        %2356 = vrot.lane.b32.xlu0 %v2281, 16
        %v2357 = vpop.permute.xlu0 %2356
        %2358 = vrot.lane.b32.xlu0 %v2283, 16
        %v2359 = vpop.permute.xlu0 %2358
        %2360 = vrot.lane.b32.xlu0 %v2286, 16
        %v2361 = vpop.permute.xlu0 %2360
        %2362 = vrot.lane.b32.xlu0 %v2288, 16
        %v2363 = vpop.permute.xlu0 %2362
        %2364 = vrot.lane.b32.xlu0 %v2291, 16
        %v2365 = vpop.permute.xlu0 %2364
        %2366 = vrot.lane.b32.xlu0 %v2293, 16
        %v2367 = vpop.permute.xlu0 %2366
        %2368 = vrot.lane.b32.xlu0 %v2296, 16
        %v2369 = vpop.permute.xlu0 %2368
        %2370 = vrot.lane.b32.xlu0 %v2298, 16
        %v2371 = vpop.permute.xlu0 %2370
        %2372 = vrot.lane.b32.xlu0 %v2301, 16
        %v2373 = vpop.permute.xlu0 %2372
        %2374 = vrot.lane.b32.xlu0 %v2303, 16
        %v2375 = vpop.permute.xlu0 %2374
        %2376 = vrot.lane.b32.xlu0 %v2306, 16
        %v2377 = vpop.permute.xlu0 %2376
        %2378 = vrot.lane.b32.xlu0 %v2308, 16
        %v2379 = vpop.permute.xlu0 %2378
        %2380 = vrot.lane.b32.xlu0 %v2311, 16
        %v2381 = vpop.permute.xlu0 %2380
        %2382 = vrot.lane.b32.xlu0 %v2313, 16
        %v2383 = vpop.permute.xlu0 %2382
        %2384 = vrot.lane.b32.xlu0 %v2316, 16
        %v2385 = vpop.permute.xlu0 %2384
        %2386 = vrot.lane.b32.xlu0 %v2318, 16
        %v2387 = vpop.permute.xlu0 %2386
        %2388 = vrot.lane.b32.xlu0 %v2321, 16
        %v2389 = vpop.permute.xlu0 %2388
        %2390 = vrot.lane.b32.xlu0 %v2323, 16
        %v2391 = vpop.permute.xlu0 %2390
        %2392 = vrot.lane.b32.xlu0 %v2326, 16
        %v2393 = vpop.permute.xlu0 %2392
        %2394 = vrot.lane.b32.xlu0 %v2328, 16
        %v2395 = vpop.permute.xlu0 %2394
        %2396 = vrot.lane.b32.xlu0 %v2331, 16
        %v2397 = vpop.permute.xlu0 %2396
        %2398 = vrot.lane.b32.xlu0 %v2333, 16
        %v2399 = vpop.permute.xlu0 %2398
        %2400 = vrot.lane.b32.xlu0 %v2336, 16
        %v2401 = vpop.permute.xlu0 %2400
        %2402 = vrot.lane.b32.xlu0 %v2338, 16
        %v2403 = vpop.permute.xlu0 %2402
        %2404 = vrot.lane.b32.xlu0 %v2341, 16
        %v2405 = vpop.permute.xlu0 %2404
        %2406 = vrot.lane.b32.xlu0 %v2343, 16
        %v2407 = vpop.permute.xlu0 %2406
        %v2440 = vrot.slane %v2162, 2
        %v2441 = vrot.slane %v2163, 2
        %v2442 = vsel %vm872, %v2440, %v2441
        %v2443 = vrot.slane %v2164, 2
        %v2444 = vsel %vm872, %v2441, %v2443
        %v2445 = vrot.slane %v2165, 2
        %v2446 = vrot.slane %v2166, 2
        %v2447 = vsel %vm872, %v2445, %v2446
        %v2448 = vrot.slane %v2167, 2
        %v2449 = vsel %vm872, %v2446, %v2448
        %v2450 = vrot.slane %v2168, 2
        %v2451 = vrot.slane %v2169, 2
        %v2452 = vsel %vm872, %v2450, %v2451
        %v2453 = vrot.slane %v2170, 2
        %v2454 = vsel %vm872, %v2451, %v2453
        %v2455 = vrot.slane %v2171, 2
        %v2456 = vrot.slane %v2172, 2
        %v2457 = vsel %vm872, %v2455, %v2456
        %v2458 = vrot.slane %v2173, 2
        %v2459 = vsel %vm872, %v2456, %v2458
        %v2460 = vrot.slane %v2174, 2
        %v2461 = vrot.slane %v2175, 2
        %v2462 = vsel %vm872, %v2460, %v2461
        %v2463 = vrot.slane %v2176, 2
        %v2464 = vsel %vm872, %v2461, %v2463
        %v2465 = vrot.slane %v2177, 2
        %v2466 = vrot.slane %v2178, 2
        %v2467 = vsel %vm872, %v2465, %v2466
        %v2468 = vrot.slane %v2179, 2
        %v2469 = vsel %vm872, %v2466, %v2468
        %v2470 = vrot.slane %v2180, 2
        %v2471 = vrot.slane %v2181, 2
        %v2472 = vsel %vm872, %v2470, %v2471
        %v2473 = vrot.slane %v2182, 2
        %v2474 = vsel %vm872, %v2471, %v2473
        %v2475 = vrot.slane %v2183, 2
        %v2476 = vrot.slane %v2184, 2
        %v2477 = vsel %vm872, %v2475, %v2476
        %v2478 = vrot.slane %v2185, 2
        %v2479 = vsel %vm872, %v2476, %v2478
        %v2480 = vrot.slane %v2186, 2
        %v2481 = vrot.slane %v2187, 2
        %v2482 = vsel %vm872, %v2480, %v2481
        %v2483 = vrot.slane %v2188, 2
        %v2484 = vsel %vm872, %v2481, %v2483
        %v2485 = vrot.slane %v2189, 2
        %v2486 = vrot.slane %v2190, 2
        %v2487 = vsel %vm872, %v2485, %v2486
        %v2488 = vrot.slane %v2191, 2
        %v2489 = vsel %vm872, %v2486, %v2488
        %v2490 = vrot.slane %v2192, 2
        %v2491 = vrot.slane %v2193, 2
        %v2492 = vsel %vm872, %v2490, %v2491
        %v2493 = vrot.slane %v2194, 2
        %v2494 = vsel %vm872, %v2491, %v2493
        %v2495 = vrot.slane %v2195, 2
        %v2496 = vrot.slane %v2196, 2
        %v2497 = vsel %vm872, %v2495, %v2496
        %v2498 = vrot.slane %v2197, 2
        %v2499 = vsel %vm872, %v2496, %v2498
        %v2500 = vrot.slane %v2198, 2
        %v2501 = vrot.slane %v2199, 2
        %v2502 = vsel %vm872, %v2500, %v2501
        %v2503 = vrot.slane %v2200, 2
        %v2504 = vsel %vm872, %v2501, %v2503
        %v2505 = vrot.slane %v2201, 2
        %v2506 = vrot.slane %v2202, 2
        %v2507 = vsel %vm872, %v2505, %v2506
        %v2508 = vrot.slane %v2203, 2
        %v2509 = vsel %vm872, %v2506, %v2508
        %v2510 = vrot.slane %v2204, 2
        %v2511 = vrot.slane %v2205, 2
        %v2512 = vsel %vm872, %v2510, %v2511
        %v2513 = vrot.slane %v2206, 2
        %v2514 = vsel %vm872, %v2511, %v2513
        %v2515 = vrot.slane %v2207, 2
        %v2516 = vrot.slane %v2208, 2
        %v2517 = vsel %vm872, %v2515, %v2516
        %v2518 = vrot.slane %v2209, 2
        %v2519 = vsel %vm872, %v2516, %v2518
        %2520 = vrot.lane.b32.xlu0 %v2442, 32
        %v2521 = vpop.permute.xlu0 %2520
        %2522 = vrot.lane.b32.xlu0 %v2444, 32
        %v2523 = vpop.permute.xlu0 %2522
        %2524 = vrot.lane.b32.xlu0 %v2447, 32
        %v2525 = vpop.permute.xlu0 %2524
        %2526 = vrot.lane.b32.xlu0 %v2449, 32
        %v2527 = vpop.permute.xlu0 %2526
        %2528 = vrot.lane.b32.xlu0 %v2452, 32
        %v2529 = vpop.permute.xlu0 %2528
        %2530 = vrot.lane.b32.xlu0 %v2454, 32
        %v2531 = vpop.permute.xlu0 %2530
        %2532 = vrot.lane.b32.xlu0 %v2457, 32
        %v2533 = vpop.permute.xlu0 %2532
        %2534 = vrot.lane.b32.xlu0 %v2459, 32
        %v2535 = vpop.permute.xlu0 %2534
        %2536 = vrot.lane.b32.xlu0 %v2462, 32
        %v2537 = vpop.permute.xlu0 %2536
        %2538 = vrot.lane.b32.xlu0 %v2464, 32
        %v2539 = vpop.permute.xlu0 %2538
        %2540 = vrot.lane.b32.xlu0 %v2467, 32
        %v2541 = vpop.permute.xlu0 %2540
        %2542 = vrot.lane.b32.xlu0 %v2469, 32
        %v2543 = vpop.permute.xlu0 %2542
        %2544 = vrot.lane.b32.xlu0 %v2472, 32
        %v2545 = vpop.permute.xlu0 %2544
        %2546 = vrot.lane.b32.xlu0 %v2474, 32
        %v2547 = vpop.permute.xlu0 %2546
        %2548 = vrot.lane.b32.xlu0 %v2477, 32
        %v2549 = vpop.permute.xlu0 %2548
        %2550 = vrot.lane.b32.xlu0 %v2479, 32
        %v2551 = vpop.permute.xlu0 %2550
        %2552 = vrot.lane.b32.xlu0 %v2482, 32
        %v2553 = vpop.permute.xlu0 %2552
        %2554 = vrot.lane.b32.xlu0 %v2484, 32
        %v2555 = vpop.permute.xlu0 %2554
        %2556 = vrot.lane.b32.xlu0 %v2487, 32
        %v2557 = vpop.permute.xlu0 %2556
        %2558 = vrot.lane.b32.xlu0 %v2489, 32
        %v2559 = vpop.permute.xlu0 %2558
        %2560 = vrot.lane.b32.xlu0 %v2492, 32
        %v2561 = vpop.permute.xlu0 %2560
        %2562 = vrot.lane.b32.xlu0 %v2494, 32
        %v2563 = vpop.permute.xlu0 %2562
        %2564 = vrot.lane.b32.xlu0 %v2497, 32
        %v2565 = vpop.permute.xlu0 %2564
        %2566 = vrot.lane.b32.xlu0 %v2499, 32
        %v2567 = vpop.permute.xlu0 %2566
        %2568 = vrot.lane.b32.xlu0 %v2502, 32
        %v2569 = vpop.permute.xlu0 %2568
        %2570 = vrot.lane.b32.xlu0 %v2504, 32
        %v2571 = vpop.permute.xlu0 %2570
        %2572 = vrot.lane.b32.xlu0 %v2507, 32
        %v2573 = vpop.permute.xlu0 %2572
        %2574 = vrot.lane.b32.xlu0 %v2509, 32
        %v2575 = vpop.permute.xlu0 %2574
        %2576 = vrot.lane.b32.xlu0 %v2512, 32
        %v2577 = vpop.permute.xlu0 %2576
        %2578 = vrot.lane.b32.xlu0 %v2514, 32
        %v2579 = vpop.permute.xlu0 %2578
        %2580 = vrot.lane.b32.xlu0 %v2517, 32
        %v2581 = vpop.permute.xlu0 %2580
        %2582 = vrot.lane.b32.xlu0 %v2519, 32
        %v2583 = vpop.permute.xlu0 %2582
        %2618 = vrot.lane.b32.xlu0 %v2165, 48
        %v2619 = vpop.permute.xlu0 %2618
        %2620 = vrot.lane.b32.xlu0 %v2166, 48
        %v2621 = vpop.permute.xlu0 %2620
        %2622 = vrot.lane.b32.xlu0 %v2168, 48
        %v2623 = vpop.permute.xlu0 %2622
        %2624 = vrot.lane.b32.xlu0 %v2169, 48
        %v2625 = vpop.permute.xlu0 %2624
        %2626 = vrot.lane.b32.xlu0 %v2171, 48
        %v2627 = vpop.permute.xlu0 %2626
        %2628 = vrot.lane.b32.xlu0 %v2172, 48
        %v2629 = vpop.permute.xlu0 %2628
        %2630 = vrot.lane.b32.xlu0 %v2174, 48
        %v2631 = vpop.permute.xlu0 %2630
        %2632 = vrot.lane.b32.xlu0 %v2175, 48
        %v2633 = vpop.permute.xlu0 %2632
        %2634 = vrot.lane.b32.xlu0 %v2177, 48
        %v2635 = vpop.permute.xlu0 %2634
        %2636 = vrot.lane.b32.xlu0 %v2178, 48
        %v2637 = vpop.permute.xlu0 %2636
        %2638 = vrot.lane.b32.xlu0 %v2180, 48
        %v2639 = vpop.permute.xlu0 %2638
        %2640 = vrot.lane.b32.xlu0 %v2181, 48
        %v2641 = vpop.permute.xlu0 %2640
        %2642 = vrot.lane.b32.xlu0 %v2183, 48
        %v2643 = vpop.permute.xlu0 %2642
        %2644 = vrot.lane.b32.xlu0 %v2184, 48
        %v2645 = vpop.permute.xlu0 %2644
        %2646 = vrot.lane.b32.xlu0 %v2186, 48
        %v2647 = vpop.permute.xlu0 %2646
        %2648 = vrot.lane.b32.xlu0 %v2187, 48
        %v2649 = vpop.permute.xlu0 %2648
        %2650 = vrot.lane.b32.xlu0 %v2189, 48
        %v2651 = vpop.permute.xlu0 %2650
        %2652 = vrot.lane.b32.xlu0 %v2190, 48
        %v2653 = vpop.permute.xlu0 %2652
        %2654 = vrot.lane.b32.xlu0 %v2192, 48
        %v2655 = vpop.permute.xlu0 %2654
        %2656 = vrot.lane.b32.xlu0 %v2193, 48
        %v2657 = vpop.permute.xlu0 %2656
        %2658 = vrot.lane.b32.xlu0 %v2195, 48
        %v2659 = vpop.permute.xlu0 %2658
        %2660 = vrot.lane.b32.xlu0 %v2196, 48
        %v2661 = vpop.permute.xlu0 %2660
        %2662 = vrot.lane.b32.xlu0 %v2198, 48
        %v2663 = vpop.permute.xlu0 %2662
        %2664 = vrot.lane.b32.xlu0 %v2199, 48
        %v2665 = vpop.permute.xlu0 %2664
        %2666 = vrot.lane.b32.xlu0 %v2201, 48
        %v2667 = vpop.permute.xlu0 %2666
        %2668 = vrot.lane.b32.xlu0 %v2202, 48
        %v2669 = vpop.permute.xlu0 %2668
        %2670 = vrot.lane.b32.xlu0 %v2204, 48
        %v2671 = vpop.permute.xlu0 %2670
        %2672 = vrot.lane.b32.xlu0 %v2205, 48
        %v2673 = vpop.permute.xlu0 %2672
        %2674 = vrot.lane.b32.xlu0 %v2207, 48
        %v2675 = vpop.permute.xlu0 %2674
        %2676 = vrot.lane.b32.xlu0 %v2208, 48
        %v2677 = vpop.permute.xlu0 %2676
        %2678 = vrot.lane.b32.xlu0 %v2210, 48
        %v2679 = vpop.permute.xlu0 %2678
        %2680 = vrot.lane.b32.xlu0 %v2211, 48
        %v2681 = vpop.permute.xlu0 %2680
        %v2715 = vrot.slane %v2210, 1
        %v2716 = vrot.slane %v2211, 1
        %v2717 = vsel %vm695, %v2715, %v2716
        %v2718 = vrot.slane %v2212, 1
        %v2719 = vsel %vm695, %v2716, %v2718
        %2720 = vrot.lane.b32.xlu0 %v2271, 64
        %v2721 = vpop.permute.xlu0 %2720
        %2722 = vrot.lane.b32.xlu0 %v2273, 64
        %v2723 = vpop.permute.xlu0 %2722
        %2724 = vrot.lane.b32.xlu0 %v2276, 64
        %v2725 = vpop.permute.xlu0 %2724
        %2726 = vrot.lane.b32.xlu0 %v2278, 64
        %v2727 = vpop.permute.xlu0 %2726
        %2728 = vrot.lane.b32.xlu0 %v2281, 64
        %v2729 = vpop.permute.xlu0 %2728
        %2730 = vrot.lane.b32.xlu0 %v2283, 64
        %v2731 = vpop.permute.xlu0 %2730
        %2732 = vrot.lane.b32.xlu0 %v2286, 64
        %v2733 = vpop.permute.xlu0 %2732
        %2734 = vrot.lane.b32.xlu0 %v2288, 64
        %v2735 = vpop.permute.xlu0 %2734
        %2736 = vrot.lane.b32.xlu0 %v2291, 64
        %v2737 = vpop.permute.xlu0 %2736
        %2738 = vrot.lane.b32.xlu0 %v2293, 64
        %v2739 = vpop.permute.xlu0 %2738
        %2740 = vrot.lane.b32.xlu0 %v2296, 64
        %v2741 = vpop.permute.xlu0 %2740
        %2742 = vrot.lane.b32.xlu0 %v2298, 64
        %v2743 = vpop.permute.xlu0 %2742
        %2744 = vrot.lane.b32.xlu0 %v2301, 64
        %v2745 = vpop.permute.xlu0 %2744
        %2746 = vrot.lane.b32.xlu0 %v2303, 64
        %v2747 = vpop.permute.xlu0 %2746
        %2748 = vrot.lane.b32.xlu0 %v2306, 64
        %v2749 = vpop.permute.xlu0 %2748
        %2750 = vrot.lane.b32.xlu0 %v2308, 64
        %v2751 = vpop.permute.xlu0 %2750
        %2752 = vrot.lane.b32.xlu0 %v2311, 64
        %v2753 = vpop.permute.xlu0 %2752
        %2754 = vrot.lane.b32.xlu0 %v2313, 64
        %v2755 = vpop.permute.xlu0 %2754
        %2756 = vrot.lane.b32.xlu0 %v2316, 64
        %v2757 = vpop.permute.xlu0 %2756
        %2758 = vrot.lane.b32.xlu0 %v2318, 64
        %v2759 = vpop.permute.xlu0 %2758
        %2760 = vrot.lane.b32.xlu0 %v2321, 64
        %v2761 = vpop.permute.xlu0 %2760
        %2762 = vrot.lane.b32.xlu0 %v2323, 64
        %v2763 = vpop.permute.xlu0 %2762
        %2764 = vrot.lane.b32.xlu0 %v2326, 64
        %v2765 = vpop.permute.xlu0 %2764
        %2766 = vrot.lane.b32.xlu0 %v2328, 64
        %v2767 = vpop.permute.xlu0 %2766
        %2768 = vrot.lane.b32.xlu0 %v2331, 64
        %v2769 = vpop.permute.xlu0 %2768
        %2770 = vrot.lane.b32.xlu0 %v2333, 64
        %v2771 = vpop.permute.xlu0 %2770
        %2772 = vrot.lane.b32.xlu0 %v2336, 64
        %v2773 = vpop.permute.xlu0 %2772
        %2774 = vrot.lane.b32.xlu0 %v2338, 64
        %v2775 = vpop.permute.xlu0 %2774
        %2776 = vrot.lane.b32.xlu0 %v2341, 64
        %v2777 = vpop.permute.xlu0 %2776
        %2778 = vrot.lane.b32.xlu0 %v2343, 64
        %v2779 = vpop.permute.xlu0 %2778
        %2780 = vrot.lane.b32.xlu0 %v2717, 64
        %v2781 = vpop.permute.xlu0 %2780
        %2782 = vrot.lane.b32.xlu0 %v2719, 64
        %v2783 = vpop.permute.xlu0 %2782
        %v2816 = vrot.slane %v2210, 2
        %v2817 = vrot.slane %v2211, 2
        %v2818 = vsel %vm872, %v2816, %v2817
        %v2819 = vrot.slane %v2212, 2
        %v2820 = vsel %vm872, %v2817, %v2819
        %2821 = vrot.lane.b32.xlu0 %v2447, 80
        %v2822 = vpop.permute.xlu0 %2821
        %2823 = vrot.lane.b32.xlu0 %v2449, 80
        %v2824 = vpop.permute.xlu0 %2823
        %2825 = vrot.lane.b32.xlu0 %v2452, 80
        %v2826 = vpop.permute.xlu0 %2825
        %2827 = vrot.lane.b32.xlu0 %v2454, 80
        %v2828 = vpop.permute.xlu0 %2827
        %2829 = vrot.lane.b32.xlu0 %v2457, 80
        %v2830 = vpop.permute.xlu0 %2829
        %2831 = vrot.lane.b32.xlu0 %v2459, 80
        %v2832 = vpop.permute.xlu0 %2831
        %2833 = vrot.lane.b32.xlu0 %v2462, 80
        %v2834 = vpop.permute.xlu0 %2833
        %2835 = vrot.lane.b32.xlu0 %v2464, 80
        %v2836 = vpop.permute.xlu0 %2835
        %2837 = vrot.lane.b32.xlu0 %v2467, 80
        %v2838 = vpop.permute.xlu0 %2837
        %2839 = vrot.lane.b32.xlu0 %v2469, 80
        %v2840 = vpop.permute.xlu0 %2839
        %2841 = vrot.lane.b32.xlu0 %v2472, 80
        %v2842 = vpop.permute.xlu0 %2841
        %2843 = vrot.lane.b32.xlu0 %v2474, 80
        %v2844 = vpop.permute.xlu0 %2843
        %2845 = vrot.lane.b32.xlu0 %v2477, 80
        %v2846 = vpop.permute.xlu0 %2845
        %2847 = vrot.lane.b32.xlu0 %v2479, 80
        %v2848 = vpop.permute.xlu0 %2847
        %2849 = vrot.lane.b32.xlu0 %v2482, 80
        %v2850 = vpop.permute.xlu0 %2849
        %2851 = vrot.lane.b32.xlu0 %v2484, 80
        %v2852 = vpop.permute.xlu0 %2851
        %2853 = vrot.lane.b32.xlu0 %v2487, 80
        %v2854 = vpop.permute.xlu0 %2853
        %2855 = vrot.lane.b32.xlu0 %v2489, 80
        %v2856 = vpop.permute.xlu0 %2855
        %2857 = vrot.lane.b32.xlu0 %v2492, 80
        %v2858 = vpop.permute.xlu0 %2857
        %2859 = vrot.lane.b32.xlu0 %v2494, 80
        %v2860 = vpop.permute.xlu0 %2859
        %2861 = vrot.lane.b32.xlu0 %v2497, 80
        %v2862 = vpop.permute.xlu0 %2861
        %2863 = vrot.lane.b32.xlu0 %v2499, 80
        %v2864 = vpop.permute.xlu0 %2863
        %2865 = vrot.lane.b32.xlu0 %v2502, 80
        %v2866 = vpop.permute.xlu0 %2865
        %2867 = vrot.lane.b32.xlu0 %v2504, 80
        %v2868 = vpop.permute.xlu0 %2867
        %2869 = vrot.lane.b32.xlu0 %v2507, 80
        %v2870 = vpop.permute.xlu0 %2869
        %2871 = vrot.lane.b32.xlu0 %v2509, 80
        %v2872 = vpop.permute.xlu0 %2871
        %2873 = vrot.lane.b32.xlu0 %v2512, 80
        %v2874 = vpop.permute.xlu0 %2873
        %2875 = vrot.lane.b32.xlu0 %v2514, 80
        %v2876 = vpop.permute.xlu0 %2875
        %2877 = vrot.lane.b32.xlu0 %v2517, 80
        %v2878 = vpop.permute.xlu0 %2877
        %2879 = vrot.lane.b32.xlu0 %v2519, 80
        %v2880 = vpop.permute.xlu0 %2879
        %2881 = vrot.lane.b32.xlu0 %v2818, 80
        %v2882 = vpop.permute.xlu0 %2881
        %2883 = vrot.lane.b32.xlu0 %v2820, 80
        %v2884 = vpop.permute.xlu0 %2883
        %2919 = vrot.lane.b32.xlu0 %v2168, 96
        %v2920 = vpop.permute.xlu0 %2919
        %2921 = vrot.lane.b32.xlu0 %v2169, 96
        %v2922 = vpop.permute.xlu0 %2921
        %2923 = vrot.lane.b32.xlu0 %v2171, 96
        %v2924 = vpop.permute.xlu0 %2923
        %2925 = vrot.lane.b32.xlu0 %v2172, 96
        %v2926 = vpop.permute.xlu0 %2925
        %2927 = vrot.lane.b32.xlu0 %v2174, 96
        %v2928 = vpop.permute.xlu0 %2927
        %2929 = vrot.lane.b32.xlu0 %v2175, 96
        %v2930 = vpop.permute.xlu0 %2929
        %2931 = vrot.lane.b32.xlu0 %v2177, 96
        %v2932 = vpop.permute.xlu0 %2931
        %2933 = vrot.lane.b32.xlu0 %v2178, 96
        %v2934 = vpop.permute.xlu0 %2933
        %2935 = vrot.lane.b32.xlu0 %v2180, 96
        %v2936 = vpop.permute.xlu0 %2935
        %2937 = vrot.lane.b32.xlu0 %v2181, 96
        %v2938 = vpop.permute.xlu0 %2937
        %2939 = vrot.lane.b32.xlu0 %v2183, 96
        %v2940 = vpop.permute.xlu0 %2939
        %2941 = vrot.lane.b32.xlu0 %v2184, 96
        %v2942 = vpop.permute.xlu0 %2941
        %2943 = vrot.lane.b32.xlu0 %v2186, 96
        %v2944 = vpop.permute.xlu0 %2943
        %2945 = vrot.lane.b32.xlu0 %v2187, 96
        %v2946 = vpop.permute.xlu0 %2945
        %2947 = vrot.lane.b32.xlu0 %v2189, 96
        %v2948 = vpop.permute.xlu0 %2947
        %2949 = vrot.lane.b32.xlu0 %v2190, 96
        %v2950 = vpop.permute.xlu0 %2949
        %2951 = vrot.lane.b32.xlu0 %v2192, 96
        %v2952 = vpop.permute.xlu0 %2951
        %2953 = vrot.lane.b32.xlu0 %v2193, 96
        %v2954 = vpop.permute.xlu0 %2953
        %2955 = vrot.lane.b32.xlu0 %v2195, 96
        %v2956 = vpop.permute.xlu0 %2955
        %2957 = vrot.lane.b32.xlu0 %v2196, 96
        %v2958 = vpop.permute.xlu0 %2957
        %2959 = vrot.lane.b32.xlu0 %v2198, 96
        %v2960 = vpop.permute.xlu0 %2959
        %2961 = vrot.lane.b32.xlu0 %v2199, 96
        %v2962 = vpop.permute.xlu0 %2961
        %2963 = vrot.lane.b32.xlu0 %v2201, 96
        %v2964 = vpop.permute.xlu0 %2963
        %2965 = vrot.lane.b32.xlu0 %v2202, 96
        %v2966 = vpop.permute.xlu0 %2965
        %2967 = vrot.lane.b32.xlu0 %v2204, 96
        %v2968 = vpop.permute.xlu0 %2967
        %2969 = vrot.lane.b32.xlu0 %v2205, 96
        %v2970 = vpop.permute.xlu0 %2969
        %2971 = vrot.lane.b32.xlu0 %v2207, 96
        %v2972 = vpop.permute.xlu0 %2971
        %2973 = vrot.lane.b32.xlu0 %v2208, 96
        %v2974 = vpop.permute.xlu0 %2973
        %2975 = vrot.lane.b32.xlu0 %v2210, 96
        %v2976 = vpop.permute.xlu0 %2975
        %2977 = vrot.lane.b32.xlu0 %v2211, 96
        %v2978 = vpop.permute.xlu0 %2977
        %2979 = vrot.lane.b32.xlu0 %v2213, 96
        %v2980 = vpop.permute.xlu0 %2979
        %2981 = vrot.lane.b32.xlu0 %v2214, 96
        %v2982 = vpop.permute.xlu0 %2981
        %v3016 = vrot.slane %v2213, 1
        %v3017 = vrot.slane %v2214, 1
        %v3018 = vsel %vm695, %v3016, %v3017
        %v3019 = vrot.slane %v2215, 1
        %v3020 = vsel %vm695, %v3017, %v3019
        %3021 = vrot.lane.b32.xlu0 %v2276, 112
        %v3022 = vpop.permute.xlu0 %3021
        %3023 = vrot.lane.b32.xlu0 %v2278, 112
        %v3024 = vpop.permute.xlu0 %3023
        %3025 = vrot.lane.b32.xlu0 %v2281, 112
        %v3026 = vpop.permute.xlu0 %3025
        %3027 = vrot.lane.b32.xlu0 %v2283, 112
        %v3028 = vpop.permute.xlu0 %3027
        %3029 = vrot.lane.b32.xlu0 %v2286, 112
        %v3030 = vpop.permute.xlu0 %3029
        %3031 = vrot.lane.b32.xlu0 %v2288, 112
        %v3032 = vpop.permute.xlu0 %3031
        %3033 = vrot.lane.b32.xlu0 %v2291, 112
        %v3034 = vpop.permute.xlu0 %3033
        %3035 = vrot.lane.b32.xlu0 %v2293, 112
        %v3036 = vpop.permute.xlu0 %3035
        %3037 = vrot.lane.b32.xlu0 %v2296, 112
        %v3038 = vpop.permute.xlu0 %3037
        %3039 = vrot.lane.b32.xlu0 %v2298, 112
        %v3040 = vpop.permute.xlu0 %3039
        %3041 = vrot.lane.b32.xlu0 %v2301, 112
        %v3042 = vpop.permute.xlu0 %3041
        %3043 = vrot.lane.b32.xlu0 %v2303, 112
        %v3044 = vpop.permute.xlu0 %3043
        %3045 = vrot.lane.b32.xlu0 %v2306, 112
        %v3046 = vpop.permute.xlu0 %3045
        %3047 = vrot.lane.b32.xlu0 %v2308, 112
        %v3048 = vpop.permute.xlu0 %3047
        %3049 = vrot.lane.b32.xlu0 %v2311, 112
        %v3050 = vpop.permute.xlu0 %3049
        %3051 = vrot.lane.b32.xlu0 %v2313, 112
        %v3052 = vpop.permute.xlu0 %3051
        %3053 = vrot.lane.b32.xlu0 %v2316, 112
        %v3054 = vpop.permute.xlu0 %3053
        %3055 = vrot.lane.b32.xlu0 %v2318, 112
        %v3056 = vpop.permute.xlu0 %3055
        %3057 = vrot.lane.b32.xlu0 %v2321, 112
        %v3058 = vpop.permute.xlu0 %3057
        %3059 = vrot.lane.b32.xlu0 %v2323, 112
        %v3060 = vpop.permute.xlu0 %3059
        %3061 = vrot.lane.b32.xlu0 %v2326, 112
        %v3062 = vpop.permute.xlu0 %3061
        %3063 = vrot.lane.b32.xlu0 %v2328, 112
        %v3064 = vpop.permute.xlu0 %3063
        %3065 = vrot.lane.b32.xlu0 %v2331, 112
        %v3066 = vpop.permute.xlu0 %3065
        %3067 = vrot.lane.b32.xlu0 %v2333, 112
        %v3068 = vpop.permute.xlu0 %3067
        %3069 = vrot.lane.b32.xlu0 %v2336, 112
        %v3070 = vpop.permute.xlu0 %3069
        %3071 = vrot.lane.b32.xlu0 %v2338, 112
        %v3072 = vpop.permute.xlu0 %3071
        %3073 = vrot.lane.b32.xlu0 %v2341, 112
        %v3074 = vpop.permute.xlu0 %3073
        %3075 = vrot.lane.b32.xlu0 %v2343, 112
        %v3076 = vpop.permute.xlu0 %3075
        %3077 = vrot.lane.b32.xlu0 %v2717, 112
        %v3078 = vpop.permute.xlu0 %3077
        %3079 = vrot.lane.b32.xlu0 %v2719, 112
        %v3080 = vpop.permute.xlu0 %3079
        %3081 = vrot.lane.b32.xlu0 %v3018, 112
        %v3082 = vpop.permute.xlu0 %3081
        %3083 = vrot.lane.b32.xlu0 %v3020, 112
        %v3084 = vpop.permute.xlu0 %3083
        %v3117 = vrot.slane %v2213, 2
        %v3118 = vrot.slane %v2214, 2
        %v3119 = vsel %vm872, %v3117, %v3118
        %v3120 = vrot.slane %v2215, 2
        %v3121 = vsel %vm872, %v3118, %v3120
        %v3122 = vsel %vm472, %v2162, %v2345
        %v3123 = vsel %vm472, %v2163, %v2347
        %v3124 = vsel %vm472, %v2165, %v2349
        %v3125 = vsel %vm472, %v2166, %v2351
        %v3126 = vsel %vm472, %v2168, %v2353
        %v3127 = vsel %vm472, %v2169, %v2355
        %v3128 = vsel %vm472, %v2171, %v2357
        %v3129 = vsel %vm472, %v2172, %v2359
        %v3130 = vsel %vm472, %v2174, %v2361
        %v3131 = vsel %vm472, %v2175, %v2363
        %v3132 = vsel %vm472, %v2177, %v2365
        %v3133 = vsel %vm472, %v2178, %v2367
        %v3134 = vsel %vm472, %v2180, %v2369
        %v3135 = vsel %vm472, %v2181, %v2371
        %v3136 = vsel %vm472, %v2183, %v2373
        %v3137 = vsel %vm472, %v2184, %v2375
        %v3138 = vsel %vm472, %v2186, %v2377
        %v3139 = vsel %vm472, %v2187, %v2379
        %v3140 = vsel %vm472, %v2189, %v2381
        %v3141 = vsel %vm472, %v2190, %v2383
        %v3142 = vsel %vm472, %v2192, %v2385
        %v3143 = vsel %vm472, %v2193, %v2387
        %v3144 = vsel %vm472, %v2195, %v2389
        %v3145 = vsel %vm472, %v2196, %v2391
        %v3146 = vsel %vm472, %v2198, %v2393
        %v3147 = vsel %vm472, %v2199, %v2395
        %v3148 = vsel %vm472, %v2201, %v2397
        %v3149 = vsel %vm472, %v2202, %v2399
        %v3150 = vsel %vm472, %v2204, %v2401
        %v3151 = vsel %vm472, %v2205, %v2403
        %v3152 = vsel %vm472, %v2207, %v2405
        %v3153 = vsel %vm472, %v2208, %v2407
        %v3154 = vsel %vm398, %v3122, %v2521
        %v3155 = vsel %vm398, %v3123, %v2523
        %v3156 = vsel %vm398, %v3124, %v2525
        %v3157 = vsel %vm398, %v3125, %v2527
        %v3158 = vsel %vm398, %v3126, %v2529
        %v3159 = vsel %vm398, %v3127, %v2531
        %v3160 = vsel %vm398, %v3128, %v2533
        %v3161 = vsel %vm398, %v3129, %v2535
        %v3162 = vsel %vm398, %v3130, %v2537
        %v3163 = vsel %vm398, %v3131, %v2539
        %v3164 = vsel %vm398, %v3132, %v2541
        %v3165 = vsel %vm398, %v3133, %v2543
        %v3166 = vsel %vm398, %v3134, %v2545
        %v3167 = vsel %vm398, %v3135, %v2547
        %v3168 = vsel %vm398, %v3136, %v2549
        %v3169 = vsel %vm398, %v3137, %v2551
        %v3170 = vsel %vm398, %v3138, %v2553
        %v3171 = vsel %vm398, %v3139, %v2555
        %v3172 = vsel %vm398, %v3140, %v2557
        %v3173 = vsel %vm398, %v3141, %v2559
        %v3174 = vsel %vm398, %v3142, %v2561
        %v3175 = vsel %vm398, %v3143, %v2563
        %v3176 = vsel %vm398, %v3144, %v2565
        %v3177 = vsel %vm398, %v3145, %v2567
        %v3178 = vsel %vm398, %v3146, %v2569
        %v3179 = vsel %vm398, %v3147, %v2571
        %v3180 = vsel %vm398, %v3148, %v2573
        %v3181 = vsel %vm398, %v3149, %v2575
        %v3182 = vsel %vm398, %v3150, %v2577
        %v3183 = vsel %vm398, %v3151, %v2579
        %v3184 = vsel %vm398, %v3152, %v2581
        %v3185 = vsel %vm398, %v3153, %v2583
        %v3186 = vsel %vm1619, %v3154, %v2619
        %v3187 = vsel %vm1619, %v3155, %v2621
        %v3188 = vsel %vm1619, %v3156, %v2623
        %v3189 = vsel %vm1619, %v3157, %v2625
        %v3190 = vsel %vm1619, %v3158, %v2627
        %v3191 = vsel %vm1619, %v3159, %v2629
        %v3192 = vsel %vm1619, %v3160, %v2631
        %v3193 = vsel %vm1619, %v3161, %v2633
        %v3194 = vsel %vm1619, %v3162, %v2635
        %v3195 = vsel %vm1619, %v3163, %v2637
        %v3196 = vsel %vm1619, %v3164, %v2639
        %v3197 = vsel %vm1619, %v3165, %v2641
        %v3198 = vsel %vm1619, %v3166, %v2643
        %v3199 = vsel %vm1619, %v3167, %v2645
        %v3200 = vsel %vm1619, %v3168, %v2647
        %v3201 = vsel %vm1619, %v3169, %v2649
        %v3202 = vsel %vm1619, %v3170, %v2651
        %v3203 = vsel %vm1619, %v3171, %v2653
        %v3204 = vsel %vm1619, %v3172, %v2655
        %v3205 = vsel %vm1619, %v3173, %v2657
        %v3206 = vsel %vm1619, %v3174, %v2659
        %v3207 = vsel %vm1619, %v3175, %v2661
        %v3208 = vsel %vm1619, %v3176, %v2663
        %v3209 = vsel %vm1619, %v3177, %v2665
        %v3210 = vsel %vm1619, %v3178, %v2667
        %v3211 = vsel %vm1619, %v3179, %v2669
        %v3212 = vsel %vm1619, %v3180, %v2671
        %v3213 = vsel %vm1619, %v3181, %v2673
        %v3214 = vsel %vm1619, %v3182, %v2675
        %v3215 = vsel %vm1619, %v3183, %v2677
        %v3216 = vsel %vm1619, %v3184, %v2679
        %v3217 = vsel %vm1619, %v3185, %v2681
        %v3218 = vsel %vm1652, %v3186, %v2721
        %v3219 = vsel %vm1652, %v3187, %v2723
        %v3220 = vsel %vm1652, %v3188, %v2725
        %v3221 = vsel %vm1652, %v3189, %v2727
        %v3222 = vsel %vm1652, %v3190, %v2729
        %v3223 = vsel %vm1652, %v3191, %v2731
        %v3224 = vsel %vm1652, %v3192, %v2733
        %v3225 = vsel %vm1652, %v3193, %v2735
        %v3226 = vsel %vm1652, %v3194, %v2737
        %v3227 = vsel %vm1652, %v3195, %v2739
        %v3228 = vsel %vm1652, %v3196, %v2741
        %v3229 = vsel %vm1652, %v3197, %v2743
        %v3230 = vsel %vm1652, %v3198, %v2745
        %v3231 = vsel %vm1652, %v3199, %v2747
        %v3232 = vsel %vm1652, %v3200, %v2749
        %v3233 = vsel %vm1652, %v3201, %v2751
        %v3234 = vsel %vm1652, %v3202, %v2753
        %v3235 = vsel %vm1652, %v3203, %v2755
        %v3236 = vsel %vm1652, %v3204, %v2757
        %v3237 = vsel %vm1652, %v3205, %v2759
        %v3238 = vsel %vm1652, %v3206, %v2761
        %v3239 = vsel %vm1652, %v3207, %v2763
        %v3240 = vsel %vm1652, %v3208, %v2765
        %v3241 = vsel %vm1652, %v3209, %v2767
        %v3242 = vsel %vm1652, %v3210, %v2769
        %v3243 = vsel %vm1652, %v3211, %v2771
        %v3244 = vsel %vm1652, %v3212, %v2773
        %v3245 = vsel %vm1652, %v3213, %v2775
        %v3246 = vsel %vm1652, %v3214, %v2777
        %v3247 = vsel %vm1652, %v3215, %v2779
        %v3248 = vsel %vm1652, %v3216, %v2781
        %v3249 = vsel %vm1652, %v3217, %v2783
        %v3250 = vsel %vm1685, %v3218, %v2822
        %v3251 = vsel %vm1685, %v3219, %v2824
        %v3252 = vsel %vm1685, %v3220, %v2826
        %v3253 = vsel %vm1685, %v3221, %v2828
        %v3254 = vsel %vm1685, %v3222, %v2830
        %v3255 = vsel %vm1685, %v3223, %v2832
        %v3256 = vsel %vm1685, %v3224, %v2834
        %v3257 = vsel %vm1685, %v3225, %v2836
        %v3258 = vsel %vm1685, %v3226, %v2838
        %v3259 = vsel %vm1685, %v3227, %v2840
        %v3260 = vsel %vm1685, %v3228, %v2842
        %v3261 = vsel %vm1685, %v3229, %v2844
        %v3262 = vsel %vm1685, %v3230, %v2846
        %v3263 = vsel %vm1685, %v3231, %v2848
        %v3264 = vsel %vm1685, %v3232, %v2850
        %v3265 = vsel %vm1685, %v3233, %v2852
        %v3266 = vsel %vm1685, %v3234, %v2854
        %v3267 = vsel %vm1685, %v3235, %v2856
        %v3268 = vsel %vm1685, %v3236, %v2858
        %v3269 = vsel %vm1685, %v3237, %v2860
        %v3270 = vsel %vm1685, %v3238, %v2862
        %v3271 = vsel %vm1685, %v3239, %v2864
        %v3272 = vsel %vm1685, %v3240, %v2866
        %v3273 = vsel %vm1685, %v3241, %v2868
        %v3274 = vsel %vm1685, %v3242, %v2870
        %v3275 = vsel %vm1685, %v3243, %v2872
        %v3276 = vsel %vm1685, %v3244, %v2874
        %v3277 = vsel %vm1685, %v3245, %v2876
        %v3278 = vsel %vm1685, %v3246, %v2878
        %v3279 = vsel %vm1685, %v3247, %v2880
        %v3280 = vsel %vm1685, %v3248, %v2882
        %v3281 = vsel %vm1685, %v3249, %v2884
        %v3282 = vsel %vm1718, %v3250, %v2920
        %v3283 = vsel %vm1718, %v3251, %v2922
        %v3284 = vsel %vm1718, %v3252, %v2924
        %v3285 = vsel %vm1718, %v3253, %v2926
        %v3286 = vsel %vm1718, %v3254, %v2928
        %v3287 = vsel %vm1718, %v3255, %v2930
        %v3288 = vsel %vm1718, %v3256, %v2932
        %v3289 = vsel %vm1718, %v3257, %v2934
        %v3290 = vsel %vm1718, %v3258, %v2936
        %v3291 = vsel %vm1718, %v3259, %v2938
        %v3292 = vsel %vm1718, %v3260, %v2940
        %v3293 = vsel %vm1718, %v3261, %v2942
        %v3294 = vsel %vm1718, %v3262, %v2944
        %v3295 = vsel %vm1718, %v3263, %v2946
        %v3296 = vsel %vm1718, %v3264, %v2948
        %v3297 = vsel %vm1718, %v3265, %v2950
        %v3298 = vsel %vm1718, %v3266, %v2952
        %v3299 = vsel %vm1718, %v3267, %v2954
        %v3300 = vsel %vm1718, %v3268, %v2956
        %v3301 = vsel %vm1718, %v3269, %v2958
        %v3302 = vsel %vm1718, %v3270, %v2960
        %v3303 = vsel %vm1718, %v3271, %v2962
        %v3304 = vsel %vm1718, %v3272, %v2964
        %v3305 = vsel %vm1718, %v3273, %v2966
        %v3306 = vsel %vm1718, %v3274, %v2968
        %v3307 = vsel %vm1718, %v3275, %v2970
        %v3308 = vsel %vm1718, %v3276, %v2972
        %v3309 = vsel %vm1718, %v3277, %v2974
        %v3310 = vsel %vm1718, %v3278, %v2976
        %v3311 = vsel %vm1718, %v3279, %v2978
        %v3312 = vsel %vm1718, %v3280, %v2980
        %v3313 = vsel %vm1718, %v3281, %v2982
        %v3314 = vsel %vm1751, %v3282, %v3022
        %v3315 = vsel %vm1751, %v3283, %v3024
        %v3316 = vsel %vm1751, %v3284, %v3026
        %v3317 = vsel %vm1751, %v3285, %v3028
        %v3318 = vsel %vm1751, %v3286, %v3030
        %v3319 = vsel %vm1751, %v3287, %v3032
        %v3320 = vsel %vm1751, %v3288, %v3034
        %v3321 = vsel %vm1751, %v3289, %v3036
        %v3322 = vsel %vm1751, %v3290, %v3038
        %v3323 = vsel %vm1751, %v3291, %v3040
        %v3324 = vsel %vm1751, %v3292, %v3042
        %v3325 = vsel %vm1751, %v3293, %v3044
        %v3326 = vsel %vm1751, %v3294, %v3046
        %v3327 = vsel %vm1751, %v3295, %v3048
        %v3328 = vsel %vm1751, %v3296, %v3050
        %v3329 = vsel %vm1751, %v3297, %v3052
        %v3330 = vsel %vm1751, %v3298, %v3054
        %v3331 = vsel %vm1751, %v3299, %v3056
        %v3332 = vsel %vm1751, %v3300, %v3058
        %v3333 = vsel %vm1751, %v3301, %v3060
        %v3334 = vsel %vm1751, %v3302, %v3062
        %v3335 = vsel %vm1751, %v3303, %v3064
        %v3336 = vsel %vm1751, %v3304, %v3066
        %v3337 = vsel %vm1751, %v3305, %v3068
        %v3338 = vsel %vm1751, %v3306, %v3070
        %v3339 = vsel %vm1751, %v3307, %v3072
        %v3340 = vsel %vm1751, %v3308, %v3074
        %v3341 = vsel %vm1751, %v3309, %v3076
        %v3342 = vsel %vm1751, %v3310, %v3078
        %v3343 = vsel %vm1751, %v3311, %v3080
        %v3344 = vsel %vm1751, %v3312, %v3082
        %v3345 = vsel %vm1751, %v3313, %v3084
        %v3346 = vld [vmem:[%s3] sm:$0xff]
        %v3347 = vld [vmem:[%s3 + $0x8] sm:$0xff]
        %v3348 = vld [vmem:[%s3 + $0x10] sm:$0xff]
        %v3349 = vld [vmem:[%s3 + $0x18] sm:$0xff]
        %v3350 = vld [vmem:[%s3 + $0x20] sm:$0xff]
        %v3351 = vld [vmem:[%s3 + $0x28] sm:$0xff]
        %v3352 = vld [vmem:[%s3 + $0x30] sm:$0xff]
        %v3353 = vld [vmem:[%s3 + $0x38] sm:$0xff]
        %v3354 = vld [vmem:[%s3 + $0x40] sm:$0xff]
        %v3355 = vld [vmem:[%s3 + $0x48] sm:$0xff]
        %v3356 = vld [vmem:[%s3 + $0x50] sm:$0xff]
        %v3357 = vld [vmem:[%s3 + $0x58] sm:$0xff]
        %v3358 = vld [vmem:[%s3 + $0x60] sm:$0xff]
        %v3359 = vld [vmem:[%s3 + $0x68] sm:$0xff]
        %v3360 = vld [vmem:[%s3 + $0x70] sm:$0xff]
        %v3361 = vld [vmem:[%s3 + $0x78] sm:$0xff]
        %v3362 = vld [vmem:[%s3 + $0x80] sm:$0xff]
        %v3363 = vld [vmem:[%s3 + $0x88] sm:$0xff]
        %v3364 = vld [vmem:[%s4] sm:$0x1]
        %v3366 = vlaneseq
        %v3367 = vshrl.u32 %v3366, 7
        %v3368 = vsub.s32 0, %v3367
        %v3369 = vrot.slane %v3364, %v3368
        %v3371 = vsel %vm472, %v2452, 0
        %v3373 = vsel %vm472, %v2454, 0
        %v3375 = vsel %vm472, %v2457, 0
        %v3377 = vsel %vm472, %v2459, 0
        %v3379 = vsel %vm472, %v2462, 0
        %v3381 = vsel %vm472, %v2464, 0
        %v3383 = vsel %vm472, %v2467, 0
        %v3385 = vsel %vm472, %v2469, 0
        %v3387 = vsel %vm472, %v2472, 0
        %v3389 = vsel %vm472, %v2474, 0
        %v3391 = vsel %vm472, %v2477, 0
        %v3393 = vsel %vm472, %v2479, 0
        %v3395 = vsel %vm472, %v2482, 0
        %v3397 = vsel %vm472, %v2484, 0
        %v3399 = vsel %vm472, %v2487, 0
        %v3401 = vsel %vm472, %v2489, 0
        %v3403 = vsel %vm472, %v2492, 0
        %v3405 = vsel %vm472, %v2494, 0
        %v3407 = vsel %vm472, %v2497, 0
        %v3409 = vsel %vm472, %v2499, 0
        %v3411 = vsel %vm472, %v2502, 0
        %v3413 = vsel %vm472, %v2504, 0
        %v3415 = vsel %vm472, %v2507, 0
        %v3417 = vsel %vm472, %v2509, 0
        %v3419 = vsel %vm472, %v2512, 0
        %v3421 = vsel %vm472, %v2514, 0
        %v3423 = vsel %vm472, %v2517, 0
        %v3425 = vsel %vm472, %v2519, 0
        %v3427 = vsel %vm472, %v2818, 0
        %v3429 = vsel %vm472, %v2820, 0
        %v3431 = vsel %vm472, %v3119, 0
        %v3433 = vsel %vm472, %v3121, 0
        %3435 = vmatprep.subr.mxu0 0.0
        %3436 = vmatpush1.msra.mxu0 %v3361
        %3437 = vmatprep.subr.mxu0 0.0
        %3438 = vmatpush1.msra.mxu0 %v3360
        %3439 = vmatprep.subr.mxu0 0.0
        %3440 = vmatpush1.msra.mxu0 %v3359
        %3441 = vmatprep.subr.mxu0 0.0
        %3442 = vmatpush1.msra.mxu0 %v3358
        %3443 = vmatprep.subr.mxu0 0.0
        %3444 = vmatpush1.msra.mxu0 %v3357
        %3445 = vmatprep.subr.mxu0 0.0
        %3446 = vmatpush1.msra.mxu0 %v3356
        %3447 = vmatprep.subr.mxu0 0.0
        %3448 = vmatpush1.msra.mxu0 %v3355
        %3449 = vmatprep.subr.mxu0 0.0
        %3450 = vmatpush1.msra.mxu0 %v3354
        %3451 = vmatprep.subr.mxu0 0.0
        %3452 = vmatpush1.msra.mxu0 %v3353
        %3453 = vmatprep.subr.mxu0 0.0
        %3454 = vmatpush1.msra.mxu0 %v3352
        %3455 = vmatprep.subr.mxu0 0.0
        %3456 = vmatpush1.msra.mxu0 %v3351
        %3457 = vmatprep.subr.mxu0 0.0
        %3458 = vmatpush1.msra.mxu0 %v3350
        %3459 = vmatprep.subr.mxu0 0.0
        %3460 = vmatpush1.msra.mxu0 %v3349
        %3461 = vmatprep.subr.mxu0 0.0
        %3462 = vmatpush1.msra.mxu0 %v3348
        %3463 = vmatprep.subr.mxu0 0.0
        %3464 = vmatpush1.msra.mxu0 %v3347
        %3465 = vmatprep.subr.mxu0 0.0
        %3466 = vmatpush1.msra.mxu0 %v3346
        %3467 = vmatprep.subr.mxu0 0.0
        %3468 = vmatpush2.msra.mxu0 0.0
        %3469 = vmatprep.subr.mxu0 0.0
        %3470 = vmatpush2.msra.mxu0 0.0
        %3471 = vmatprep.subr.mxu0 0.0
        %3472 = vmatpush2.msra.mxu0 0.0
        %3473 = vmatprep.subr.mxu0 0.0
        %3474 = vmatpush2.msra.mxu0 0.0
        %3475 = vmatprep.subr.mxu0 0.0
        %3476 = vmatpush2.msra.mxu0 0.0
        %3477 = vmatprep.subr.mxu0 0.0
        %3478 = vmatpush2.msra.mxu0 0.0
        %3479 = vmatprep.subr.mxu0 0.0
        %3480 = vmatpush2.msra.mxu0 0.0
        %3481 = vmatprep.subr.mxu0 0.0
        %3482 = vmatpush2.msra.mxu0 0.0
        %3483 = vmatprep.subr.mxu0 0.0
        %3484 = vmatpush2.msra.mxu0 0.0
        %3485 = vmatprep.subr.mxu0 0.0
        %3486 = vmatpush2.msra.mxu0 0.0
        %3487 = vmatprep.subr.mxu0 0.0
        %3488 = vmatpush2.msra.mxu0 0.0
        %3489 = vmatprep.subr.mxu0 0.0
        %3490 = vmatpush2.msra.mxu0 0.0
        %3491 = vmatprep.subr.mxu0 0.0
        %3492 = vmatpush2.msra.mxu0 0.0
        %3493 = vmatprep.subr.mxu0 0.0
        %3494 = vmatpush2.msra.mxu0 0.0
        %3495 = vmatprep.subr.mxu0 0.0
        %3496 = vmatpush2.msra.mxu0 %v3363
        %3497 = vmatprep.subr.mxu0 0.0
        %3498 = vmatpush2.msra.mxu0 %v3362
        %3499 = vmatprep.mubr.f32.mxu0 %v3371
        %3500 = vmatmul.mubr.f32.gmra.mxu0 %v3314
        %v3501 = vpop.f32.mrf.mxu0
        %v3502 = vadd.f32 %v3369, %v3501
        %v3503 = vpop.f32.mrf.mxu0
        %3504 = vmatprep.mubr.f32.mxu0 %v3373
        %3505 = vmatmul.mubr.f32.gmra.mxu0 %v3315
        %v3506 = vpop.f32.mrf.mxu0
        %v3507 = vadd.f32 %v3369, %v3506
        %v3508 = vpop.f32.mrf.mxu0
        %3509 = vmatprep.mubr.f32.mxu0 %v3375
        %3510 = vmatmul.mubr.f32.gmra.mxu0 %v3316
        %v3511 = vpop.f32.mrf.mxu0
        %v3512 = vadd.f32 %v3369, %v3511
        %v3513 = vpop.f32.mrf.mxu0
        %3514 = vmatprep.mubr.f32.mxu0 %v3377
        %3515 = vmatmul.mubr.f32.gmra.mxu0 %v3317
        %v3516 = vpop.f32.mrf.mxu0
        %v3517 = vadd.f32 %v3369, %v3516
        %v3518 = vpop.f32.mrf.mxu0
        %3519 = vmatprep.mubr.f32.mxu0 %v3379
        %3520 = vmatmul.mubr.f32.gmra.mxu0 %v3318
        %v3521 = vpop.f32.mrf.mxu0
        %v3522 = vadd.f32 %v3369, %v3521
        %v3523 = vpop.f32.mrf.mxu0
        %3524 = vmatprep.mubr.f32.mxu0 %v3381
        %3525 = vmatmul.mubr.f32.gmra.mxu0 %v3319
        %v3526 = vpop.f32.mrf.mxu0
        %v3527 = vadd.f32 %v3369, %v3526
        %v3528 = vpop.f32.mrf.mxu0
        %3529 = vmatprep.mubr.f32.mxu0 %v3383
        %3530 = vmatmul.mubr.f32.gmra.mxu0 %v3320
        %v3531 = vpop.f32.mrf.mxu0
        %v3532 = vadd.f32 %v3369, %v3531
        %v3533 = vpop.f32.mrf.mxu0
        %3534 = vmatprep.mubr.f32.mxu0 %v3385
        %3535 = vmatmul.mubr.f32.gmra.mxu0 %v3321
        %v3536 = vpop.f32.mrf.mxu0
        %v3537 = vadd.f32 %v3369, %v3536
        %v3538 = vpop.f32.mrf.mxu0
        %3539 = vmatprep.mubr.f32.mxu0 %v3387
        %3540 = vmatmul.mubr.f32.gmra.mxu0 %v3322
        %v3541 = vpop.f32.mrf.mxu0
        %v3542 = vadd.f32 %v3369, %v3541
        %v3543 = vpop.f32.mrf.mxu0
        %3544 = vmatprep.mubr.f32.mxu0 %v3389
        %3545 = vmatmul.mubr.f32.gmra.mxu0 %v3323
        %v3546 = vpop.f32.mrf.mxu0
        %v3547 = vadd.f32 %v3369, %v3546
        %v3548 = vpop.f32.mrf.mxu0
        %3549 = vmatprep.mubr.f32.mxu0 %v3391
        %3550 = vmatmul.mubr.f32.gmra.mxu0 %v3324
        %v3551 = vpop.f32.mrf.mxu0
        %v3552 = vadd.f32 %v3369, %v3551
        %v3553 = vpop.f32.mrf.mxu0
        %3554 = vmatprep.mubr.f32.mxu0 %v3393
        %3555 = vmatmul.mubr.f32.gmra.mxu0 %v3325
        %v3556 = vpop.f32.mrf.mxu0
        %v3557 = vadd.f32 %v3369, %v3556
        %v3558 = vpop.f32.mrf.mxu0
        %3559 = vmatprep.mubr.f32.mxu0 %v3395
        %3560 = vmatmul.mubr.f32.gmra.mxu0 %v3326
        %v3561 = vpop.f32.mrf.mxu0
        %v3562 = vadd.f32 %v3369, %v3561
        %v3563 = vpop.f32.mrf.mxu0
        %3564 = vmatprep.mubr.f32.mxu0 %v3397
        %3565 = vmatmul.mubr.f32.gmra.mxu0 %v3327
        %v3566 = vpop.f32.mrf.mxu0
        %v3567 = vadd.f32 %v3369, %v3566
        %v3568 = vpop.f32.mrf.mxu0
        %3569 = vmatprep.mubr.f32.mxu0 %v3399
        %3570 = vmatmul.mubr.f32.gmra.mxu0 %v3328
        %v3571 = vpop.f32.mrf.mxu0
        %v3572 = vadd.f32 %v3369, %v3571
        %v3573 = vpop.f32.mrf.mxu0
        %3574 = vmatprep.mubr.f32.mxu0 %v3401
        %3575 = vmatmul.mubr.f32.gmra.mxu0 %v3329
        %v3576 = vpop.f32.mrf.mxu0
        %v3577 = vadd.f32 %v3369, %v3576
        %v3578 = vpop.f32.mrf.mxu0
        %3579 = vmatprep.mubr.f32.mxu0 %v3403
        %3580 = vmatmul.mubr.f32.gmra.mxu0 %v3330
        %v3581 = vpop.f32.mrf.mxu0
        %v3582 = vadd.f32 %v3369, %v3581
        %v3583 = vpop.f32.mrf.mxu0
        %3584 = vmatprep.mubr.f32.mxu0 %v3405
        %3585 = vmatmul.mubr.f32.gmra.mxu0 %v3331
        %v3586 = vpop.f32.mrf.mxu0
        %v3587 = vadd.f32 %v3369, %v3586
        %v3588 = vpop.f32.mrf.mxu0
        %3589 = vmatprep.mubr.f32.mxu0 %v3407
        %3590 = vmatmul.mubr.f32.gmra.mxu0 %v3332
        %v3591 = vpop.f32.mrf.mxu0
        %v3592 = vadd.f32 %v3369, %v3591
        %v3593 = vpop.f32.mrf.mxu0
        %3594 = vmatprep.mubr.f32.mxu0 %v3409
        %3595 = vmatmul.mubr.f32.gmra.mxu0 %v3333
        %v3596 = vpop.f32.mrf.mxu0
        %v3597 = vadd.f32 %v3369, %v3596
        %v3598 = vpop.f32.mrf.mxu0
        %3599 = vmatprep.mubr.f32.mxu0 %v3411
        %3600 = vmatmul.mubr.f32.gmra.mxu0 %v3334
        %v3601 = vpop.f32.mrf.mxu0
        %v3602 = vadd.f32 %v3369, %v3601
        %v3603 = vpop.f32.mrf.mxu0
        %3604 = vmatprep.mubr.f32.mxu0 %v3413
        %3605 = vmatmul.mubr.f32.gmra.mxu0 %v3335
        %v3606 = vpop.f32.mrf.mxu0
        %v3607 = vadd.f32 %v3369, %v3606
        %v3608 = vpop.f32.mrf.mxu0
        %3609 = vmatprep.mubr.f32.mxu0 %v3415
        %3610 = vmatmul.mubr.f32.gmra.mxu0 %v3336
        %v3611 = vpop.f32.mrf.mxu0
        %v3612 = vadd.f32 %v3369, %v3611
        %v3613 = vpop.f32.mrf.mxu0
        %3614 = vmatprep.mubr.f32.mxu0 %v3417
        %3615 = vmatmul.mubr.f32.gmra.mxu0 %v3337
        %v3616 = vpop.f32.mrf.mxu0
        %v3617 = vadd.f32 %v3369, %v3616
        %v3618 = vpop.f32.mrf.mxu0
        %3619 = vmatprep.mubr.f32.mxu0 %v3419
        %3620 = vmatmul.mubr.f32.gmra.mxu0 %v3338
        %v3621 = vpop.f32.mrf.mxu0
        %v3622 = vadd.f32 %v3369, %v3621
        %v3623 = vpop.f32.mrf.mxu0
        %3624 = vmatprep.mubr.f32.mxu0 %v3421
        %3625 = vmatmul.mubr.f32.gmra.mxu0 %v3339
        %v3626 = vpop.f32.mrf.mxu0
        %v3627 = vadd.f32 %v3369, %v3626
        %v3628 = vpop.f32.mrf.mxu0
        %3629 = vmatprep.mubr.f32.mxu0 %v3423
        %3630 = vmatmul.mubr.f32.gmra.mxu0 %v3340
        %v3631 = vpop.f32.mrf.mxu0
        %v3632 = vadd.f32 %v3369, %v3631
        %v3633 = vpop.f32.mrf.mxu0
        %3634 = vmatprep.mubr.f32.mxu0 %v3425
        %3635 = vmatmul.mubr.f32.gmra.mxu0 %v3341
        %v3636 = vpop.f32.mrf.mxu0
        %v3637 = vadd.f32 %v3369, %v3636
        %v3638 = vpop.f32.mrf.mxu0
        %3639 = vmatprep.mubr.f32.mxu0 %v3427
        %3640 = vmatmul.mubr.f32.gmra.mxu0 %v3342
        %v3641 = vpop.f32.mrf.mxu0
        %v3642 = vadd.f32 %v3369, %v3641
        %v3643 = vpop.f32.mrf.mxu0
        %3644 = vmatprep.mubr.f32.mxu0 %v3429
        %3645 = vmatmul.mubr.f32.gmra.mxu0 %v3343
        %v3646 = vpop.f32.mrf.mxu0
        %v3647 = vadd.f32 %v3369, %v3646
        %v3648 = vpop.f32.mrf.mxu0
        %3649 = vmatprep.mubr.f32.mxu0 %v3431
        %3650 = vmatmul.mubr.f32.gmra.mxu0 %v3344
        %v3651 = vpop.f32.mrf.mxu0
        %v3652 = vadd.f32 %v3369, %v3651
        %v3653 = vpop.f32.mrf.mxu0
        %3654 = vmatprep.mubr.f32.mxu0 %v3433
        %3655 = vmatmul.mubr.f32.gmra.mxu0 %v3345
        %v3656 = vpop.f32.mrf.mxu0
        %v3657 = vadd.f32 %v3369, %v3656
        %v3658 = vpop.f32.mrf.mxu0
        %3659 = vdwg.mxu0
        %v3660 = vmax.f32 %v3502, 0.0
        %v3661 = vmax.f32 %v3507, 0.0
        %v3662 = vmax.f32 %v3512, 0.0
        %v3663 = vmax.f32 %v3517, 0.0
        %v3664 = vmax.f32 %v3522, 0.0
        %v3665 = vmax.f32 %v3527, 0.0
        %v3666 = vmax.f32 %v3532, 0.0
        %v3667 = vmax.f32 %v3537, 0.0
        %v3668 = vmax.f32 %v3542, 0.0
        %v3669 = vmax.f32 %v3547, 0.0
        %v3670 = vmax.f32 %v3552, 0.0
        %v3671 = vmax.f32 %v3557, 0.0
        %v3672 = vmax.f32 %v3562, 0.0
        %v3673 = vmax.f32 %v3567, 0.0
        %v3674 = vmax.f32 %v3572, 0.0
        %v3675 = vmax.f32 %v3577, 0.0
        %v3676 = vmax.f32 %v3582, 0.0
        %v3677 = vmax.f32 %v3587, 0.0
        %v3678 = vmax.f32 %v3592, 0.0
        %v3679 = vmax.f32 %v3597, 0.0
        %v3680 = vmax.f32 %v3602, 0.0
        %v3681 = vmax.f32 %v3607, 0.0
        %v3682 = vmax.f32 %v3612, 0.0
        %v3683 = vmax.f32 %v3617, 0.0
        %v3684 = vmax.f32 %v3622, 0.0
        %v3685 = vmax.f32 %v3627, 0.0
        %v3686 = vmax.f32 %v3632, 0.0
        %v3687 = vmax.f32 %v3637, 0.0
        %v3688 = vmax.f32 %v3642, 0.0
        %v3689 = vmax.f32 %v3647, 0.0
        %v3690 = vmax.f32 %v3652, 0.0
        %v3691 = vmax.f32 %v3657, 0.0
        %v3692 = vld [vmem:[%s5] sm:$0xff]
        %v3693 = vld [vmem:[%s6] sm:$0x1]
        %v3695 = vlaneseq
        %v3696 = vshrl.u32 %v3695, 7
        %v3697 = vsub.s32 0, %v3696
        %v3698 = vrot.slane %v3693, %v3697
        %vm3700 = vcmask 64512
        %v3702 = vsel %vm3700, %v3660, 0
        %v3705 = vsel %vm3700, %v3661, 0
        %v3708 = vsel %vm3700, %v3662, 0
        %v3711 = vsel %vm3700, %v3663, 0
        %v3714 = vsel %vm3700, %v3664, 0
        %v3717 = vsel %vm3700, %v3665, 0
        %v3720 = vsel %vm3700, %v3666, 0
        %v3723 = vsel %vm3700, %v3667, 0
        %v3726 = vsel %vm3700, %v3668, 0
        %v3729 = vsel %vm3700, %v3669, 0
        %v3732 = vsel %vm3700, %v3670, 0
        %v3735 = vsel %vm3700, %v3671, 0
        %v3738 = vsel %vm3700, %v3672, 0
        %v3741 = vsel %vm3700, %v3673, 0
        %v3744 = vsel %vm3700, %v3674, 0
        %v3747 = vsel %vm3700, %v3675, 0
        %v3750 = vsel %vm3700, %v3676, 0
        %v3753 = vsel %vm3700, %v3677, 0
        %v3756 = vsel %vm3700, %v3678, 0
        %v3759 = vsel %vm3700, %v3679, 0
        %v3762 = vsel %vm3700, %v3680, 0
        %v3765 = vsel %vm3700, %v3681, 0
        %v3768 = vsel %vm3700, %v3682, 0
        %v3771 = vsel %vm3700, %v3683, 0
        %v3774 = vsel %vm3700, %v3684, 0
        %v3777 = vsel %vm3700, %v3685, 0
        %v3780 = vsel %vm3700, %v3686, 0
        %v3783 = vsel %vm3700, %v3687, 0
        %v3786 = vsel %vm3700, %v3688, 0
        %v3789 = vsel %vm3700, %v3689, 0
        %v3792 = vsel %vm3700, %v3690, 0
        %v3795 = vsel %vm3700, %v3691, 0
        %3797 = vmatprep.subr.mxu0 0.0
        %3798 = vmatpush1.msra.mxu0 0.0
        %3799 = vmatprep.subr.mxu0 0.0
        %3800 = vmatpush1.msra.mxu0 0.0
        %3801 = vmatprep.subr.mxu0 0.0
        %3802 = vmatpush1.msra.mxu0 0.0
        %3803 = vmatprep.subr.mxu0 0.0
        %3804 = vmatpush1.msra.mxu0 0.0
        %3805 = vmatprep.subr.mxu0 0.0
        %3806 = vmatpush1.msra.mxu0 0.0
        %3807 = vmatprep.subr.mxu0 0.0
        %3808 = vmatpush1.msra.mxu0 0.0
        %3809 = vmatprep.subr.mxu0 0.0
        %3810 = vmatpush1.msra.mxu0 0.0
        %3811 = vmatprep.subr.mxu0 0.0
        %3812 = vmatpush1.msra.mxu0 0.0
        %3813 = vmatprep.subr.mxu0 0.0
        %3814 = vmatpush1.msra.mxu0 0.0
        %3815 = vmatprep.subr.mxu0 0.0
        %3816 = vmatpush1.msra.mxu0 0.0
        %3817 = vmatprep.subr.mxu0 0.0
        %3818 = vmatpush1.msra.mxu0 0.0
        %3819 = vmatprep.subr.mxu0 0.0
        %3820 = vmatpush1.msra.mxu0 0.0
        %3821 = vmatprep.subr.mxu0 0.0
        %3822 = vmatpush1.msra.mxu0 0.0
        %3823 = vmatprep.subr.mxu0 0.0
        %3824 = vmatpush1.msra.mxu0 0.0
        %3825 = vmatprep.subr.mxu0 0.0
        %3826 = vmatpush1.msra.mxu0 0.0
        %3827 = vmatprep.subr.mxu0 0.0
        %3828 = vmatpush1.msra.mxu0 %v3692
        %3829 = vmatprep.subr.mxu0 0.0
        %3830 = vmatpush2.msra.mxu0 0.0
        %3831 = vmatprep.subr.mxu0 0.0
        %3832 = vmatpush2.msra.mxu0 0.0
        %3833 = vmatprep.subr.mxu0 0.0
        %3834 = vmatpush2.msra.mxu0 0.0
        %3835 = vmatprep.subr.mxu0 0.0
        %3836 = vmatpush2.msra.mxu0 0.0
        %3837 = vmatprep.subr.mxu0 0.0
        %3838 = vmatpush2.msra.mxu0 0.0
        %3839 = vmatprep.subr.mxu0 0.0
        %3840 = vmatpush2.msra.mxu0 0.0
        %3841 = vmatprep.subr.mxu0 0.0
        %3842 = vmatpush2.msra.mxu0 0.0
        %3843 = vmatprep.subr.mxu0 0.0
        %3844 = vmatpush2.msra.mxu0 0.0
        %3845 = vmatprep.subr.mxu0 0.0
        %3846 = vmatpush2.msra.mxu0 0.0
        %3847 = vmatprep.subr.mxu0 0.0
        %3848 = vmatpush2.msra.mxu0 0.0
        %3849 = vmatprep.subr.mxu0 0.0
        %3850 = vmatpush2.msra.mxu0 0.0
        %3851 = vmatprep.subr.mxu0 0.0
        %3852 = vmatpush2.msra.mxu0 0.0
        %3853 = vmatprep.subr.mxu0 0.0
        %3854 = vmatpush2.msra.mxu0 0.0
        %3855 = vmatprep.subr.mxu0 0.0
        %3856 = vmatpush2.msra.mxu0 0.0
        %3857 = vmatprep.subr.mxu0 0.0
        %3858 = vmatpush2.msra.mxu0 0.0
        %3859 = vmatprep.subr.mxu0 0.0
        %3860 = vmatpush2.msra.mxu0 0.0
        %3861 = vmatprep.mubr.f32.mxu0 0.0
        %3862 = vmatmul.mubr.f32.gmra.mxu0 %v3702
        %v3863 = vpop.f32.mrf.mxu0
        %v3864 = vadd.f32 %v3698, %v3863
        %v3865 = vpop.f32.mrf.mxu0
        %3866 = vmatprep.mubr.f32.mxu0 0.0
        %3867 = vmatmul.mubr.f32.gmra.mxu0 %v3705
        %v3868 = vpop.f32.mrf.mxu0
        %v3869 = vadd.f32 %v3698, %v3868
        %v3870 = vpop.f32.mrf.mxu0
        %3871 = vmatprep.mubr.f32.mxu0 0.0
        %3872 = vmatmul.mubr.f32.gmra.mxu0 %v3708
        %v3873 = vpop.f32.mrf.mxu0
        %v3874 = vadd.f32 %v3698, %v3873
        %v3875 = vpop.f32.mrf.mxu0
        %3876 = vmatprep.mubr.f32.mxu0 0.0
        %3877 = vmatmul.mubr.f32.gmra.mxu0 %v3711
        %v3878 = vpop.f32.mrf.mxu0
        %v3879 = vadd.f32 %v3698, %v3878
        %v3880 = vpop.f32.mrf.mxu0
        %3881 = vmatprep.mubr.f32.mxu0 0.0
        %3882 = vmatmul.mubr.f32.gmra.mxu0 %v3714
        %v3883 = vpop.f32.mrf.mxu0
        %v3884 = vadd.f32 %v3698, %v3883
        %v3885 = vpop.f32.mrf.mxu0
        %3886 = vmatprep.mubr.f32.mxu0 0.0
        %3887 = vmatmul.mubr.f32.gmra.mxu0 %v3717
        %v3888 = vpop.f32.mrf.mxu0
        %v3889 = vadd.f32 %v3698, %v3888
        %v3890 = vpop.f32.mrf.mxu0
        %3891 = vmatprep.mubr.f32.mxu0 0.0
        %3892 = vmatmul.mubr.f32.gmra.mxu0 %v3720
        %v3893 = vpop.f32.mrf.mxu0
        %v3894 = vadd.f32 %v3698, %v3893
        %v3895 = vpop.f32.mrf.mxu0
        %3896 = vmatprep.mubr.f32.mxu0 0.0
        %3897 = vmatmul.mubr.f32.gmra.mxu0 %v3723
        %v3898 = vpop.f32.mrf.mxu0
        %v3899 = vadd.f32 %v3698, %v3898
        %v3900 = vpop.f32.mrf.mxu0
        %3901 = vmatprep.mubr.f32.mxu0 0.0
        %3902 = vmatmul.mubr.f32.gmra.mxu0 %v3726
        %v3903 = vpop.f32.mrf.mxu0
        %v3904 = vadd.f32 %v3698, %v3903
        %v3905 = vpop.f32.mrf.mxu0
        %3906 = vmatprep.mubr.f32.mxu0 0.0
        %3907 = vmatmul.mubr.f32.gmra.mxu0 %v3729
        %v3908 = vpop.f32.mrf.mxu0
        %v3909 = vadd.f32 %v3698, %v3908
        %v3910 = vpop.f32.mrf.mxu0
        %3911 = vmatprep.mubr.f32.mxu0 0.0
        %3912 = vmatmul.mubr.f32.gmra.mxu0 %v3732
        %v3913 = vpop.f32.mrf.mxu0
        %v3914 = vadd.f32 %v3698, %v3913
        %v3915 = vpop.f32.mrf.mxu0
        %3916 = vmatprep.mubr.f32.mxu0 0.0
        %3917 = vmatmul.mubr.f32.gmra.mxu0 %v3735
        %v3918 = vpop.f32.mrf.mxu0
        %v3919 = vadd.f32 %v3698, %v3918
        %v3920 = vpop.f32.mrf.mxu0
        %3921 = vmatprep.mubr.f32.mxu0 0.0
        %3922 = vmatmul.mubr.f32.gmra.mxu0 %v3738
        %v3923 = vpop.f32.mrf.mxu0
        %v3924 = vadd.f32 %v3698, %v3923
        %v3925 = vpop.f32.mrf.mxu0
        %3926 = vmatprep.mubr.f32.mxu0 0.0
        %3927 = vmatmul.mubr.f32.gmra.mxu0 %v3741
        %v3928 = vpop.f32.mrf.mxu0
        %v3929 = vadd.f32 %v3698, %v3928
        %v3930 = vpop.f32.mrf.mxu0
        %3931 = vmatprep.mubr.f32.mxu0 0.0
        %3932 = vmatmul.mubr.f32.gmra.mxu0 %v3744
        %v3933 = vpop.f32.mrf.mxu0
        %v3934 = vadd.f32 %v3698, %v3933
        %v3935 = vpop.f32.mrf.mxu0
        %3936 = vmatprep.mubr.f32.mxu0 0.0
        %3937 = vmatmul.mubr.f32.gmra.mxu0 %v3747
        %v3938 = vpop.f32.mrf.mxu0
        %v3939 = vadd.f32 %v3698, %v3938
        %v3940 = vpop.f32.mrf.mxu0
        %3941 = vmatprep.mubr.f32.mxu0 0.0
        %3942 = vmatmul.mubr.f32.gmra.mxu0 %v3750
        %v3943 = vpop.f32.mrf.mxu0
        %v3944 = vadd.f32 %v3698, %v3943
        %v3945 = vpop.f32.mrf.mxu0
        %3946 = vmatprep.mubr.f32.mxu0 0.0
        %3947 = vmatmul.mubr.f32.gmra.mxu0 %v3753
        %v3948 = vpop.f32.mrf.mxu0
        %v3949 = vadd.f32 %v3698, %v3948
        %v3950 = vpop.f32.mrf.mxu0
        %3951 = vmatprep.mubr.f32.mxu0 0.0
        %3952 = vmatmul.mubr.f32.gmra.mxu0 %v3756
        %v3953 = vpop.f32.mrf.mxu0
        %v3954 = vadd.f32 %v3698, %v3953
        %v3955 = vpop.f32.mrf.mxu0
        %3956 = vmatprep.mubr.f32.mxu0 0.0
        %3957 = vmatmul.mubr.f32.gmra.mxu0 %v3759
        %v3958 = vpop.f32.mrf.mxu0
        %v3959 = vadd.f32 %v3698, %v3958
        %v3960 = vpop.f32.mrf.mxu0
        %3961 = vmatprep.mubr.f32.mxu0 0.0
        %3962 = vmatmul.mubr.f32.gmra.mxu0 %v3762
        %v3963 = vpop.f32.mrf.mxu0
        %v3964 = vadd.f32 %v3698, %v3963
        %v3965 = vpop.f32.mrf.mxu0
        %3966 = vmatprep.mubr.f32.mxu0 0.0
        %3967 = vmatmul.mubr.f32.gmra.mxu0 %v3765
        %v3968 = vpop.f32.mrf.mxu0
        %v3969 = vadd.f32 %v3698, %v3968
        %v3970 = vpop.f32.mrf.mxu0
        %3971 = vmatprep.mubr.f32.mxu0 0.0
        %3972 = vmatmul.mubr.f32.gmra.mxu0 %v3768
        %v3973 = vpop.f32.mrf.mxu0
        %v3974 = vadd.f32 %v3698, %v3973
        %v3975 = vpop.f32.mrf.mxu0
        %3976 = vmatprep.mubr.f32.mxu0 0.0
        %3977 = vmatmul.mubr.f32.gmra.mxu0 %v3771
        %v3978 = vpop.f32.mrf.mxu0
        %v3979 = vadd.f32 %v3698, %v3978
        %v3980 = vpop.f32.mrf.mxu0
        %3981 = vmatprep.mubr.f32.mxu0 0.0
        %3982 = vmatmul.mubr.f32.gmra.mxu0 %v3774
        %v3983 = vpop.f32.mrf.mxu0
        %v3984 = vadd.f32 %v3698, %v3983
        %v3985 = vpop.f32.mrf.mxu0
        %3986 = vmatprep.mubr.f32.mxu0 0.0
        %3987 = vmatmul.mubr.f32.gmra.mxu0 %v3777
        %v3988 = vpop.f32.mrf.mxu0
        %v3989 = vadd.f32 %v3698, %v3988
        %v3990 = vpop.f32.mrf.mxu0
        %3991 = vmatprep.mubr.f32.mxu0 0.0
        %3992 = vmatmul.mubr.f32.gmra.mxu0 %v3780
        %v3993 = vpop.f32.mrf.mxu0
        %v3994 = vadd.f32 %v3698, %v3993
        %v3995 = vpop.f32.mrf.mxu0
        %3996 = vmatprep.mubr.f32.mxu0 0.0
        %3997 = vmatmul.mubr.f32.gmra.mxu0 %v3783
        %v3998 = vpop.f32.mrf.mxu0
        %v3999 = vadd.f32 %v3698, %v3998
        %v4000 = vpop.f32.mrf.mxu0
        %4001 = vmatprep.mubr.f32.mxu0 0.0
        %4002 = vmatmul.mubr.f32.gmra.mxu0 %v3786
        %v4003 = vpop.f32.mrf.mxu0
        %v4004 = vadd.f32 %v3698, %v4003
        %v4005 = vpop.f32.mrf.mxu0
        %4006 = vmatprep.mubr.f32.mxu0 0.0
        %4007 = vmatmul.mubr.f32.gmra.mxu0 %v3789
        %v4008 = vpop.f32.mrf.mxu0
        %v4009 = vadd.f32 %v3698, %v4008
        %v4010 = vpop.f32.mrf.mxu0
        %4011 = vmatprep.mubr.f32.mxu0 0.0
        %4012 = vmatmul.mubr.f32.gmra.mxu0 %v3792
        %v4013 = vpop.f32.mrf.mxu0
        %v4014 = vadd.f32 %v3698, %v4013
        %v4015 = vpop.f32.mrf.mxu0
        %4016 = vmatprep.mubr.f32.mxu0 0.0
        %4017 = vmatmul.mubr.f32.gmra.mxu0 %v3795
        %v4018 = vpop.f32.mrf.mxu0
        %v4019 = vadd.f32 %v3698, %v4018
        %v4020 = vpop.f32.mrf.mxu0
        %4021 = vdwg.mxu0
        %4022 = vst.msk [vmem:[#allocation3] sm:$0xff] %vm3700, 0.0
        %4023 = vst.msk [vmem:[#allocation3 + $0x8] sm:$0xff] %vm3700, 0.0
        %vm4024 = vcmask 58368
        %4025 = vst.msk [vmem:[#allocation3 + $0x10] sm:$0x3] %vm4024, 0.0
        %4026 = vst.msk [vmem:[#allocation3 + $0x18] sm:$0xff] %vm3700, 0.0
        %4027 = vst.msk [vmem:[#allocation3 + $0x20] sm:$0xff] %vm3700, 0.0
        %4028 = vst.msk [vmem:[#allocation3 + $0x28] sm:$0x3] %vm4024, 0.0
        %4029 = vst.msk [vmem:[#allocation3 + $0x30] sm:$0xff] %vm3700, 0.0
        %4030 = vst.msk [vmem:[#allocation3 + $0x38] sm:$0xff] %vm3700, 0.0
        %4031 = vst.msk [vmem:[#allocation3 + $0x40] sm:$0x3] %vm4024, 0.0
        %4032 = vst.msk [vmem:[#allocation3 + $0x48] sm:$0xff] %vm3700, 0.0
        %4033 = vst.msk [vmem:[#allocation3 + $0x50] sm:$0xff] %vm3700, 0.0
        %4034 = vst.msk [vmem:[#allocation3 + $0x58] sm:$0x3] %vm4024, 0.0
        %4035 = vst.msk [vmem:[#allocation3 + $0x60] sm:$0xff] %vm3700, 0.0
        %4036 = vst.msk [vmem:[#allocation3 + $0x68] sm:$0xff] %vm3700, 0.0
        %4037 = vst.msk [vmem:[#allocation3 + $0x70] sm:$0x3] %vm4024, 0.0
        %4038 = vst.msk [vmem:[#allocation3 + $0x78] sm:$0xff] %vm3700, 0.0
        %4039 = vst.msk [vmem:[#allocation3 + $0x80] sm:$0xff] %vm3700, 0.0
        %4040 = vst.msk [vmem:[#allocation3 + $0x88] sm:$0x3] %vm4024, 0.0
        %4041 = vst.msk [vmem:[#allocation3 + $0x90] sm:$0xff] %vm3700, 0.0
        %4042 = vst.msk [vmem:[#allocation3 + $0x98] sm:$0xff] %vm3700, 0.0
        %4043 = vst.msk [vmem:[#allocation3 + $0xa0] sm:$0x3] %vm4024, 0.0
        %4044 = vst.msk [vmem:[#allocation3 + $0xa8] sm:$0xff] %vm3700, 0.0
        %4045 = vst.msk [vmem:[#allocation3 + $0xb0] sm:$0xff] %vm3700, 0.0
        %4046 = vst.msk [vmem:[#allocation3 + $0xb8] sm:$0x3] %vm4024, 0.0
        %4047 = vst.msk [vmem:[#allocation3 + $0xc0] sm:$0xff] %vm3700, 0.0
        %4048 = vst.msk [vmem:[#allocation3 + $0xc8] sm:$0xff] %vm3700, 0.0
        %4049 = vst.msk [vmem:[#allocation3 + $0xd0] sm:$0x3] %vm4024, 0.0
        %4050 = vst.msk [vmem:[#allocation3 + $0xd8] sm:$0xff] %vm3700, 0.0
        %4051 = vst.msk [vmem:[#allocation3 + $0xe0] sm:$0xff] %vm3700, 0.0
        %4052 = vst.msk [vmem:[#allocation3 + $0xe8] sm:$0x3] %vm4024, 0.0
        %4053 = vst.msk [vmem:[#allocation3 + $0xf0] sm:$0xff] %vm3700, 0.0
        %4054 = vst.msk [vmem:[#allocation3 + $0xf8] sm:$0xff] %vm3700, 0.0
        %4055 = vst.msk [vmem:[#allocation3 + $0x100] sm:$0x3] %vm4024, 0.0
        %4056 = vst.msk [vmem:[#allocation3 + $0x108] sm:$0xff] %vm3700, 0.0
        %4057 = vst.msk [vmem:[#allocation3 + $0x110] sm:$0xff] %vm3700, 0.0
        %4058 = vst.msk [vmem:[#allocation3 + $0x118] sm:$0x3] %vm4024, 0.0
        %4059 = vst.msk [vmem:[#allocation3 + $0x120] sm:$0xff] %vm3700, 0.0
        %4060 = vst.msk [vmem:[#allocation3 + $0x128] sm:$0xff] %vm3700, 0.0
        %4061 = vst.msk [vmem:[#allocation3 + $0x130] sm:$0x3] %vm4024, 0.0
        %4062 = vst.msk [vmem:[#allocation3 + $0x138] sm:$0xff] %vm3700, 0.0
        %4063 = vst.msk [vmem:[#allocation3 + $0x140] sm:$0xff] %vm3700, 0.0
        %4064 = vst.msk [vmem:[#allocation3 + $0x148] sm:$0x3] %vm4024, 0.0
        %4065 = vst.msk [vmem:[#allocation3 + $0x150] sm:$0xff] %vm3700, 0.0
        %4066 = vst.msk [vmem:[#allocation3 + $0x158] sm:$0xff] %vm3700, 0.0
        %4067 = vst.msk [vmem:[#allocation3 + $0x160] sm:$0x3] %vm4024, 0.0
        %4068 = vst.msk [vmem:[#allocation3 + $0x168] sm:$0xff] %vm3700, 0.0
        %4069 = vst.msk [vmem:[#allocation3 + $0x170] sm:$0xff] %vm3700, 0.0
        %4070 = vst.msk [vmem:[#allocation3 + $0x178] sm:$0x3] %vm4024, 0.0
        %4071 = vst.msk [vmem:[#allocation3 + $0x180] sm:$0xff] %vm3700, 0.0
        %4072 = vst.msk [vmem:[#allocation3 + $0x188] sm:$0xff] %vm3700, 0.0
        %4073 = vst.msk [vmem:[#allocation3 + $0x190] sm:$0x3] %vm4024, 0.0
        %4074 = vst.msk [vmem:[#allocation3 + $0x198] sm:$0xff] %vm3700, 0.0
        %4075 = vst.msk [vmem:[#allocation3 + $0x1a0] sm:$0xff] %vm3700, 0.0
        %4076 = vst.msk [vmem:[#allocation3 + $0x1a8] sm:$0x3] %vm4024, 0.0
        %s4077 = scalar_lea.vmem [#allocation3], 24
        %4078 = vst.msk [vmem:[%s4077 + $0x1] sm:$0xff] %vm3700, %v3864
        %4079 = vst.msk [vmem:[%s4077 + $0x9] sm:$0xff] %vm3700, %v3869
        %4080 = vst.msk [vmem:[%s4077 + $0x19] sm:$0xff] %vm3700, %v3874
        %4081 = vst.msk [vmem:[%s4077 + $0x21] sm:$0xff] %vm3700, %v3879
        %4082 = vst.msk [vmem:[%s4077 + $0x31] sm:$0xff] %vm3700, %v3884
        %4083 = vst.msk [vmem:[%s4077 + $0x39] sm:$0xff] %vm3700, %v3889
        %4084 = vst.msk [vmem:[%s4077 + $0x49] sm:$0xff] %vm3700, %v3894
        %4085 = vst.msk [vmem:[%s4077 + $0x51] sm:$0xff] %vm3700, %v3899
        %4086 = vst.msk [vmem:[%s4077 + $0x61] sm:$0xff] %vm3700, %v3904
        %4087 = vst.msk [vmem:[%s4077 + $0x69] sm:$0xff] %vm3700, %v3909
        %4088 = vst.msk [vmem:[%s4077 + $0x79] sm:$0xff] %vm3700, %v3914
        %4089 = vst.msk [vmem:[%s4077 + $0x81] sm:$0xff] %vm3700, %v3919
        %4090 = vst.msk [vmem:[%s4077 + $0x91] sm:$0xff] %vm3700, %v3924
        %4091 = vst.msk [vmem:[%s4077 + $0x99] sm:$0xff] %vm3700, %v3929
        %4092 = vst.msk [vmem:[%s4077 + $0xa9] sm:$0xff] %vm3700, %v3934
        %4093 = vst.msk [vmem:[%s4077 + $0xb1] sm:$0xff] %vm3700, %v3939
        %4094 = vst.msk [vmem:[%s4077 + $0xc1] sm:$0xff] %vm3700, %v3944
        %4095 = vst.msk [vmem:[%s4077 + $0xc9] sm:$0xff] %vm3700, %v3949
        %4096 = vst.msk [vmem:[%s4077 + $0xd9] sm:$0xff] %vm3700, %v3954
        %4097 = vst.msk [vmem:[%s4077 + $0xe1] sm:$0xff] %vm3700, %v3959
        %4098 = vst.msk [vmem:[%s4077 + $0xf1] sm:$0xff] %vm3700, %v3964
        %4099 = vst.msk [vmem:[%s4077 + $0xf9] sm:$0xff] %vm3700, %v3969
        %4100 = vst.msk [vmem:[%s4077 + $0x109] sm:$0xff] %vm3700, %v3974
        %4101 = vst.msk [vmem:[%s4077 + $0x111] sm:$0xff] %vm3700, %v3979
        %4102 = vst.msk [vmem:[%s4077 + $0x121] sm:$0xff] %vm3700, %v3984
        %4103 = vst.msk [vmem:[%s4077 + $0x129] sm:$0xff] %vm3700, %v3989
        %4104 = vst.msk [vmem:[%s4077 + $0x139] sm:$0xff] %vm3700, %v3994
        %4105 = vst.msk [vmem:[%s4077 + $0x141] sm:$0xff] %vm3700, %v3999
        %4106 = vst.msk [vmem:[%s4077 + $0x151] sm:$0xff] %vm3700, %v4004
        %4107 = vst.msk [vmem:[%s4077 + $0x159] sm:$0xff] %vm3700, %v4009
        %4108 = vst.msk [vmem:[%s4077 + $0x169] sm:$0xff] %vm3700, %v4014
        %4109 = vst.msk [vmem:[%s4077 + $0x171] sm:$0xff] %vm3700, %v4019
        %v4110 = vld [vmem:[#allocation3] sm:$0xff]
        %v4111 = vld [vmem:[#allocation3 + $0x8] sm:$0xff]
        %v4112 = vld [vmem:[#allocation3 + $0x10] sm:$0x3]
        %v4113 = vld [vmem:[#allocation3 + $0x18] sm:$0xff]
        %v4114 = vld [vmem:[#allocation3 + $0x20] sm:$0xff]
        %v4115 = vld [vmem:[#allocation3 + $0x28] sm:$0x3]
        %v4116 = vld [vmem:[#allocation3 + $0x30] sm:$0xff]
        %v4117 = vld [vmem:[#allocation3 + $0x38] sm:$0xff]
        %v4118 = vld [vmem:[#allocation3 + $0x40] sm:$0x3]
        %v4119 = vld [vmem:[#allocation3 + $0x48] sm:$0xff]
        %v4120 = vld [vmem:[#allocation3 + $0x50] sm:$0xff]
        %v4121 = vld [vmem:[#allocation3 + $0x58] sm:$0x3]
        %v4122 = vld [vmem:[#allocation3 + $0x60] sm:$0xff]
        %v4123 = vld [vmem:[#allocation3 + $0x68] sm:$0xff]
        %v4124 = vld [vmem:[#allocation3 + $0x70] sm:$0x3]
        %v4125 = vld [vmem:[#allocation3 + $0x78] sm:$0xff]
        %v4126 = vld [vmem:[#allocation3 + $0x80] sm:$0xff]
        %v4127 = vld [vmem:[#allocation3 + $0x88] sm:$0x3]
        %v4128 = vld [vmem:[#allocation3 + $0x90] sm:$0xff]
        %v4129 = vld [vmem:[#allocation3 + $0x98] sm:$0xff]
        %v4130 = vld [vmem:[#allocation3 + $0xa0] sm:$0x3]
        %v4131 = vld [vmem:[#allocation3 + $0xa8] sm:$0xff]
        %v4132 = vld [vmem:[#allocation3 + $0xb0] sm:$0xff]
        %v4133 = vld [vmem:[#allocation3 + $0xb8] sm:$0x3]
        %v4134 = vld [vmem:[#allocation3 + $0xc0] sm:$0xff]
        %v4135 = vld [vmem:[#allocation3 + $0xc8] sm:$0xff]
        %v4136 = vld [vmem:[#allocation3 + $0xd0] sm:$0x3]
        %v4137 = vld [vmem:[#allocation3 + $0xd8] sm:$0xff]
        %v4138 = vld [vmem:[#allocation3 + $0xe0] sm:$0xff]
        %v4139 = vld [vmem:[#allocation3 + $0xe8] sm:$0x3]
        %v4140 = vld [vmem:[#allocation3 + $0xf0] sm:$0xff]
        %v4141 = vld [vmem:[#allocation3 + $0xf8] sm:$0xff]
        %v4142 = vld [vmem:[#allocation3 + $0x100] sm:$0x3]
        %v4143 = vld [vmem:[#allocation3 + $0x108] sm:$0xff]
        %v4144 = vld [vmem:[#allocation3 + $0x110] sm:$0xff]
        %v4145 = vld [vmem:[#allocation3 + $0x118] sm:$0x3]
        %v4146 = vld [vmem:[#allocation3 + $0x120] sm:$0xff]
        %v4147 = vld [vmem:[#allocation3 + $0x128] sm:$0xff]
        %v4148 = vld [vmem:[#allocation3 + $0x130] sm:$0x3]
        %v4149 = vld [vmem:[#allocation3 + $0x138] sm:$0xff]
        %v4150 = vld [vmem:[#allocation3 + $0x140] sm:$0xff]
        %v4151 = vld [vmem:[#allocation3 + $0x148] sm:$0x3]
        %v4152 = vld [vmem:[#allocation3 + $0x150] sm:$0xff]
        %v4153 = vld [vmem:[#allocation3 + $0x158] sm:$0xff]
        %v4154 = vld [vmem:[#allocation3 + $0x160] sm:$0x3]
        %v4155 = vld [vmem:[#allocation3 + $0x168] sm:$0xff]
        %v4156 = vld [vmem:[#allocation3 + $0x170] sm:$0xff]
        %v4157 = vld [vmem:[#allocation3 + $0x178] sm:$0x3]
        %v4158 = vld [vmem:[#allocation3 + $0x180] sm:$0xff]
        %v4159 = vld [vmem:[#allocation3 + $0x188] sm:$0xff]
        %v4160 = vld [vmem:[#allocation3 + $0x190] sm:$0x3]
        %v4161 = vld [vmem:[#allocation3 + $0x198] sm:$0xff]
        %v4162 = vld [vmem:[#allocation3 + $0x1a0] sm:$0xff]
        %v4163 = vld [vmem:[#allocation3 + $0x1a8] sm:$0x3]
        %v4212 = vrot.slane %v4110, 1
        %v4213 = vrot.slane %v4111, 1
        %v4214 = vsel %vm695, %v4212, %v4213
        %v4215 = vrot.slane %v4112, 1
        %v4216 = vsel %vm695, %v4213, %v4215
        %v4217 = vrot.slane %v4113, 1
        %v4218 = vrot.slane %v4114, 1
        %v4219 = vsel %vm695, %v4217, %v4218
        %v4220 = vrot.slane %v4115, 1
        %v4221 = vsel %vm695, %v4218, %v4220
        %v4222 = vrot.slane %v4116, 1
        %v4223 = vrot.slane %v4117, 1
        %v4224 = vsel %vm695, %v4222, %v4223
        %v4225 = vrot.slane %v4118, 1
        %v4226 = vsel %vm695, %v4223, %v4225
        %v4227 = vrot.slane %v4119, 1
        %v4228 = vrot.slane %v4120, 1
        %v4229 = vsel %vm695, %v4227, %v4228
        %v4230 = vrot.slane %v4121, 1
        %v4231 = vsel %vm695, %v4228, %v4230
        %v4232 = vrot.slane %v4122, 1
        %v4233 = vrot.slane %v4123, 1
        %v4234 = vsel %vm695, %v4232, %v4233
        %v4235 = vrot.slane %v4124, 1
        %v4236 = vsel %vm695, %v4233, %v4235
        %v4237 = vrot.slane %v4125, 1
        %v4238 = vrot.slane %v4126, 1
        %v4239 = vsel %vm695, %v4237, %v4238
        %v4240 = vrot.slane %v4127, 1
        %v4241 = vsel %vm695, %v4238, %v4240
        %v4242 = vrot.slane %v4128, 1
        %v4243 = vrot.slane %v4129, 1
        %v4244 = vsel %vm695, %v4242, %v4243
        %v4245 = vrot.slane %v4130, 1
        %v4246 = vsel %vm695, %v4243, %v4245
        %v4247 = vrot.slane %v4131, 1
        %v4248 = vrot.slane %v4132, 1
        %v4249 = vsel %vm695, %v4247, %v4248
        %v4250 = vrot.slane %v4133, 1
        %v4251 = vsel %vm695, %v4248, %v4250
        %v4252 = vrot.slane %v4134, 1
        %v4253 = vrot.slane %v4135, 1
        %v4254 = vsel %vm695, %v4252, %v4253
        %v4255 = vrot.slane %v4136, 1
        %v4256 = vsel %vm695, %v4253, %v4255
        %v4257 = vrot.slane %v4137, 1
        %v4258 = vrot.slane %v4138, 1
        %v4259 = vsel %vm695, %v4257, %v4258
        %v4260 = vrot.slane %v4139, 1
        %v4261 = vsel %vm695, %v4258, %v4260
        %v4262 = vrot.slane %v4140, 1
        %v4263 = vrot.slane %v4141, 1
        %v4264 = vsel %vm695, %v4262, %v4263
        %v4265 = vrot.slane %v4142, 1
        %v4266 = vsel %vm695, %v4263, %v4265
        %v4267 = vrot.slane %v4143, 1
        %v4268 = vrot.slane %v4144, 1
        %v4269 = vsel %vm695, %v4267, %v4268
        %v4270 = vrot.slane %v4145, 1
        %v4271 = vsel %vm695, %v4268, %v4270
        %v4272 = vrot.slane %v4146, 1
        %v4273 = vrot.slane %v4147, 1
        %v4274 = vsel %vm695, %v4272, %v4273
        %v4275 = vrot.slane %v4148, 1
        %v4276 = vsel %vm695, %v4273, %v4275
        %v4277 = vrot.slane %v4149, 1
        %v4278 = vrot.slane %v4150, 1
        %v4279 = vsel %vm695, %v4277, %v4278
        %v4280 = vrot.slane %v4151, 1
        %v4281 = vsel %vm695, %v4278, %v4280
        %v4282 = vrot.slane %v4152, 1
        %v4283 = vrot.slane %v4153, 1
        %v4284 = vsel %vm695, %v4282, %v4283
        %v4285 = vrot.slane %v4154, 1
        %v4286 = vsel %vm695, %v4283, %v4285
        %v4287 = vrot.slane %v4155, 1
        %v4288 = vrot.slane %v4156, 1
        %v4289 = vsel %vm695, %v4287, %v4288
        %v4290 = vrot.slane %v4157, 1
        %v4291 = vsel %vm695, %v4288, %v4290
        %4292 = vrot.lane.b32.xlu0 %v4214, 8
        %v4293 = vpop.permute.xlu0 %4292
        %4294 = vrot.lane.b32.xlu0 %v4216, 8
        %v4295 = vpop.permute.xlu0 %4294
        %4296 = vrot.lane.b32.xlu0 %v4219, 8
        %v4297 = vpop.permute.xlu0 %4296
        %4298 = vrot.lane.b32.xlu0 %v4221, 8
        %v4299 = vpop.permute.xlu0 %4298
        %4300 = vrot.lane.b32.xlu0 %v4224, 8
        %v4301 = vpop.permute.xlu0 %4300
        %4302 = vrot.lane.b32.xlu0 %v4226, 8
        %v4303 = vpop.permute.xlu0 %4302
        %4304 = vrot.lane.b32.xlu0 %v4229, 8
        %v4305 = vpop.permute.xlu0 %4304
        %4306 = vrot.lane.b32.xlu0 %v4231, 8
        %v4307 = vpop.permute.xlu0 %4306
        %4308 = vrot.lane.b32.xlu0 %v4234, 8
        %v4309 = vpop.permute.xlu0 %4308
        %4310 = vrot.lane.b32.xlu0 %v4236, 8
        %v4311 = vpop.permute.xlu0 %4310
        %4312 = vrot.lane.b32.xlu0 %v4239, 8
        %v4313 = vpop.permute.xlu0 %4312
        %4314 = vrot.lane.b32.xlu0 %v4241, 8
        %v4315 = vpop.permute.xlu0 %4314
        %4316 = vrot.lane.b32.xlu0 %v4244, 8
        %v4317 = vpop.permute.xlu0 %4316
        %4318 = vrot.lane.b32.xlu0 %v4246, 8
        %v4319 = vpop.permute.xlu0 %4318
        %4320 = vrot.lane.b32.xlu0 %v4249, 8
        %v4321 = vpop.permute.xlu0 %4320
        %4322 = vrot.lane.b32.xlu0 %v4251, 8
        %v4323 = vpop.permute.xlu0 %4322
        %4324 = vrot.lane.b32.xlu0 %v4254, 8
        %v4325 = vpop.permute.xlu0 %4324
        %4326 = vrot.lane.b32.xlu0 %v4256, 8
        %v4327 = vpop.permute.xlu0 %4326
        %4328 = vrot.lane.b32.xlu0 %v4259, 8
        %v4329 = vpop.permute.xlu0 %4328
        %4330 = vrot.lane.b32.xlu0 %v4261, 8
        %v4331 = vpop.permute.xlu0 %4330
        %4332 = vrot.lane.b32.xlu0 %v4264, 8
        %v4333 = vpop.permute.xlu0 %4332
        %4334 = vrot.lane.b32.xlu0 %v4266, 8
        %v4335 = vpop.permute.xlu0 %4334
        %4336 = vrot.lane.b32.xlu0 %v4269, 8
        %v4337 = vpop.permute.xlu0 %4336
        %4338 = vrot.lane.b32.xlu0 %v4271, 8
        %v4339 = vpop.permute.xlu0 %4338
        %4340 = vrot.lane.b32.xlu0 %v4274, 8
        %v4341 = vpop.permute.xlu0 %4340
        %4342 = vrot.lane.b32.xlu0 %v4276, 8
        %v4343 = vpop.permute.xlu0 %4342
        %4344 = vrot.lane.b32.xlu0 %v4279, 8
        %v4345 = vpop.permute.xlu0 %4344
        %4346 = vrot.lane.b32.xlu0 %v4281, 8
        %v4347 = vpop.permute.xlu0 %4346
        %4348 = vrot.lane.b32.xlu0 %v4284, 8
        %v4349 = vpop.permute.xlu0 %4348
        %4350 = vrot.lane.b32.xlu0 %v4286, 8
        %v4351 = vpop.permute.xlu0 %4350
        %4352 = vrot.lane.b32.xlu0 %v4289, 8
        %v4353 = vpop.permute.xlu0 %4352
        %4354 = vrot.lane.b32.xlu0 %v4291, 8
        %v4355 = vpop.permute.xlu0 %4354
        %v4388 = vrot.slane %v4110, 2
        %v4389 = vrot.slane %v4111, 2
        %v4390 = vsel %vm872, %v4388, %v4389
        %v4391 = vrot.slane %v4112, 2
        %v4392 = vsel %vm872, %v4389, %v4391
        %v4393 = vrot.slane %v4113, 2
        %v4394 = vrot.slane %v4114, 2
        %v4395 = vsel %vm872, %v4393, %v4394
        %v4396 = vrot.slane %v4115, 2
        %v4397 = vsel %vm872, %v4394, %v4396
        %v4398 = vrot.slane %v4116, 2
        %v4399 = vrot.slane %v4117, 2
        %v4400 = vsel %vm872, %v4398, %v4399
        %v4401 = vrot.slane %v4118, 2
        %v4402 = vsel %vm872, %v4399, %v4401
        %v4403 = vrot.slane %v4119, 2
        %v4404 = vrot.slane %v4120, 2
        %v4405 = vsel %vm872, %v4403, %v4404
        %v4406 = vrot.slane %v4121, 2
        %v4407 = vsel %vm872, %v4404, %v4406
        %v4408 = vrot.slane %v4122, 2
        %v4409 = vrot.slane %v4123, 2
        %v4410 = vsel %vm872, %v4408, %v4409
        %v4411 = vrot.slane %v4124, 2
        %v4412 = vsel %vm872, %v4409, %v4411
        %v4413 = vrot.slane %v4125, 2
        %v4414 = vrot.slane %v4126, 2
        %v4415 = vsel %vm872, %v4413, %v4414
        %v4416 = vrot.slane %v4127, 2
        %v4417 = vsel %vm872, %v4414, %v4416
        %v4418 = vrot.slane %v4128, 2
        %v4419 = vrot.slane %v4129, 2
        %v4420 = vsel %vm872, %v4418, %v4419
        %v4421 = vrot.slane %v4130, 2
        %v4422 = vsel %vm872, %v4419, %v4421
        %v4423 = vrot.slane %v4131, 2
        %v4424 = vrot.slane %v4132, 2
        %v4425 = vsel %vm872, %v4423, %v4424
        %v4426 = vrot.slane %v4133, 2
        %v4427 = vsel %vm872, %v4424, %v4426
        %v4428 = vrot.slane %v4134, 2
        %v4429 = vrot.slane %v4135, 2
        %v4430 = vsel %vm872, %v4428, %v4429
        %v4431 = vrot.slane %v4136, 2
        %v4432 = vsel %vm872, %v4429, %v4431
        %v4433 = vrot.slane %v4137, 2
        %v4434 = vrot.slane %v4138, 2
        %v4435 = vsel %vm872, %v4433, %v4434
        %v4436 = vrot.slane %v4139, 2
        %v4437 = vsel %vm872, %v4434, %v4436
        %v4438 = vrot.slane %v4140, 2
        %v4439 = vrot.slane %v4141, 2
        %v4440 = vsel %vm872, %v4438, %v4439
        %v4441 = vrot.slane %v4142, 2
        %v4442 = vsel %vm872, %v4439, %v4441
        %v4443 = vrot.slane %v4143, 2
        %v4444 = vrot.slane %v4144, 2
        %v4445 = vsel %vm872, %v4443, %v4444
        %v4446 = vrot.slane %v4145, 2
        %v4447 = vsel %vm872, %v4444, %v4446
        %v4448 = vrot.slane %v4146, 2
        %v4449 = vrot.slane %v4147, 2
        %v4450 = vsel %vm872, %v4448, %v4449
        %v4451 = vrot.slane %v4148, 2
        %v4452 = vsel %vm872, %v4449, %v4451
        %v4453 = vrot.slane %v4149, 2
        %v4454 = vrot.slane %v4150, 2
        %v4455 = vsel %vm872, %v4453, %v4454
        %v4456 = vrot.slane %v4151, 2
        %v4457 = vsel %vm872, %v4454, %v4456
        %v4458 = vrot.slane %v4152, 2
        %v4459 = vrot.slane %v4153, 2
        %v4460 = vsel %vm872, %v4458, %v4459
        %v4461 = vrot.slane %v4154, 2
        %v4462 = vsel %vm872, %v4459, %v4461
        %v4463 = vrot.slane %v4155, 2
        %v4464 = vrot.slane %v4156, 2
        %v4465 = vsel %vm872, %v4463, %v4464
        %v4466 = vrot.slane %v4157, 2
        %v4467 = vsel %vm872, %v4464, %v4466
        %4468 = vrot.lane.b32.xlu0 %v4390, 16
        %v4469 = vpop.permute.xlu0 %4468
        %4470 = vrot.lane.b32.xlu0 %v4392, 16
        %v4471 = vpop.permute.xlu0 %4470
        %4472 = vrot.lane.b32.xlu0 %v4395, 16
        %v4473 = vpop.permute.xlu0 %4472
        %4474 = vrot.lane.b32.xlu0 %v4397, 16
        %v4475 = vpop.permute.xlu0 %4474
        %4476 = vrot.lane.b32.xlu0 %v4400, 16
        %v4477 = vpop.permute.xlu0 %4476
        %4478 = vrot.lane.b32.xlu0 %v4402, 16
        %v4479 = vpop.permute.xlu0 %4478
        %4480 = vrot.lane.b32.xlu0 %v4405, 16
        %v4481 = vpop.permute.xlu0 %4480
        %4482 = vrot.lane.b32.xlu0 %v4407, 16
        %v4483 = vpop.permute.xlu0 %4482
        %4484 = vrot.lane.b32.xlu0 %v4410, 16
        %v4485 = vpop.permute.xlu0 %4484
        %4486 = vrot.lane.b32.xlu0 %v4412, 16
        %v4487 = vpop.permute.xlu0 %4486
        %4488 = vrot.lane.b32.xlu0 %v4415, 16
        %v4489 = vpop.permute.xlu0 %4488
        %4490 = vrot.lane.b32.xlu0 %v4417, 16
        %v4491 = vpop.permute.xlu0 %4490
        %4492 = vrot.lane.b32.xlu0 %v4420, 16
        %v4493 = vpop.permute.xlu0 %4492
        %4494 = vrot.lane.b32.xlu0 %v4422, 16
        %v4495 = vpop.permute.xlu0 %4494
        %4496 = vrot.lane.b32.xlu0 %v4425, 16
        %v4497 = vpop.permute.xlu0 %4496
        %4498 = vrot.lane.b32.xlu0 %v4427, 16
        %v4499 = vpop.permute.xlu0 %4498
        %4500 = vrot.lane.b32.xlu0 %v4430, 16
        %v4501 = vpop.permute.xlu0 %4500
        %4502 = vrot.lane.b32.xlu0 %v4432, 16
        %v4503 = vpop.permute.xlu0 %4502
        %4504 = vrot.lane.b32.xlu0 %v4435, 16
        %v4505 = vpop.permute.xlu0 %4504
        %4506 = vrot.lane.b32.xlu0 %v4437, 16
        %v4507 = vpop.permute.xlu0 %4506
        %4508 = vrot.lane.b32.xlu0 %v4440, 16
        %v4509 = vpop.permute.xlu0 %4508
        %4510 = vrot.lane.b32.xlu0 %v4442, 16
        %v4511 = vpop.permute.xlu0 %4510
        %4512 = vrot.lane.b32.xlu0 %v4445, 16
        %v4513 = vpop.permute.xlu0 %4512
        %4514 = vrot.lane.b32.xlu0 %v4447, 16
        %v4515 = vpop.permute.xlu0 %4514
        %4516 = vrot.lane.b32.xlu0 %v4450, 16
        %v4517 = vpop.permute.xlu0 %4516
        %4518 = vrot.lane.b32.xlu0 %v4452, 16
        %v4519 = vpop.permute.xlu0 %4518
        %4520 = vrot.lane.b32.xlu0 %v4455, 16
        %v4521 = vpop.permute.xlu0 %4520
        %4522 = vrot.lane.b32.xlu0 %v4457, 16
        %v4523 = vpop.permute.xlu0 %4522
        %4524 = vrot.lane.b32.xlu0 %v4460, 16
        %v4525 = vpop.permute.xlu0 %4524
        %4526 = vrot.lane.b32.xlu0 %v4462, 16
        %v4527 = vpop.permute.xlu0 %4526
        %4528 = vrot.lane.b32.xlu0 %v4465, 16
        %v4529 = vpop.permute.xlu0 %4528
        %4530 = vrot.lane.b32.xlu0 %v4467, 16
        %v4531 = vpop.permute.xlu0 %4530
        %4566 = vrot.lane.b32.xlu0 %v4113, 24
        %v4567 = vpop.permute.xlu0 %4566
        %4568 = vrot.lane.b32.xlu0 %v4114, 24
        %v4569 = vpop.permute.xlu0 %4568
        %4570 = vrot.lane.b32.xlu0 %v4116, 24
        %v4571 = vpop.permute.xlu0 %4570
        %4572 = vrot.lane.b32.xlu0 %v4117, 24
        %v4573 = vpop.permute.xlu0 %4572
        %4574 = vrot.lane.b32.xlu0 %v4119, 24
        %v4575 = vpop.permute.xlu0 %4574
        %4576 = vrot.lane.b32.xlu0 %v4120, 24
        %v4577 = vpop.permute.xlu0 %4576
        %4578 = vrot.lane.b32.xlu0 %v4122, 24
        %v4579 = vpop.permute.xlu0 %4578
        %4580 = vrot.lane.b32.xlu0 %v4123, 24
        %v4581 = vpop.permute.xlu0 %4580
        %4582 = vrot.lane.b32.xlu0 %v4125, 24
        %v4583 = vpop.permute.xlu0 %4582
        %4584 = vrot.lane.b32.xlu0 %v4126, 24
        %v4585 = vpop.permute.xlu0 %4584
        %4586 = vrot.lane.b32.xlu0 %v4128, 24
        %v4587 = vpop.permute.xlu0 %4586
        %4588 = vrot.lane.b32.xlu0 %v4129, 24
        %v4589 = vpop.permute.xlu0 %4588
        %4590 = vrot.lane.b32.xlu0 %v4131, 24
        %v4591 = vpop.permute.xlu0 %4590
        %4592 = vrot.lane.b32.xlu0 %v4132, 24
        %v4593 = vpop.permute.xlu0 %4592
        %4594 = vrot.lane.b32.xlu0 %v4134, 24
        %v4595 = vpop.permute.xlu0 %4594
        %4596 = vrot.lane.b32.xlu0 %v4135, 24
        %v4597 = vpop.permute.xlu0 %4596
        %4598 = vrot.lane.b32.xlu0 %v4137, 24
        %v4599 = vpop.permute.xlu0 %4598
        %4600 = vrot.lane.b32.xlu0 %v4138, 24
        %v4601 = vpop.permute.xlu0 %4600
        %4602 = vrot.lane.b32.xlu0 %v4140, 24
        %v4603 = vpop.permute.xlu0 %4602
        %4604 = vrot.lane.b32.xlu0 %v4141, 24
        %v4605 = vpop.permute.xlu0 %4604
        %4606 = vrot.lane.b32.xlu0 %v4143, 24
        %v4607 = vpop.permute.xlu0 %4606
        %4608 = vrot.lane.b32.xlu0 %v4144, 24
        %v4609 = vpop.permute.xlu0 %4608
        %4610 = vrot.lane.b32.xlu0 %v4146, 24
        %v4611 = vpop.permute.xlu0 %4610
        %4612 = vrot.lane.b32.xlu0 %v4147, 24
        %v4613 = vpop.permute.xlu0 %4612
        %4614 = vrot.lane.b32.xlu0 %v4149, 24
        %v4615 = vpop.permute.xlu0 %4614
        %4616 = vrot.lane.b32.xlu0 %v4150, 24
        %v4617 = vpop.permute.xlu0 %4616
        %4618 = vrot.lane.b32.xlu0 %v4152, 24
        %v4619 = vpop.permute.xlu0 %4618
        %4620 = vrot.lane.b32.xlu0 %v4153, 24
        %v4621 = vpop.permute.xlu0 %4620
        %4622 = vrot.lane.b32.xlu0 %v4155, 24
        %v4623 = vpop.permute.xlu0 %4622
        %4624 = vrot.lane.b32.xlu0 %v4156, 24
        %v4625 = vpop.permute.xlu0 %4624
        %4626 = vrot.lane.b32.xlu0 %v4158, 24
        %v4627 = vpop.permute.xlu0 %4626
        %4628 = vrot.lane.b32.xlu0 %v4159, 24
        %v4629 = vpop.permute.xlu0 %4628
        %v4663 = vrot.slane %v4158, 1
        %v4664 = vrot.slane %v4159, 1
        %v4665 = vsel %vm695, %v4663, %v4664
        %v4666 = vrot.slane %v4160, 1
        %v4667 = vsel %vm695, %v4664, %v4666
        %4668 = vrot.lane.b32.xlu0 %v4219, 32
        %v4669 = vpop.permute.xlu0 %4668
        %4670 = vrot.lane.b32.xlu0 %v4221, 32
        %v4671 = vpop.permute.xlu0 %4670
        %4672 = vrot.lane.b32.xlu0 %v4224, 32
        %v4673 = vpop.permute.xlu0 %4672
        %4674 = vrot.lane.b32.xlu0 %v4226, 32
        %v4675 = vpop.permute.xlu0 %4674
        %4676 = vrot.lane.b32.xlu0 %v4229, 32
        %v4677 = vpop.permute.xlu0 %4676
        %4678 = vrot.lane.b32.xlu0 %v4231, 32
        %v4679 = vpop.permute.xlu0 %4678
        %4680 = vrot.lane.b32.xlu0 %v4234, 32
        %v4681 = vpop.permute.xlu0 %4680
        %4682 = vrot.lane.b32.xlu0 %v4236, 32
        %v4683 = vpop.permute.xlu0 %4682
        %4684 = vrot.lane.b32.xlu0 %v4239, 32
        %v4685 = vpop.permute.xlu0 %4684
        %4686 = vrot.lane.b32.xlu0 %v4241, 32
        %v4687 = vpop.permute.xlu0 %4686
        %4688 = vrot.lane.b32.xlu0 %v4244, 32
        %v4689 = vpop.permute.xlu0 %4688
        %4690 = vrot.lane.b32.xlu0 %v4246, 32
        %v4691 = vpop.permute.xlu0 %4690
        %4692 = vrot.lane.b32.xlu0 %v4249, 32
        %v4693 = vpop.permute.xlu0 %4692
        %4694 = vrot.lane.b32.xlu0 %v4251, 32
        %v4695 = vpop.permute.xlu0 %4694
        %4696 = vrot.lane.b32.xlu0 %v4254, 32
        %v4697 = vpop.permute.xlu0 %4696
        %4698 = vrot.lane.b32.xlu0 %v4256, 32
        %v4699 = vpop.permute.xlu0 %4698
        %4700 = vrot.lane.b32.xlu0 %v4259, 32
        %v4701 = vpop.permute.xlu0 %4700
        %4702 = vrot.lane.b32.xlu0 %v4261, 32
        %v4703 = vpop.permute.xlu0 %4702
        %4704 = vrot.lane.b32.xlu0 %v4264, 32
        %v4705 = vpop.permute.xlu0 %4704
        %4706 = vrot.lane.b32.xlu0 %v4266, 32
        %v4707 = vpop.permute.xlu0 %4706
        %4708 = vrot.lane.b32.xlu0 %v4269, 32
        %v4709 = vpop.permute.xlu0 %4708
        %4710 = vrot.lane.b32.xlu0 %v4271, 32
        %v4711 = vpop.permute.xlu0 %4710
        %4712 = vrot.lane.b32.xlu0 %v4274, 32
        %v4713 = vpop.permute.xlu0 %4712
        %4714 = vrot.lane.b32.xlu0 %v4276, 32
        %v4715 = vpop.permute.xlu0 %4714
        %4716 = vrot.lane.b32.xlu0 %v4279, 32
        %v4717 = vpop.permute.xlu0 %4716
        %4718 = vrot.lane.b32.xlu0 %v4281, 32
        %v4719 = vpop.permute.xlu0 %4718
        %4720 = vrot.lane.b32.xlu0 %v4284, 32
        %v4721 = vpop.permute.xlu0 %4720
        %4722 = vrot.lane.b32.xlu0 %v4286, 32
        %v4723 = vpop.permute.xlu0 %4722
        %4724 = vrot.lane.b32.xlu0 %v4289, 32
        %v4725 = vpop.permute.xlu0 %4724
        %4726 = vrot.lane.b32.xlu0 %v4291, 32
        %v4727 = vpop.permute.xlu0 %4726
        %4728 = vrot.lane.b32.xlu0 %v4665, 32
        %v4729 = vpop.permute.xlu0 %4728
        %4730 = vrot.lane.b32.xlu0 %v4667, 32
        %v4731 = vpop.permute.xlu0 %4730
        %v4764 = vrot.slane %v4158, 2
        %v4765 = vrot.slane %v4159, 2
        %v4766 = vsel %vm872, %v4764, %v4765
        %v4767 = vrot.slane %v4160, 2
        %v4768 = vsel %vm872, %v4765, %v4767
        %4769 = vrot.lane.b32.xlu0 %v4395, 40
        %v4770 = vpop.permute.xlu0 %4769
        %4771 = vrot.lane.b32.xlu0 %v4397, 40
        %v4772 = vpop.permute.xlu0 %4771
        %4773 = vrot.lane.b32.xlu0 %v4400, 40
        %v4774 = vpop.permute.xlu0 %4773
        %4775 = vrot.lane.b32.xlu0 %v4402, 40
        %v4776 = vpop.permute.xlu0 %4775
        %4777 = vrot.lane.b32.xlu0 %v4405, 40
        %v4778 = vpop.permute.xlu0 %4777
        %4779 = vrot.lane.b32.xlu0 %v4407, 40
        %v4780 = vpop.permute.xlu0 %4779
        %4781 = vrot.lane.b32.xlu0 %v4410, 40
        %v4782 = vpop.permute.xlu0 %4781
        %4783 = vrot.lane.b32.xlu0 %v4412, 40
        %v4784 = vpop.permute.xlu0 %4783
        %4785 = vrot.lane.b32.xlu0 %v4415, 40
        %v4786 = vpop.permute.xlu0 %4785
        %4787 = vrot.lane.b32.xlu0 %v4417, 40
        %v4788 = vpop.permute.xlu0 %4787
        %4789 = vrot.lane.b32.xlu0 %v4420, 40
        %v4790 = vpop.permute.xlu0 %4789
        %4791 = vrot.lane.b32.xlu0 %v4422, 40
        %v4792 = vpop.permute.xlu0 %4791
        %4793 = vrot.lane.b32.xlu0 %v4425, 40
        %v4794 = vpop.permute.xlu0 %4793
        %4795 = vrot.lane.b32.xlu0 %v4427, 40
        %v4796 = vpop.permute.xlu0 %4795
        %4797 = vrot.lane.b32.xlu0 %v4430, 40
        %v4798 = vpop.permute.xlu0 %4797
        %4799 = vrot.lane.b32.xlu0 %v4432, 40
        %v4800 = vpop.permute.xlu0 %4799
        %4801 = vrot.lane.b32.xlu0 %v4435, 40
        %v4802 = vpop.permute.xlu0 %4801
        %4803 = vrot.lane.b32.xlu0 %v4437, 40
        %v4804 = vpop.permute.xlu0 %4803
        %4805 = vrot.lane.b32.xlu0 %v4440, 40
        %v4806 = vpop.permute.xlu0 %4805
        %4807 = vrot.lane.b32.xlu0 %v4442, 40
        %v4808 = vpop.permute.xlu0 %4807
        %4809 = vrot.lane.b32.xlu0 %v4445, 40
        %v4810 = vpop.permute.xlu0 %4809
        %4811 = vrot.lane.b32.xlu0 %v4447, 40
        %v4812 = vpop.permute.xlu0 %4811
        %4813 = vrot.lane.b32.xlu0 %v4450, 40
        %v4814 = vpop.permute.xlu0 %4813
        %4815 = vrot.lane.b32.xlu0 %v4452, 40
        %v4816 = vpop.permute.xlu0 %4815
        %4817 = vrot.lane.b32.xlu0 %v4455, 40
        %v4818 = vpop.permute.xlu0 %4817
        %4819 = vrot.lane.b32.xlu0 %v4457, 40
        %v4820 = vpop.permute.xlu0 %4819
        %4821 = vrot.lane.b32.xlu0 %v4460, 40
        %v4822 = vpop.permute.xlu0 %4821
        %4823 = vrot.lane.b32.xlu0 %v4462, 40
        %v4824 = vpop.permute.xlu0 %4823
        %4825 = vrot.lane.b32.xlu0 %v4465, 40
        %v4826 = vpop.permute.xlu0 %4825
        %4827 = vrot.lane.b32.xlu0 %v4467, 40
        %v4828 = vpop.permute.xlu0 %4827
        %4829 = vrot.lane.b32.xlu0 %v4766, 40
        %v4830 = vpop.permute.xlu0 %4829
        %4831 = vrot.lane.b32.xlu0 %v4768, 40
        %v4832 = vpop.permute.xlu0 %4831
        %4867 = vrot.lane.b32.xlu0 %v4116, 48
        %v4868 = vpop.permute.xlu0 %4867
        %4869 = vrot.lane.b32.xlu0 %v4117, 48
        %v4870 = vpop.permute.xlu0 %4869
        %4871 = vrot.lane.b32.xlu0 %v4119, 48
        %v4872 = vpop.permute.xlu0 %4871
        %4873 = vrot.lane.b32.xlu0 %v4120, 48
        %v4874 = vpop.permute.xlu0 %4873
        %4875 = vrot.lane.b32.xlu0 %v4122, 48
        %v4876 = vpop.permute.xlu0 %4875
        %4877 = vrot.lane.b32.xlu0 %v4123, 48
        %v4878 = vpop.permute.xlu0 %4877
        %4879 = vrot.lane.b32.xlu0 %v4125, 48
        %v4880 = vpop.permute.xlu0 %4879
        %4881 = vrot.lane.b32.xlu0 %v4126, 48
        %v4882 = vpop.permute.xlu0 %4881
        %4883 = vrot.lane.b32.xlu0 %v4128, 48
        %v4884 = vpop.permute.xlu0 %4883
        %4885 = vrot.lane.b32.xlu0 %v4129, 48
        %v4886 = vpop.permute.xlu0 %4885
        %4887 = vrot.lane.b32.xlu0 %v4131, 48
        %v4888 = vpop.permute.xlu0 %4887
        %4889 = vrot.lane.b32.xlu0 %v4132, 48
        %v4890 = vpop.permute.xlu0 %4889
        %4891 = vrot.lane.b32.xlu0 %v4134, 48
        %v4892 = vpop.permute.xlu0 %4891
        %4893 = vrot.lane.b32.xlu0 %v4135, 48
        %v4894 = vpop.permute.xlu0 %4893
        %4895 = vrot.lane.b32.xlu0 %v4137, 48
        %v4896 = vpop.permute.xlu0 %4895
        %4897 = vrot.lane.b32.xlu0 %v4138, 48
        %v4898 = vpop.permute.xlu0 %4897
        %4899 = vrot.lane.b32.xlu0 %v4140, 48
        %v4900 = vpop.permute.xlu0 %4899
        %4901 = vrot.lane.b32.xlu0 %v4141, 48
        %v4902 = vpop.permute.xlu0 %4901
        %4903 = vrot.lane.b32.xlu0 %v4143, 48
        %v4904 = vpop.permute.xlu0 %4903
        %4905 = vrot.lane.b32.xlu0 %v4144, 48
        %v4906 = vpop.permute.xlu0 %4905
        %4907 = vrot.lane.b32.xlu0 %v4146, 48
        %v4908 = vpop.permute.xlu0 %4907
        %4909 = vrot.lane.b32.xlu0 %v4147, 48
        %v4910 = vpop.permute.xlu0 %4909
        %4911 = vrot.lane.b32.xlu0 %v4149, 48
        %v4912 = vpop.permute.xlu0 %4911
        %4913 = vrot.lane.b32.xlu0 %v4150, 48
        %v4914 = vpop.permute.xlu0 %4913
        %4915 = vrot.lane.b32.xlu0 %v4152, 48
        %v4916 = vpop.permute.xlu0 %4915
        %4917 = vrot.lane.b32.xlu0 %v4153, 48
        %v4918 = vpop.permute.xlu0 %4917
        %4919 = vrot.lane.b32.xlu0 %v4155, 48
        %v4920 = vpop.permute.xlu0 %4919
        %4921 = vrot.lane.b32.xlu0 %v4156, 48
        %v4922 = vpop.permute.xlu0 %4921
        %4923 = vrot.lane.b32.xlu0 %v4158, 48
        %v4924 = vpop.permute.xlu0 %4923
        %4925 = vrot.lane.b32.xlu0 %v4159, 48
        %v4926 = vpop.permute.xlu0 %4925
        %4927 = vrot.lane.b32.xlu0 %v4161, 48
        %v4928 = vpop.permute.xlu0 %4927
        %4929 = vrot.lane.b32.xlu0 %v4162, 48
        %v4930 = vpop.permute.xlu0 %4929
        %v4964 = vrot.slane %v4161, 1
        %v4965 = vrot.slane %v4162, 1
        %v4966 = vsel %vm695, %v4964, %v4965
        %v4967 = vrot.slane %v4163, 1
        %v4968 = vsel %vm695, %v4965, %v4967
        %4969 = vrot.lane.b32.xlu0 %v4224, 56
        %v4970 = vpop.permute.xlu0 %4969
        %4971 = vrot.lane.b32.xlu0 %v4226, 56
        %v4972 = vpop.permute.xlu0 %4971
        %4973 = vrot.lane.b32.xlu0 %v4229, 56
        %v4974 = vpop.permute.xlu0 %4973
        %4975 = vrot.lane.b32.xlu0 %v4231, 56
        %v4976 = vpop.permute.xlu0 %4975
        %4977 = vrot.lane.b32.xlu0 %v4234, 56
        %v4978 = vpop.permute.xlu0 %4977
        %4979 = vrot.lane.b32.xlu0 %v4236, 56
        %v4980 = vpop.permute.xlu0 %4979
        %4981 = vrot.lane.b32.xlu0 %v4239, 56
        %v4982 = vpop.permute.xlu0 %4981
        %4983 = vrot.lane.b32.xlu0 %v4241, 56
        %v4984 = vpop.permute.xlu0 %4983
        %4985 = vrot.lane.b32.xlu0 %v4244, 56
        %v4986 = vpop.permute.xlu0 %4985
        %4987 = vrot.lane.b32.xlu0 %v4246, 56
        %v4988 = vpop.permute.xlu0 %4987
        %4989 = vrot.lane.b32.xlu0 %v4249, 56
        %v4990 = vpop.permute.xlu0 %4989
        %4991 = vrot.lane.b32.xlu0 %v4251, 56
        %v4992 = vpop.permute.xlu0 %4991
        %4993 = vrot.lane.b32.xlu0 %v4254, 56
        %v4994 = vpop.permute.xlu0 %4993
        %4995 = vrot.lane.b32.xlu0 %v4256, 56
        %v4996 = vpop.permute.xlu0 %4995
        %4997 = vrot.lane.b32.xlu0 %v4259, 56
        %v4998 = vpop.permute.xlu0 %4997
        %4999 = vrot.lane.b32.xlu0 %v4261, 56
        %v5000 = vpop.permute.xlu0 %4999
        %5001 = vrot.lane.b32.xlu0 %v4264, 56
        %v5002 = vpop.permute.xlu0 %5001
        %5003 = vrot.lane.b32.xlu0 %v4266, 56
        %v5004 = vpop.permute.xlu0 %5003
        %5005 = vrot.lane.b32.xlu0 %v4269, 56
        %v5006 = vpop.permute.xlu0 %5005
        %5007 = vrot.lane.b32.xlu0 %v4271, 56
        %v5008 = vpop.permute.xlu0 %5007
        %5009 = vrot.lane.b32.xlu0 %v4274, 56
        %v5010 = vpop.permute.xlu0 %5009
        %5011 = vrot.lane.b32.xlu0 %v4276, 56
        %v5012 = vpop.permute.xlu0 %5011
        %5013 = vrot.lane.b32.xlu0 %v4279, 56
        %v5014 = vpop.permute.xlu0 %5013
        %5015 = vrot.lane.b32.xlu0 %v4281, 56
        %v5016 = vpop.permute.xlu0 %5015
        %5017 = vrot.lane.b32.xlu0 %v4284, 56
        %v5018 = vpop.permute.xlu0 %5017
        %5019 = vrot.lane.b32.xlu0 %v4286, 56
        %v5020 = vpop.permute.xlu0 %5019
        %5021 = vrot.lane.b32.xlu0 %v4289, 56
        %v5022 = vpop.permute.xlu0 %5021
        %5023 = vrot.lane.b32.xlu0 %v4291, 56
        %v5024 = vpop.permute.xlu0 %5023
        %5025 = vrot.lane.b32.xlu0 %v4665, 56
        %v5026 = vpop.permute.xlu0 %5025
        %5027 = vrot.lane.b32.xlu0 %v4667, 56
        %v5028 = vpop.permute.xlu0 %5027
        %5029 = vrot.lane.b32.xlu0 %v4966, 56
        %v5030 = vpop.permute.xlu0 %5029
        %5031 = vrot.lane.b32.xlu0 %v4968, 56
        %v5032 = vpop.permute.xlu0 %5031
        %v5065 = vrot.slane %v4161, 2
        %v5066 = vrot.slane %v4162, 2
        %v5067 = vsel %vm872, %v5065, %v5066
        %v5068 = vrot.slane %v4163, 2
        %v5069 = vsel %vm872, %v5066, %v5068
        %5070 = vrot.lane.b32.xlu0 %v4400, 64
        %v5071 = vpop.permute.xlu0 %5070
        %5072 = vrot.lane.b32.xlu0 %v4402, 64
        %v5073 = vpop.permute.xlu0 %5072
        %5074 = vrot.lane.b32.xlu0 %v4405, 64
        %v5075 = vpop.permute.xlu0 %5074
        %5076 = vrot.lane.b32.xlu0 %v4407, 64
        %v5077 = vpop.permute.xlu0 %5076
        %5078 = vrot.lane.b32.xlu0 %v4410, 64
        %v5079 = vpop.permute.xlu0 %5078
        %5080 = vrot.lane.b32.xlu0 %v4412, 64
        %v5081 = vpop.permute.xlu0 %5080
        %5082 = vrot.lane.b32.xlu0 %v4415, 64
        %v5083 = vpop.permute.xlu0 %5082
        %5084 = vrot.lane.b32.xlu0 %v4417, 64
        %v5085 = vpop.permute.xlu0 %5084
        %5086 = vrot.lane.b32.xlu0 %v4420, 64
        %v5087 = vpop.permute.xlu0 %5086
        %5088 = vrot.lane.b32.xlu0 %v4422, 64
        %v5089 = vpop.permute.xlu0 %5088
        %5090 = vrot.lane.b32.xlu0 %v4425, 64
        %v5091 = vpop.permute.xlu0 %5090
        %5092 = vrot.lane.b32.xlu0 %v4427, 64
        %v5093 = vpop.permute.xlu0 %5092
        %5094 = vrot.lane.b32.xlu0 %v4430, 64
        %v5095 = vpop.permute.xlu0 %5094
        %5096 = vrot.lane.b32.xlu0 %v4432, 64
        %v5097 = vpop.permute.xlu0 %5096
        %5098 = vrot.lane.b32.xlu0 %v4435, 64
        %v5099 = vpop.permute.xlu0 %5098
        %5100 = vrot.lane.b32.xlu0 %v4437, 64
        %v5101 = vpop.permute.xlu0 %5100
        %5102 = vrot.lane.b32.xlu0 %v4440, 64
        %v5103 = vpop.permute.xlu0 %5102
        %5104 = vrot.lane.b32.xlu0 %v4442, 64
        %v5105 = vpop.permute.xlu0 %5104
        %5106 = vrot.lane.b32.xlu0 %v4445, 64
        %v5107 = vpop.permute.xlu0 %5106
        %5108 = vrot.lane.b32.xlu0 %v4447, 64
        %v5109 = vpop.permute.xlu0 %5108
        %5110 = vrot.lane.b32.xlu0 %v4450, 64
        %v5111 = vpop.permute.xlu0 %5110
        %5112 = vrot.lane.b32.xlu0 %v4452, 64
        %v5113 = vpop.permute.xlu0 %5112
        %5114 = vrot.lane.b32.xlu0 %v4455, 64
        %v5115 = vpop.permute.xlu0 %5114
        %5116 = vrot.lane.b32.xlu0 %v4457, 64
        %v5117 = vpop.permute.xlu0 %5116
        %5118 = vrot.lane.b32.xlu0 %v4460, 64
        %v5119 = vpop.permute.xlu0 %5118
        %5120 = vrot.lane.b32.xlu0 %v4462, 64
        %v5121 = vpop.permute.xlu0 %5120
        %5122 = vrot.lane.b32.xlu0 %v4465, 64
        %v5123 = vpop.permute.xlu0 %5122
        %5124 = vrot.lane.b32.xlu0 %v4467, 64
        %v5125 = vpop.permute.xlu0 %5124
        %5126 = vrot.lane.b32.xlu0 %v4766, 64
        %v5127 = vpop.permute.xlu0 %5126
        %5128 = vrot.lane.b32.xlu0 %v4768, 64
        %v5129 = vpop.permute.xlu0 %5128
        %5130 = vrot.lane.b32.xlu0 %v5067, 64
        %v5131 = vpop.permute.xlu0 %5130
        %5132 = vrot.lane.b32.xlu0 %v5069, 64
        %v5133 = vpop.permute.xlu0 %5132
        %v5166 = vsel %vm3700, %v4110, %v4293
        %v5167 = vsel %vm3700, %v4111, %v4295
        %v5168 = vsel %vm3700, %v4113, %v4297
        %v5169 = vsel %vm3700, %v4114, %v4299
        %v5170 = vsel %vm3700, %v4116, %v4301
        %v5171 = vsel %vm3700, %v4117, %v4303
        %v5172 = vsel %vm3700, %v4119, %v4305
        %v5173 = vsel %vm3700, %v4120, %v4307
        %v5174 = vsel %vm3700, %v4122, %v4309
        %v5175 = vsel %vm3700, %v4123, %v4311
        %v5176 = vsel %vm3700, %v4125, %v4313
        %v5177 = vsel %vm3700, %v4126, %v4315
        %v5178 = vsel %vm3700, %v4128, %v4317
        %v5179 = vsel %vm3700, %v4129, %v4319
        %v5180 = vsel %vm3700, %v4131, %v4321
        %v5181 = vsel %vm3700, %v4132, %v4323
        %v5182 = vsel %vm3700, %v4134, %v4325
        %v5183 = vsel %vm3700, %v4135, %v4327
        %v5184 = vsel %vm3700, %v4137, %v4329
        %v5185 = vsel %vm3700, %v4138, %v4331
        %v5186 = vsel %vm3700, %v4140, %v4333
        %v5187 = vsel %vm3700, %v4141, %v4335
        %v5188 = vsel %vm3700, %v4143, %v4337
        %v5189 = vsel %vm3700, %v4144, %v4339
        %v5190 = vsel %vm3700, %v4146, %v4341
        %v5191 = vsel %vm3700, %v4147, %v4343
        %v5192 = vsel %vm3700, %v4149, %v4345
        %v5193 = vsel %vm3700, %v4150, %v4347
        %v5194 = vsel %vm3700, %v4152, %v4349
        %v5195 = vsel %vm3700, %v4153, %v4351
        %v5196 = vsel %vm3700, %v4155, %v4353
        %v5197 = vsel %vm3700, %v4156, %v4355
        %v5198 = vsel %vm472, %v5166, %v4469
        %v5199 = vsel %vm472, %v5167, %v4471
        %v5200 = vsel %vm472, %v5168, %v4473
        %v5201 = vsel %vm472, %v5169, %v4475
        %v5202 = vsel %vm472, %v5170, %v4477
        %v5203 = vsel %vm472, %v5171, %v4479
        %v5204 = vsel %vm472, %v5172, %v4481
        %v5205 = vsel %vm472, %v5173, %v4483
        %v5206 = vsel %vm472, %v5174, %v4485
        %v5207 = vsel %vm472, %v5175, %v4487
        %v5208 = vsel %vm472, %v5176, %v4489
        %v5209 = vsel %vm472, %v5177, %v4491
        %v5210 = vsel %vm472, %v5178, %v4493
        %v5211 = vsel %vm472, %v5179, %v4495
        %v5212 = vsel %vm472, %v5180, %v4497
        %v5213 = vsel %vm472, %v5181, %v4499
        %v5214 = vsel %vm472, %v5182, %v4501
        %v5215 = vsel %vm472, %v5183, %v4503
        %v5216 = vsel %vm472, %v5184, %v4505
        %v5217 = vsel %vm472, %v5185, %v4507
        %v5218 = vsel %vm472, %v5186, %v4509
        %v5219 = vsel %vm472, %v5187, %v4511
        %v5220 = vsel %vm472, %v5188, %v4513
        %v5221 = vsel %vm472, %v5189, %v4515
        %v5222 = vsel %vm472, %v5190, %v4517
        %v5223 = vsel %vm472, %v5191, %v4519
        %v5224 = vsel %vm472, %v5192, %v4521
        %v5225 = vsel %vm472, %v5193, %v4523
        %v5226 = vsel %vm472, %v5194, %v4525
        %v5227 = vsel %vm472, %v5195, %v4527
        %v5228 = vsel %vm472, %v5196, %v4529
        %v5229 = vsel %vm472, %v5197, %v4531
        %vm5230 = vcmask 195584
        %v5231 = vsel %vm5230, %v5198, %v4567
        %v5232 = vsel %vm5230, %v5199, %v4569
        %v5233 = vsel %vm5230, %v5200, %v4571
        %v5234 = vsel %vm5230, %v5201, %v4573
        %v5235 = vsel %vm5230, %v5202, %v4575
        %v5236 = vsel %vm5230, %v5203, %v4577
        %v5237 = vsel %vm5230, %v5204, %v4579
        %v5238 = vsel %vm5230, %v5205, %v4581
        %v5239 = vsel %vm5230, %v5206, %v4583
        %v5240 = vsel %vm5230, %v5207, %v4585
        %v5241 = vsel %vm5230, %v5208, %v4587
        %v5242 = vsel %vm5230, %v5209, %v4589
        %v5243 = vsel %vm5230, %v5210, %v4591
        %v5244 = vsel %vm5230, %v5211, %v4593
        %v5245 = vsel %vm5230, %v5212, %v4595
        %v5246 = vsel %vm5230, %v5213, %v4597
        %v5247 = vsel %vm5230, %v5214, %v4599
        %v5248 = vsel %vm5230, %v5215, %v4601
        %v5249 = vsel %vm5230, %v5216, %v4603
        %v5250 = vsel %vm5230, %v5217, %v4605
        %v5251 = vsel %vm5230, %v5218, %v4607
        %v5252 = vsel %vm5230, %v5219, %v4609
        %v5253 = vsel %vm5230, %v5220, %v4611
        %v5254 = vsel %vm5230, %v5221, %v4613
        %v5255 = vsel %vm5230, %v5222, %v4615
        %v5256 = vsel %vm5230, %v5223, %v4617
        %v5257 = vsel %vm5230, %v5224, %v4619
        %v5258 = vsel %vm5230, %v5225, %v4621
        %v5259 = vsel %vm5230, %v5226, %v4623
        %v5260 = vsel %vm5230, %v5227, %v4625
        %v5261 = vsel %vm5230, %v5228, %v4627
        %v5262 = vsel %vm5230, %v5229, %v4629
        %v5263 = vsel %vm398, %v5231, %v4669
        %v5264 = vsel %vm398, %v5232, %v4671
        %v5265 = vsel %vm398, %v5233, %v4673
        %v5266 = vsel %vm398, %v5234, %v4675
        %v5267 = vsel %vm398, %v5235, %v4677
        %v5268 = vsel %vm398, %v5236, %v4679
        %v5269 = vsel %vm398, %v5237, %v4681
        %v5270 = vsel %vm398, %v5238, %v4683
        %v5271 = vsel %vm398, %v5239, %v4685
        %v5272 = vsel %vm398, %v5240, %v4687
        %v5273 = vsel %vm398, %v5241, %v4689
        %v5274 = vsel %vm398, %v5242, %v4691
        %v5275 = vsel %vm398, %v5243, %v4693
        %v5276 = vsel %vm398, %v5244, %v4695
        %v5277 = vsel %vm398, %v5245, %v4697
        %v5278 = vsel %vm398, %v5246, %v4699
        %v5279 = vsel %vm398, %v5247, %v4701
        %v5280 = vsel %vm398, %v5248, %v4703
        %v5281 = vsel %vm398, %v5249, %v4705
        %v5282 = vsel %vm398, %v5250, %v4707
        %v5283 = vsel %vm398, %v5251, %v4709
        %v5284 = vsel %vm398, %v5252, %v4711
        %v5285 = vsel %vm398, %v5253, %v4713
        %v5286 = vsel %vm398, %v5254, %v4715
        %v5287 = vsel %vm398, %v5255, %v4717
        %v5288 = vsel %vm398, %v5256, %v4719
        %v5289 = vsel %vm398, %v5257, %v4721
        %v5290 = vsel %vm398, %v5258, %v4723
        %v5291 = vsel %vm398, %v5259, %v4725
        %v5292 = vsel %vm398, %v5260, %v4727
        %v5293 = vsel %vm398, %v5261, %v4729
        %v5294 = vsel %vm398, %v5262, %v4731
        %vm5295 = vcmask 326656
        %v5296 = vsel %vm5295, %v5263, %v4770
        %v5297 = vsel %vm5295, %v5264, %v4772
        %v5298 = vsel %vm5295, %v5265, %v4774
        %v5299 = vsel %vm5295, %v5266, %v4776
        %v5300 = vsel %vm5295, %v5267, %v4778
        %v5301 = vsel %vm5295, %v5268, %v4780
        %v5302 = vsel %vm5295, %v5269, %v4782
        %v5303 = vsel %vm5295, %v5270, %v4784
        %v5304 = vsel %vm5295, %v5271, %v4786
        %v5305 = vsel %vm5295, %v5272, %v4788
        %v5306 = vsel %vm5295, %v5273, %v4790
        %v5307 = vsel %vm5295, %v5274, %v4792
        %v5308 = vsel %vm5295, %v5275, %v4794
        %v5309 = vsel %vm5295, %v5276, %v4796
        %v5310 = vsel %vm5295, %v5277, %v4798
        %v5311 = vsel %vm5295, %v5278, %v4800
        %v5312 = vsel %vm5295, %v5279, %v4802
        %v5313 = vsel %vm5295, %v5280, %v4804
        %v5314 = vsel %vm5295, %v5281, %v4806
        %v5315 = vsel %vm5295, %v5282, %v4808
        %v5316 = vsel %vm5295, %v5283, %v4810
        %v5317 = vsel %vm5295, %v5284, %v4812
        %v5318 = vsel %vm5295, %v5285, %v4814
        %v5319 = vsel %vm5295, %v5286, %v4816
        %v5320 = vsel %vm5295, %v5287, %v4818
        %v5321 = vsel %vm5295, %v5288, %v4820
        %v5322 = vsel %vm5295, %v5289, %v4822
        %v5323 = vsel %vm5295, %v5290, %v4824
        %v5324 = vsel %vm5295, %v5291, %v4826
        %v5325 = vsel %vm5295, %v5292, %v4828
        %v5326 = vsel %vm5295, %v5293, %v4830
        %v5327 = vsel %vm5295, %v5294, %v4832
        %v5328 = vsel %vm1619, %v5296, %v4868
        %v5329 = vsel %vm1619, %v5297, %v4870
        %v5330 = vsel %vm1619, %v5298, %v4872
        %v5331 = vsel %vm1619, %v5299, %v4874
        %v5332 = vsel %vm1619, %v5300, %v4876
        %v5333 = vsel %vm1619, %v5301, %v4878
        %v5334 = vsel %vm1619, %v5302, %v4880
        %v5335 = vsel %vm1619, %v5303, %v4882
        %v5336 = vsel %vm1619, %v5304, %v4884
        %v5337 = vsel %vm1619, %v5305, %v4886
        %v5338 = vsel %vm1619, %v5306, %v4888
        %v5339 = vsel %vm1619, %v5307, %v4890
        %v5340 = vsel %vm1619, %v5308, %v4892
        %v5341 = vsel %vm1619, %v5309, %v4894
        %v5342 = vsel %vm1619, %v5310, %v4896
        %v5343 = vsel %vm1619, %v5311, %v4898
        %v5344 = vsel %vm1619, %v5312, %v4900
        %v5345 = vsel %vm1619, %v5313, %v4902
        %v5346 = vsel %vm1619, %v5314, %v4904
        %v5347 = vsel %vm1619, %v5315, %v4906
        %v5348 = vsel %vm1619, %v5316, %v4908
        %v5349 = vsel %vm1619, %v5317, %v4910
        %v5350 = vsel %vm1619, %v5318, %v4912
        %v5351 = vsel %vm1619, %v5319, %v4914
        %v5352 = vsel %vm1619, %v5320, %v4916
        %v5353 = vsel %vm1619, %v5321, %v4918
        %v5354 = vsel %vm1619, %v5322, %v4920
        %v5355 = vsel %vm1619, %v5323, %v4922
        %v5356 = vsel %vm1619, %v5324, %v4924
        %v5357 = vsel %vm1619, %v5325, %v4926
        %v5358 = vsel %vm1619, %v5326, %v4928
        %v5359 = vsel %vm1619, %v5327, %v4930
        %vm5360 = vcmask 457728
        %v5361 = vsel %vm5360, %v5328, %v4970
        %v5362 = vsel %vm5360, %v5329, %v4972
        %v5363 = vsel %vm5360, %v5330, %v4974
        %v5364 = vsel %vm5360, %v5331, %v4976
        %v5365 = vsel %vm5360, %v5332, %v4978
        %v5366 = vsel %vm5360, %v5333, %v4980
        %v5367 = vsel %vm5360, %v5334, %v4982
        %v5368 = vsel %vm5360, %v5335, %v4984
        %v5369 = vsel %vm5360, %v5336, %v4986
        %v5370 = vsel %vm5360, %v5337, %v4988
        %v5371 = vsel %vm5360, %v5338, %v4990
        %v5372 = vsel %vm5360, %v5339, %v4992
        %v5373 = vsel %vm5360, %v5340, %v4994
        %v5374 = vsel %vm5360, %v5341, %v4996
        %v5375 = vsel %vm5360, %v5342, %v4998
        %v5376 = vsel %vm5360, %v5343, %v5000
        %v5377 = vsel %vm5360, %v5344, %v5002
        %v5378 = vsel %vm5360, %v5345, %v5004
        %v5379 = vsel %vm5360, %v5346, %v5006
        %v5380 = vsel %vm5360, %v5347, %v5008
        %v5381 = vsel %vm5360, %v5348, %v5010
        %v5382 = vsel %vm5360, %v5349, %v5012
        %v5383 = vsel %vm5360, %v5350, %v5014
        %v5384 = vsel %vm5360, %v5351, %v5016
        %v5385 = vsel %vm5360, %v5352, %v5018
        %v5386 = vsel %vm5360, %v5353, %v5020
        %v5387 = vsel %vm5360, %v5354, %v5022
        %v5388 = vsel %vm5360, %v5355, %v5024
        %v5389 = vsel %vm5360, %v5356, %v5026
        %v5390 = vsel %vm5360, %v5357, %v5028
        %v5391 = vsel %vm5360, %v5358, %v5030
        %v5392 = vsel %vm5360, %v5359, %v5032
        %v5393 = vsel %vm1652, %v5361, %v5071
        %v5394 = vsel %vm1652, %v5362, %v5073
        %v5395 = vsel %vm1652, %v5363, %v5075
        %v5396 = vsel %vm1652, %v5364, %v5077
        %v5397 = vsel %vm1652, %v5365, %v5079
        %v5398 = vsel %vm1652, %v5366, %v5081
        %v5399 = vsel %vm1652, %v5367, %v5083
        %v5400 = vsel %vm1652, %v5368, %v5085
        %v5401 = vsel %vm1652, %v5369, %v5087
        %v5402 = vsel %vm1652, %v5370, %v5089
        %v5403 = vsel %vm1652, %v5371, %v5091
        %v5404 = vsel %vm1652, %v5372, %v5093
        %v5405 = vsel %vm1652, %v5373, %v5095
        %v5406 = vsel %vm1652, %v5374, %v5097
        %v5407 = vsel %vm1652, %v5375, %v5099
        %v5408 = vsel %vm1652, %v5376, %v5101
        %v5409 = vsel %vm1652, %v5377, %v5103
        %v5410 = vsel %vm1652, %v5378, %v5105
        %v5411 = vsel %vm1652, %v5379, %v5107
        %v5412 = vsel %vm1652, %v5380, %v5109
        %v5413 = vsel %vm1652, %v5381, %v5111
        %v5414 = vsel %vm1652, %v5382, %v5113
        %v5415 = vsel %vm1652, %v5383, %v5115
        %v5416 = vsel %vm1652, %v5384, %v5117
        %v5417 = vsel %vm1652, %v5385, %v5119
        %v5418 = vsel %vm1652, %v5386, %v5121
        %v5419 = vsel %vm1652, %v5387, %v5123
        %v5420 = vsel %vm1652, %v5388, %v5125
        %v5421 = vsel %vm1652, %v5389, %v5127
        %v5422 = vsel %vm1652, %v5390, %v5129
        %v5423 = vsel %vm1652, %v5391, %v5131
        %v5424 = vsel %vm1652, %v5392, %v5133
        %5426 = vset.pattern.permute.xlu0 72
        %5427 = vperm.xlu0 %5426, %v469
        %v5428 = vpop.permute.xlu0 %5427
        %vm5430 = vcmask 588800
        %v5431 = vsel %vm5430, %v469, 0
        %v5434 = vsel %vm5430, %v5393, 0
        %v5437 = vsel %vm5430, %v5394, 0
        %v5440 = vsel %vm5430, %v5395, 0
        %v5443 = vsel %vm5430, %v5396, 0
        %v5446 = vsel %vm5430, %v5397, 0
        %v5449 = vsel %vm5430, %v5398, 0
        %v5452 = vsel %vm5430, %v5399, 0
        %v5455 = vsel %vm5430, %v5400, 0
        %v5458 = vsel %vm5430, %v5401, 0
        %v5461 = vsel %vm5430, %v5402, 0
        %v5464 = vsel %vm5430, %v5403, 0
        %v5467 = vsel %vm5430, %v5404, 0
        %v5470 = vsel %vm5430, %v5405, 0
        %v5473 = vsel %vm5430, %v5406, 0
        %v5476 = vsel %vm5430, %v5407, 0
        %v5479 = vsel %vm5430, %v5408, 0
        %v5482 = vsel %vm5430, %v5409, 0
        %v5485 = vsel %vm5430, %v5410, 0
        %v5488 = vsel %vm5430, %v5411, 0
        %v5491 = vsel %vm5430, %v5412, 0
        %v5494 = vsel %vm5430, %v5413, 0
        %v5497 = vsel %vm5430, %v5414, 0
        %v5500 = vsel %vm5430, %v5415, 0
        %v5503 = vsel %vm5430, %v5416, 0
        %v5506 = vsel %vm5430, %v5417, 0
        %v5509 = vsel %vm5430, %v5418, 0
        %v5512 = vsel %vm5430, %v5419, 0
        %v5515 = vsel %vm5430, %v5420, 0
        %v5518 = vsel %vm5430, %v5421, 0
        %v5521 = vsel %vm5430, %v5422, 0
        %v5524 = vsel %vm5430, %v5423, 0
        %v5527 = vsel %vm5430, %v5424, 0
        %5529 = vmatprep.subr.mxu0 0.0
        %5530 = vmatpush1.xpose.msra.mxu0 %v5479
        %5531 = vmatprep.subr.mxu0 0.0
        %5532 = vmatpush1.xpose.msra.mxu0 %v5476
        %5533 = vmatprep.subr.mxu0 0.0
        %5534 = vmatpush1.xpose.msra.mxu0 %v5473
        %5535 = vmatprep.subr.mxu0 0.0
        %5536 = vmatpush1.xpose.msra.mxu0 %v5470
        %5537 = vmatprep.subr.mxu0 0.0
        %5538 = vmatpush1.xpose.msra.mxu0 %v5467
        %5539 = vmatprep.subr.mxu0 0.0
        %5540 = vmatpush1.xpose.msra.mxu0 %v5464
        %5541 = vmatprep.subr.mxu0 0.0
        %5542 = vmatpush1.xpose.msra.mxu0 %v5461
        %5543 = vmatprep.subr.mxu0 0.0
        %5544 = vmatpush1.xpose.msra.mxu0 %v5458
        %5545 = vmatprep.subr.mxu0 0.0
        %5546 = vmatpush1.xpose.msra.mxu0 %v5455
        %5547 = vmatprep.subr.mxu0 0.0
        %5548 = vmatpush1.xpose.msra.mxu0 %v5452
        %5549 = vmatprep.subr.mxu0 0.0
        %5550 = vmatpush1.xpose.msra.mxu0 %v5449
        %5551 = vmatprep.subr.mxu0 0.0
        %5552 = vmatpush1.xpose.msra.mxu0 %v5446
        %5553 = vmatprep.subr.mxu0 0.0
        %5554 = vmatpush1.xpose.msra.mxu0 %v5443
        %5555 = vmatprep.subr.mxu0 0.0
        %5556 = vmatpush1.xpose.msra.mxu0 %v5440
        %5557 = vmatprep.subr.mxu0 0.0
        %5558 = vmatpush1.xpose.msra.mxu0 %v5437
        %5559 = vmatprep.subr.mxu0 0.0
        %5560 = vmatpush1.xpose.msra.mxu0 %v5434
        %5561 = vmatprep.subr.mxu0 0.0
        %5562 = vmatpush2.xpose.msra.mxu0 %v5527
        %5563 = vmatprep.subr.mxu0 0.0
        %5564 = vmatpush2.xpose.msra.mxu0 %v5524
        %5565 = vmatprep.subr.mxu0 0.0
        %5566 = vmatpush2.xpose.msra.mxu0 %v5521
        %5567 = vmatprep.subr.mxu0 0.0
        %5568 = vmatpush2.xpose.msra.mxu0 %v5518
        %5569 = vmatprep.subr.mxu0 0.0
        %5570 = vmatpush2.xpose.msra.mxu0 %v5515
        %5571 = vmatprep.subr.mxu0 0.0
        %5572 = vmatpush2.xpose.msra.mxu0 %v5512
        %5573 = vmatprep.subr.mxu0 0.0
        %5574 = vmatpush2.xpose.msra.mxu0 %v5509
        %5575 = vmatprep.subr.mxu0 0.0
        %5576 = vmatpush2.xpose.msra.mxu0 %v5506
        %5577 = vmatprep.subr.mxu0 0.0
        %5578 = vmatpush2.xpose.msra.mxu0 %v5503
        %5579 = vmatprep.subr.mxu0 0.0
        %5580 = vmatpush2.xpose.msra.mxu0 %v5500
        %5581 = vmatprep.subr.mxu0 0.0
        %5582 = vmatpush2.xpose.msra.mxu0 %v5497
        %5583 = vmatprep.subr.mxu0 0.0
        %5584 = vmatpush2.xpose.msra.mxu0 %v5494
        %5585 = vmatprep.subr.mxu0 0.0
        %5586 = vmatpush2.xpose.msra.mxu0 %v5491
        %5587 = vmatprep.subr.mxu0 0.0
        %5588 = vmatpush2.xpose.msra.mxu0 %v5488
        %5589 = vmatprep.subr.mxu0 0.0
        %5590 = vmatpush2.xpose.msra.mxu0 %v5485
        %5591 = vmatprep.subr.mxu0 0.0
        %5592 = vmatpush2.xpose.msra.mxu0 %v5482
        %5593 = vmatprep.mubr.f32.mxu0 0.0
        %5594 = vmatmul.mubr.f32.gmra.mxu0 %v5431
        %v5595 = vpop.f32.mrf.mxu0
        %v5596 = vadd.f32 %v5428, %v5595
        %v5597 = vpop.f32.mrf.mxu0
        %v5598 = vadd.f32 %v5428, %v5597
        %5599 = vdwg.mxu0
        %v5602 = vcombine.low %v5596, %v5598
        %v5604 = vunpack.c.l.s4 1966171168
        %v5605 = vunpack.c.0.s8 %v5604
        %v5606 = vlaneseq
        %v5607 = vshrl.u32 %v5606, 7
        %v5608 = vsub.s32 %v5605, %v5607
        %v5609 = vrot.slane %v5602, %v5608
        %v5611 = vunpack.c.l.s4 1966171168
        %v5612 = vunpack.c.0.s8 %v5611
        %v5613 = vlaneseq
        %v5614 = vshrl.u32 %v5613, 7
        %v5615 = vsub.s32 %v5612, %v5614
        %v5616 = vrot.slane %v5609, %v5615
        %v5618 = vlaneseq
        %vm5619 = vcmp.ge.s32.totalorder %v5618, 0
        %vm5620 = vcmp.lt.s32.totalorder %v5618, 256
        %vm5621 = vmand %vm5619, %vm5620
        %5622 = vst.msk [vmem:[%s388] sm:$0x3] %vm5621, %v5616
        %s5623 = sand.u32 %s255, 1
        %s5624 = scalar_lea.sflag [#allocation6], %s5623
        %s5625 = sand.u32 %s255, 1
        %s5626 = smul.addr %s5625, 2
        %s5627 = scalar_lea.vmem [#allocation7], %s5626
        // Predicated region
        $region65: #{tpu_custom_call.1} parent=59 // pred_check
          %p5628 = pneg %p265
        $region66: #{tpu_custom_call.1} parent=59 // pred_check_branch
          %5630 = sbr.rel (%p5628) target = $region68
        $region67: #{tpu_custom_call.1} parent=59 // pred_region
          %s5632 = ssub.s32 32, 32
          %5633 = vsyncadd %s5624, %s5632
          %s5634 = smul.addr %s27, 2
          %s5635 = smul.addr %s5634, 16
          %s5636 = scalar_lea.hbm %s10, %s5635
          %s5638 = sshll.u32 %s5627, 4
          %s5639 = int_to_ptr.vmem [resolvable:$true] %s5638
          %5641 = dma.vmem_to_hbm [thread:$0]  %s5639, 32, %s5636, %s5624
        $region68: #{tpu_custom_call.1} parent=59 // pred_fallthru
          _
      $region60: #{tpu_custom_call.1} parent=5 // pred_fallthru
        _
      %p5642 = scmp.le.s32.totalorder 2, %s22
      // Predicated region
      $region69: #{tpu_custom_call.1} parent=5 // pred_check
        %p5643 = pneg %p5642
      $region70: #{tpu_custom_call.1} parent=5 // pred_check_branch
        %5645 = sbr.rel (%p5643) target = $region72
      $region71: #{tpu_custom_call.1} parent=5 // pred_region
        %s5646 = ssub.s32 %s22, 2
        // Predicated region
        $region73: #{tpu_custom_call.1} parent=71 // pred_check
          %p5647 = pneg %p271
        $region74: #{tpu_custom_call.1} parent=71 // pred_check_branch
          %5649 = sbr.rel (%p5647) target = $region76
        $region75: #{tpu_custom_call.1} parent=71 // pred_region
          %s5650 = sand.u32 %s256, 1
          %s5651 = scalar_lea.sflag [#allocation6], %s5650
          %s5652 = sand.u32 %s256, 1
          %s5653 = smul.addr %s5652, 2
          %s5654 = scalar_lea.vmem [#allocation7], %s5653
          %5655 = dma.done %s5651, 32
        $region76: #{tpu_custom_call.1} parent=71 // pred_fallthru
          _
      $region72: #{tpu_custom_call.1} parent=5 // pred_fallthru
        _
    $region6: #{tpu_custom_call.1} parent=1 // loop_footer
      %s26 = sadd.s32 1, %s22
    $region7: #{tpu_custom_call.1} parent=1 // loop_footer_branch
      %21 = sbr.rel target = $region3
    $region8: #{tpu_custom_call.1} parent=1 // loop_exit
      _
    %5656 = vsyncpa [#allocation5], 1
    %s5657 = scalar_lea.sflag [#allocation5], 1
    %5658 = vsyncpa %s5657, 1
    %5659 = vsyncpa [#allocation6], 1
    %s5660 = scalar_lea.sflag [#allocation6], 1
    %5661 = vsyncpa %s5660, 1

</llo_original>
